<compile_context>
chip_gen: v7x
topology: tpu7x:2x2x1
jax: 0.10.0
libtpu: 0.0.40
codegen_flags: <defaults>
</compile_context>

<pallas_src>
import functools

import jax
import jax.numpy as jnp
from jax.experimental import pallas as pl
from jax.experimental.pallas import tpu as pltpu

# ---- model hyperparameters (small, synthetic) ----
VOCAB = 32
SEQ = 8          # sequence length
HID = 32         # hidden size
FFN = 64         # feed-forward size
LAYERS = 2       # encoder layers
NHEADS = 2       # attention heads
DHEAD = HID // NHEADS

# ---- parameter-slab layout (per encoder) ----
SLAB_COLS = 3 * HID                       # 96 >= max(3*HID, FFN, HID)
W_ROWS_PER_LAYER = 3 * HID + FFN          # wqkv(HID)+wo(HID)+w1(HID)+w2(FFN) = 160
F_HDR_ROWS = 2                            # ln_e_g, ln_e_b
F_ROWS_PER_LAYER = 8                      # bqkv, bo, ln1_g, ln1_b, b1, b2, ln2_g, ln2_b
F_ROWS = F_HDR_ROWS + F_ROWS_PER_LAYER * LAYERS
F_ROWS_PAD = ((F_ROWS + 7) // 8) * 8      # pad to f32 sublane tile


def _layer_norm(x, g, b, eps=1e-12):
    mu = jnp.mean(x, axis=-1, keepdims=True)
    var = jnp.mean((x - mu) ** 2, axis=-1, keepdims=True)
    return (x - mu) * jax.lax.rsqrt(var + eps) * g + b


def encoder_kernel(rep_pos, emb_ref, mask_ref, w_ref, f_ref, pooled_ref):
    """One encoder (question or ctx) per grid step; whole batch at once.

    emb_ref   : (Bmax*S, HID) f32 summed embeddings
    mask_ref  : (Bmax, S)     f32 attention mask (1 = keep)
    w_ref     : (LAYERS*W_ROWS_PER_LAYER, SLAB_COLS) bf16 matmul-weight slab
    f_ref     : (F_ROWS_PAD, SLAB_COLS) f32 LayerNorm/bias slab
    pooled_ref: (1, Bmax*HID) f32 lane-dense pooled output
    """
    B, S = mask_ref.shape

    def fvec(row, width):                      # one (1, width) slab row
        return f_ref[row:row + 1, 0:width]

    x = emb_ref[...]                                         # (B*S, H) f32
    x = _layer_norm(x, fvec(0, HID), fvec(1, HID))           # embeddings LayerNorm

    # additive attention-mask bias, broadcast ONCE (JAX does not CSE broadcasts)
    mask = mask_ref[...]                                     # (B, S)
    neg_bias = jnp.broadcast_to(((1.0 - mask) * (-1e9))[:, None, :], (B, S, S))

    for l in range(LAYERS):                                  # static unroll
        wr = l * W_ROWS_PER_LAYER
        fr = F_HDR_ROWS + l * F_ROWS_PER_LAYER
        # static, tile-aligned slices of the weight slab (bf16)
        wqkv = w_ref[wr:wr + HID, 0:3 * HID]                 # (H, 3H)
        wo = w_ref[wr + HID:wr + 2 * HID, 0:HID]             # (H, H)
        w1 = w_ref[wr + 2 * HID:wr + 3 * HID, 0:FFN]         # (H, FFN)
        w2 = w_ref[wr + 3 * HID:wr + 3 * HID + FFN, 0:HID]   # (FFN, H)
        bqkv, bo = fvec(fr + 0, 3 * HID), fvec(fr + 1, HID)
        ln1_g, ln1_b = fvec(fr + 2, HID), fvec(fr + 3, HID)
        b1, b2 = fvec(fr + 4, FFN), fvec(fr + 5, HID)
        ln2_g, ln2_b = fvec(fr + 6, HID), fvec(fr + 7, HID)

        # --- fused QKV projection (1/sqrt(DHEAD) already folded into Q) ---
        xb = x.astype(jnp.bfloat16)
        qkv = jnp.dot(xb, wqkv, preferred_element_type=jnp.float32) + bqkv
        q = qkv[:, 0 * HID:1 * HID].reshape(B, S, HID).astype(jnp.bfloat16)
        k = qkv[:, 1 * HID:2 * HID].reshape(B, S, HID).astype(jnp.bfloat16)
        v = qkv[:, 2 * HID:3 * HID].reshape(B, S, HID).astype(jnp.bfloat16)

        # --- batched multi-head attention, per-head contexts stay in vregs ---
        # TODO(synk): a single 'bqhd,bkhd->bhqk' batched-head einsum would need
        # a lane-splitting (..,H)->(..,NH,DH) reshape that Mosaic may reject at
        # these dims; with NHEADS=2 the static loop only costs a couple of XLU
        # lane shifts, so it is kept (Mosaic unrolls batched dots anyway).
        head_ctx = []
        for h in range(NHEADS):                              # static per-head slices
            lo, hi = h * DHEAD, (h + 1) * DHEAD
            s = jnp.einsum('bqd,bkd->bqk', q[..., lo:hi], k[..., lo:hi],
                           preferred_element_type=jnp.float32)        # (B,S,S)
            s = s + neg_bias                                           # mask pad keys
            s = s - jnp.max(s, axis=-1, keepdims=True)
            p = jnp.exp(s)
            p = p * pl.reciprocal(jnp.sum(p, axis=-1, keepdims=True), approx=True)
            head_ctx.append(jnp.einsum('bqk,bkd->bqd',
                                       p.astype(jnp.bfloat16), v[..., lo:hi],
                                       preferred_element_type=jnp.float32))
        ctx = jnp.concatenate(head_ctx, axis=-1).reshape(B * S, HID)

        attn_out = jnp.dot(ctx.astype(jnp.bfloat16), wo,
                           preferred_element_type=jnp.float32) + bo
        x = _layer_norm(x + attn_out, ln1_g, ln1_b)

        # --- GELU FFN (elementwise math stays f32; bf16 only at MXU inputs) ---
        h1 = jnp.dot(x.astype(jnp.bfloat16), w1,
                     preferred_element_type=jnp.float32) + b1
        # TODO(synk): HF/DPR BERT uses exact erf-GELU; tanh approximation kept
        # here for robust Mosaic lowering (tiny numerical deviation).
        h1 = jax.nn.gelu(h1, approximate=True)
        ff = jnp.dot(h1.astype(jnp.bfloat16), w2,
                     preferred_element_type=jnp.float32) + b2
        x = _layer_norm(x + ff, ln2_g, ln2_b)

    # Lane-dense pooled output: gather the B rows at representation_token_pos
    # with static sublane slices and concatenate along lanes -> one unmasked
    # (1, B*HID) store instead of a (B, HID) masked 32-lane store.
    rows = [x[b * S + rep_pos: b * S + rep_pos + 1, :] for b in range(B)]
    pooled_ref[...] = jnp.concatenate(rows, axis=-1)


# ---------------------------------------------------------------------------
# Host-side glue
# ---------------------------------------------------------------------------
def _prep_params(p):
    """Pack one encoder's transformer params into two flat slabs.

    Returns:
      w_slab: (LAYERS*W_ROWS_PER_LAYER, SLAB_COLS) bf16 matmul weights
      f_slab: (F_ROWS_PAD, SLAB_COLS) f32 LayerNorm params and biases
    The 1/sqrt(DHEAD) attention scale is folded into the Q projection here,
    and QKV is fused into one (H, 3H) matrix.
    """
    scale = 1.0 / (DHEAD ** 0.5)
    wqkv = jnp.concatenate([p["wq"] * scale, p["wk"], p["wv"]], axis=-1)   # (L,H,3H)
    bqkv = jnp.concatenate([p["bq"] * scale, p["bk"], p["bv"]], axis=-1)   # (L,1,3H)

    def wpad(w):   # (L, r, c) -> (L, r, SLAB_COLS)
        return jnp.pad(w, ((0, 0), (0, 0), (0, SLAB_COLS - w.shape[-1])))

    w_slab = jnp.concatenate(
        [wpad(wqkv), wpad(p["wo"]), wpad(p["w1"]), wpad(p["w2"])],
        axis=1)                                                 # (L, 160, 96)
    w_slab = (w_slab.reshape(LAYERS * W_ROWS_PER_LAYER, SLAB_COLS)
              .astype(jnp.bfloat16))

    def frow(v):   # (1, c) -> (1, SLAB_COLS)
        return jnp.pad(v, ((0, 0), (0, SLAB_COLS - v.shape[-1])))

    rows = [frow(p["ln_e_g"]), frow(p["ln_e_b"])]
    for l in range(LAYERS):
        rows += [frow(bqkv[l]), frow(p["bo"][l]),
                 frow(p["ln1_g"][l]), frow(p["ln1_b"][l]),
                 frow(p["b1"][l]), frow(p["b2"][l]),
                 frow(p["ln2_g"][l]), frow(p["ln2_b"][l])]
    f_slab = jnp.concatenate(rows, axis=0)                      # (F_ROWS, 96)
    f_slab = jnp.pad(f_slab, ((0, F_ROWS_PAD - F_ROWS), (0, 0)))
    return w_slab, f_slab


def _embed(p, ids, segments):
    S = ids.shape[1]
    pos = jnp.arange(S)
    return (p["word_emb"][ids]
            + p["pos_emb"][pos][None, :, :]
            + p["seg_emb"][segments]).astype(jnp.float32)        # (B, S, H)


def _pad_batch(x, bmax):
    b = x.shape[0]
    if b == bmax:
        return x
    return jnp.pad(x, [(0, bmax - b)] + [(0, 0)] * (x.ndim - 1))


def _enc_spec(shape):
    """Block = everything except the leading encoder axis (squeezed), indexed by e."""
    rest = tuple(shape[1:])
    zeros = (0,) * len(rest)
    return pl.BlockSpec((None,) + rest, lambda e, _z=zeros: (e,) + _z)


@functools.partial(jax.jit, static_argnames=("rep_pos",))
def biencoder_forward(q_emb_params, c_emb_params, q_slabs, c_slabs,
                      q_ids, q_segments, q_mask,
                      c_ids, c_segments, c_mask,
                      rep_pos=0):
    """Both encoders in one pallas_call; returns (q_pooled [Bq,H], ctx_pooled [Bc,H])."""
    Bq, S = q_ids.shape
    Bc, _ = c_ids.shape
    Bmax = max(Bq, Bc)

    # plain-JAX glue: embedding gathers (per-encoder tables), pad, stack
    q_emb = _embed(q_emb_params, q_ids, q_segments)
    c_emb = _embed(c_emb_params, c_ids, c_segments)
    emb = jnp.stack([_pad_batch(q_emb, Bmax), _pad_batch(c_emb, Bmax)], axis=0)
    emb = emb.reshape(2, Bmax * S, HID)                          # (2, B*S, H)
    mask = jnp.stack([_pad_batch(q_mask.astype(jnp.float32), Bmax),
                      _pad_batch(c_mask.astype(jnp.float32), Bmax)], axis=0)  # (2, B, S)

    # stack the two encoders' pre-packed parameter slabs on a leading axis
    w_slab = jnp.stack([q_slabs[0], c_slabs[0]], axis=0)         # (2, L*160, 96) bf16
    f_slab = jnp.stack([q_slabs[1], c_slabs[1]], axis=0)         # (2, 24, 96) f32

    pooled = pl.pallas_call(
        functools.partial(encoder_kernel, rep_pos),
        out_shape=jax.ShapeDtypeStruct((2, 1, Bmax * HID), jnp.float32),
        grid_spec=pltpu.PrefetchScalarGridSpec(
            num_scalar_prefetch=0,
            grid=(2,),                                   # encoder axis: q / ctx
            in_specs=[_enc_spec((2, Bmax * S, HID)),
                      _enc_spec((2, Bmax, S)),
                      _enc_spec(w_slab.shape),
                      _enc_spec(f_slab.shape)],
            out_specs=_enc_spec((2, 1, Bmax * HID)),
        ),
        compiler_params=pltpu.CompilerParams(
            dimension_semantics=("parallel",),           # both v7x TCs get work
            vmem_limit_bytes=32 * 1024 * 1024),
    )(emb, mask, w_slab, f_slab)

    pooled = pooled.reshape(2, Bmax, HID)
    return pooled[0, :Bq], pooled[1, :Bc]


def init_encoder_params(key):
    """Deterministic synthetic BERT-like encoder parameters."""
    ks = iter(jax.random.split(key, 32))
    sd = 0.02
    n = lambda shape: (sd * jax.random.normal(next(ks), shape)).astype(jnp.float32)
    return {
        "word_emb": n((VOCAB, HID)),
        "pos_emb": n((SEQ, HID)),
        "seg_emb": n((2, HID)),
        "ln_e_g": jnp.ones((1, HID), jnp.float32),
        "ln_e_b": jnp.zeros((1, HID), jnp.float32),
        "wq": n((LAYERS, HID, HID)), "bq": jnp.zeros((LAYERS, 1, HID), jnp.float32),
        "wk": n((LAYERS, HID, HID)), "bk": jnp.zeros((LAYERS, 1, HID), jnp.float32),
        "wv": n((LAYERS, HID, HID)), "bv": jnp.zeros((LAYERS, 1, HID), jnp.float32),
        "wo": n((LAYERS, HID, HID)), "bo": jnp.zeros((LAYERS, 1, HID), jnp.float32),
        "ln1_g": jnp.ones((LAYERS, 1, HID), jnp.float32),
        "ln1_b": jnp.zeros((LAYERS, 1, HID), jnp.float32),
        "w1": n((LAYERS, HID, FFN)), "b1": jnp.zeros((LAYERS, 1, FFN), jnp.float32),
        "w2": n((LAYERS, FFN, HID)), "b2": jnp.zeros((LAYERS, 1, HID), jnp.float32),
        "ln2_g": jnp.ones((LAYERS, 1, HID), jnp.float32),
        "ln2_b": jnp.zeros((LAYERS, 1, HID), jnp.float32),
    }


class BiEncoder:
    """JAX/Pallas port of dpr.models.biencoder.BiEncoder forward pass."""

    def __init__(self, question_params, ctx_params,
                 fix_q_encoder=False, fix_ctx_encoder=False):
        self.question_params = question_params
        self.ctx_params = ctx_params
        # one-time host-side packing: QKV fusion, attention-scale fold,
        # bf16 weight slab + f32 LN/bias slab per encoder
        self._q_slabs = _prep_params(question_params)
        self._c_slabs = _prep_params(ctx_params)
        # TODO(synk): fix_*_encoder / requires_grad_ are training-time autograd
        # controls; forward values are identical, so they are no-ops here.
        self.fix_q_encoder = fix_q_encoder
        self.fix_ctx_encoder = fix_ctx_encoder

    def __call__(self, question_ids, question_segments, question_attn_mask,
                 context_ids, ctx_segments, ctx_attn_mask,
                 encoder_type=None, representation_token_pos=0):
        if encoder_type is None or encoder_type == "question":
            q_par, q_sl = self.question_params, self._q_slabs
        else:
            q_par, q_sl = self.ctx_params, self._c_slabs
        if encoder_type is None or encoder_type == "ctx":
            c_par, c_sl = self.ctx_params, self._c_slabs
        else:
            c_par, c_sl = self.question_params, self._q_slabs
        # TODO(synk): tensor-valued representation_token_pos (per-sample) is not
        # supported; static int positions only.
        return biencoder_forward(q_par, c_par, q_sl, c_sl,
                                 question_ids, question_segments, question_attn_mask,
                                 context_ids, ctx_segments, ctx_attn_mask,
                                 rep_pos=int(representation_token_pos))


if __name__ == "__main__":
    key = jax.random.PRNGKey(0)
    k_qp, k_cp, k_qi, k_ci = jax.random.split(key, 4)

    biencoder = BiEncoder(init_encoder_params(k_qp), init_encoder_params(k_cp))

    Bq, Bc = 2, 4
    question_ids = jax.random.randint(k_qi, (Bq, SEQ), 0, VOCAB, dtype=jnp.int32)
    context_ids = jax.random.randint(k_ci, (Bc, SEQ), 0, VOCAB, dtype=jnp.int32)
    question_segments = jnp.zeros((Bq, SEQ), jnp.int32)
    ctx_segments = jnp.zeros((Bc, SEQ), jnp.int32)
    # mask out the last two tokens of every sequence to exercise the attn mask
    question_attn_mask = jnp.concatenate(
        [jnp.ones((Bq, SEQ - 2), jnp.int32), jnp.zeros((Bq, 2), jnp.int32)], axis=1)
    ctx_attn_mask = jnp.concatenate(
        [jnp.ones((Bc, SEQ - 2), jnp.int32), jnp.zeros((Bc, 2), jnp.int32)], axis=1)

    q_pooled, ctx_pooled = biencoder(
        question_ids, question_segments, question_attn_mask,
        context_ids, ctx_segments, ctx_attn_mask)
    jax.block_until_ready((q_pooled, ctx_pooled))

    assert q_pooled.shape == (Bq, HID) and ctx_pooled.shape == (Bc, HID)
    assert bool(jnp.all(jnp.isfinite(q_pooled))) and bool(jnp.all(jnp.isfinite(ctx_pooled)))
    print("KERNEL_OK")
</pallas_src>

<mosaic_0001>
module attributes {stable_mosaic.version = 11 : i64} {
  func.func @encoder_kernel(%arg0: i32, %arg1: memref<1x32x32xf32, #tpu.memory_space<vmem>>, %arg2: memref<1x4x8xf32, #tpu.memory_space<vmem>>, %arg3: memref<1x320x96xbf16, #tpu.memory_space<vmem>>, %arg4: memref<1x24x96xf32, #tpu.memory_space<vmem>>, %arg5: memref<1x1x128xf32, #tpu.memory_space<vmem>>) attributes {dimension_semantics = [#tpu.dimension_semantics<parallel>], iteration_bounds = array<i64: 2>, scalar_prefetch = 0 : i64, scratch_operands = 0 : i64, tpu.core_type = #tpu.core_type<tc>, window_params = [{transform_indices = @transform_0, window_bounds = array<i64: 1, 32, 32>}, {transform_indices = @transform_1, window_bounds = array<i64: 1, 4, 8>}, {transform_indices = @transform_2, window_bounds = array<i64: 1, 320, 96>}, {transform_indices = @transform_3, window_bounds = array<i64: 1, 24, 96>}, {transform_indices = @transform_4, window_bounds = array<i64: 1, 1, 128>}]} {
    %c0 = arith.constant 0 : index
    %c0_0 = arith.constant 0 : index
    %c0_1 = arith.constant 0 : index
    %0 = vector.load %arg1[%c0, %c0_0, %c0_1] : memref<1x32x32xf32, #tpu.memory_space<vmem>>, vector<1x32x32xf32>
    %1 = vector.shape_cast %0 : vector<1x32x32xf32> to vector<32x32xf32>
    %c0_2 = arith.constant 0 : index
    %c0_3 = arith.constant 0 : index
    %c0_4 = arith.constant 0 : index
    %2 = vector.load %arg4[%c0_2, %c0_3, %c0_4] : memref<1x24x96xf32, #tpu.memory_space<vmem>>, vector<1x1x32xf32>
    %3 = vector.shape_cast %2 : vector<1x1x32xf32> to vector<1x32xf32>
    %c0_5 = arith.constant 0 : index
    %c1 = arith.constant 1 : index
    %c0_6 = arith.constant 0 : index
    %4 = vector.load %arg4[%c0_5, %c1, %c0_6] : memref<1x24x96xf32, #tpu.memory_space<vmem>>, vector<1x1x32xf32>
    %5 = vector.shape_cast %4 : vector<1x1x32xf32> to vector<1x32xf32>
    %cst = arith.constant dense<0.000000e+00> : vector<32xf32>
    %6 = vector.multi_reduction <add>, %1, %cst [1] : vector<32x32xf32> to vector<32xf32>
    %7 = vector.shape_cast %6 : vector<32xf32> to vector<32x1xf32>
    %cst_7 = arith.constant 3.200000e+01 : f32
    %8 = vector.broadcast %cst_7 : f32 to vector<32x1xf32>
    %9 = arith.divf %7, %8 : vector<32x1xf32>
    %10 = vector.broadcast %9 : vector<32x1xf32> to vector<32x32xf32>
    %11 = arith.subf %1, %10 : vector<32x32xf32>
    %12 = arith.mulf %11, %11 : vector<32x32xf32>
    %cst_8 = arith.constant dense<0.000000e+00> : vector<32xf32>
    %13 = vector.multi_reduction <add>, %12, %cst_8 [1] : vector<32x32xf32> to vector<32xf32>
    %14 = vector.shape_cast %13 : vector<32xf32> to vector<32x1xf32>
    %cst_9 = arith.constant 3.200000e+01 : f32
    %15 = vector.broadcast %cst_9 : f32 to vector<32x1xf32>
    %16 = arith.divf %14, %15 : vector<32x1xf32>
    %17 = vector.broadcast %9 : vector<32x1xf32> to vector<32x32xf32>
    %18 = arith.subf %1, %17 : vector<32x32xf32>
    %cst_10 = arith.constant 9.99999996E-13 : f32
    %19 = vector.broadcast %cst_10 : f32 to vector<32x1xf32>
    %20 = arith.addf %16, %19 : vector<32x1xf32>
    %21 = math.rsqrt %20 : vector<32x1xf32>
    %22 = vector.broadcast %21 : vector<32x1xf32> to vector<32x32xf32>
    %23 = arith.mulf %18, %22 : vector<32x32xf32>
    %24 = vector.broadcast %3 : vector<1x32xf32> to vector<32x32xf32>
    %25 = arith.mulf %23, %24 : vector<32x32xf32>
    %26 = vector.broadcast %5 : vector<1x32xf32> to vector<32x32xf32>
    %27 = arith.addf %25, %26 : vector<32x32xf32>
    %c0_11 = arith.constant 0 : index
    %c0_12 = arith.constant 0 : index
    %c0_13 = arith.constant 0 : index
    %28 = vector.load %arg2[%c0_11, %c0_12, %c0_13] : memref<1x4x8xf32, #tpu.memory_space<vmem>>, vector<1x4x8xf32>
    %29 = vector.shape_cast %28 : vector<1x4x8xf32> to vector<4x8xf32>
    %cst_14 = arith.constant 1.000000e+00 : f32
    %30 = vector.broadcast %cst_14 : f32 to vector<4x8xf32>
    %31 = arith.subf %30, %29 : vector<4x8xf32>
    %cst_15 = arith.constant -1.000000e+09 : f32
    %32 = vector.broadcast %cst_15 : f32 to vector<4x8xf32>
    %33 = arith.mulf %31, %32 : vector<4x8xf32>
    %34 = vector.shape_cast %33 : vector<4x8xf32> to vector<4x1x8xf32>
    %35 = vector.shape_cast %34 : vector<4x1x8xf32> to vector<4x1x8xf32>
    %36 = vector.broadcast %35 : vector<4x1x8xf32> to vector<4x8x8xf32>
    %c0_16 = arith.constant 0 : index
    %c0_17 = arith.constant 0 : index
    %c0_18 = arith.constant 0 : index
    %37 = vector.load %arg3[%c0_16, %c0_17, %c0_18] : memref<1x320x96xbf16, #tpu.memory_space<vmem>>, vector<1x32x96xbf16>
    %38 = vector.shape_cast %37 : vector<1x32x96xbf16> to vector<32x96xbf16>
    %c0_19 = arith.constant 0 : index
    %c32 = arith.constant 32 : index
    %c0_20 = arith.constant 0 : index
    %39 = vector.load %arg3[%c0_19, %c32, %c0_20] : memref<1x320x96xbf16, #tpu.memory_space<vmem>>, vector<1x32x32xbf16>
    %40 = vector.shape_cast %39 : vector<1x32x32xbf16> to vector<32x32xbf16>
    %c0_21 = arith.constant 0 : index
    %c64 = arith.constant 64 : index
    %c0_22 = arith.constant 0 : index
    %41 = vector.load %arg3[%c0_21, %c64, %c0_22] : memref<1x320x96xbf16, #tpu.memory_space<vmem>>, vector<1x32x64xbf16>
    %42 = vector.shape_cast %41 : vector<1x32x64xbf16> to vector<32x64xbf16>
    %c0_23 = arith.constant 0 : index
    %c96 = arith.constant 96 : index
    %c0_24 = arith.constant 0 : index
    %43 = vector.load %arg3[%c0_23, %c96, %c0_24] : memref<1x320x96xbf16, #tpu.memory_space<vmem>>, vector<1x64x32xbf16>
    %44 = vector.shape_cast %43 : vector<1x64x32xbf16> to vector<64x32xbf16>
    %c0_25 = arith.constant 0 : index
    %c2 = arith.constant 2 : index
    %c0_26 = arith.constant 0 : index
    %45 = vector.load %arg4[%c0_25, %c2, %c0_26] : memref<1x24x96xf32, #tpu.memory_space<vmem>>, vector<1x1x96xf32>
    %46 = vector.shape_cast %45 : vector<1x1x96xf32> to vector<1x96xf32>
    %c0_27 = arith.constant 0 : index
    %c3 = arith.constant 3 : index
    %c0_28 = arith.constant 0 : index
    %47 = vector.load %arg4[%c0_27, %c3, %c0_28] : memref<1x24x96xf32, #tpu.memory_space<vmem>>, vector<1x1x32xf32>
    %48 = vector.shape_cast %47 : vector<1x1x32xf32> to vector<1x32xf32>
    %c0_29 = arith.constant 0 : index
    %c4 = arith.constant 4 : index
    %c0_30 = arith.constant 0 : index
    %49 = vector.load %arg4[%c0_29, %c4, %c0_30] : memref<1x24x96xf32, #tpu.memory_space<vmem>>, vector<1x1x32xf32>
    %50 = vector.shape_cast %49 : vector<1x1x32xf32> to vector<1x32xf32>
    %c0_31 = arith.constant 0 : index
    %c5 = arith.constant 5 : index
    %c0_32 = arith.constant 0 : index
    %51 = vector.load %arg4[%c0_31, %c5, %c0_32] : memref<1x24x96xf32, #tpu.memory_space<vmem>>, vector<1x1x32xf32>
    %52 = vector.shape_cast %51 : vector<1x1x32xf32> to vector<1x32xf32>
    %c0_33 = arith.constant 0 : index
    %c6 = arith.constant 6 : index
    %c0_34 = arith.constant 0 : index
    %53 = vector.load %arg4[%c0_33, %c6, %c0_34] : memref<1x24x96xf32, #tpu.memory_space<vmem>>, vector<1x1x64xf32>
    %54 = vector.shape_cast %53 : vector<1x1x64xf32> to vector<1x64xf32>
    %c0_35 = arith.constant 0 : index
    %c7 = arith.constant 7 : index
    %c0_36 = arith.constant 0 : index
    %55 = vector.load %arg4[%c0_35, %c7, %c0_36] : memref<1x24x96xf32, #tpu.memory_space<vmem>>, vector<1x1x32xf32>
    %56 = vector.shape_cast %55 : vector<1x1x32xf32> to vector<1x32xf32>
    %c0_37 = arith.constant 0 : index
    %c8 = arith.constant 8 : index
    %c0_38 = arith.constant 0 : index
    %57 = vector.load %arg4[%c0_37, %c8, %c0_38] : memref<1x24x96xf32, #tpu.memory_space<vmem>>, vector<1x1x32xf32>
    %58 = vector.shape_cast %57 : vector<1x1x32xf32> to vector<1x32xf32>
    %c0_39 = arith.constant 0 : index
    %c9 = arith.constant 9 : index
    %c0_40 = arith.constant 0 : index
    %59 = vector.load %arg4[%c0_39, %c9, %c0_40] : memref<1x24x96xf32, #tpu.memory_space<vmem>>, vector<1x1x32xf32>
    %60 = vector.shape_cast %59 : vector<1x1x32xf32> to vector<1x32xf32>
    %61 = arith.truncf %27 : vector<32x32xf32> to vector<32x32xbf16>
    %cst_41 = arith.constant dense<0.000000e+00> : vector<32x96xf32>
    %62 = tpu.matmul %61, %38, %cst_41 {dimension_numbers = #tpu.dot_dimension_numbers<[1], [0], [0], [1], [0, 0, 1, 1], [], []>} : vector<32x32xbf16>, vector<32x96xbf16>, vector<32x96xf32> -> vector<32x96xf32>
    %63 = vector.broadcast %46 : vector<1x96xf32> to vector<32x96xf32>
    %64 = arith.addf %62, %63 : vector<32x96xf32>
    %65 = vector.extract_strided_slice %64 {offsets = [0, 0], sizes = [32, 32], strides = [1, 1]} : vector<32x96xf32> to vector<32x32xf32>
    %66 = vector.shape_cast %65 : vector<32x32xf32> to vector<4x8x32xf32>
    %67 = arith.truncf %66 : vector<4x8x32xf32> to vector<4x8x32xbf16>
    %68 = vector.extract_strided_slice %64 {offsets = [0, 32], sizes = [32, 32], strides = [1, 1]} : vector<32x96xf32> to vector<32x32xf32>
    %69 = vector.shape_cast %68 : vector<32x32xf32> to vector<4x8x32xf32>
    %70 = arith.truncf %69 : vector<4x8x32xf32> to vector<4x8x32xbf16>
    %71 = vector.extract_strided_slice %64 {offsets = [0, 64], sizes = [32, 32], strides = [1, 1]} : vector<32x96xf32> to vector<32x32xf32>
    %72 = vector.shape_cast %71 : vector<32x32xf32> to vector<4x8x32xf32>
    %73 = arith.truncf %72 : vector<4x8x32xf32> to vector<4x8x32xbf16>
    %74 = vector.extract_strided_slice %67 {offsets = [0, 0, 0], sizes = [4, 8, 16], strides = [1, 1, 1]} : vector<4x8x32xbf16> to vector<4x8x16xbf16>
    %75 = vector.extract_strided_slice %70 {offsets = [0, 0, 0], sizes = [4, 8, 16], strides = [1, 1, 1]} : vector<4x8x32xbf16> to vector<4x8x16xbf16>
    "tpu.trace_start"() <{level = 10 : i32, message = "bqd,bkd->bqk"}> : () -> ()
    %cst_42 = arith.constant dense<0.000000e+00> : vector<4x8x8xf32>
    %76 = tpu.matmul %74, %75, %cst_42 {dimension_numbers = #tpu.dot_dimension_numbers<[2], [2], [1], [1], [0, 0, 0, 1, 1, 1], [0], [0]>} : vector<4x8x16xbf16>, vector<4x8x16xbf16>, vector<4x8x8xf32> -> vector<4x8x8xf32>
    "tpu.trace_stop"() : () -> ()
    %77 = arith.addf %76, %36 : vector<4x8x8xf32>
    %cst_43 = arith.constant dense<0xFF800000> : vector<4x8xf32>
    %78 = vector.multi_reduction <maximumf>, %77, %cst_43 [2] : vector<4x8x8xf32> to vector<4x8xf32>
    %79 = vector.shape_cast %78 : vector<4x8xf32> to vector<4x8x1xf32>
    %80 = vector.broadcast %79 : vector<4x8x1xf32> to vector<4x8x8xf32>
    %81 = arith.subf %77, %80 : vector<4x8x8xf32>
    %82 = math.exp %81 : vector<4x8x8xf32>
    %cst_44 = arith.constant dense<0.000000e+00> : vector<4x8xf32>
    %83 = vector.multi_reduction <add>, %82, %cst_44 [2] : vector<4x8x8xf32> to vector<4x8xf32>
    %84 = vector.shape_cast %83 : vector<4x8xf32> to vector<4x8x1xf32>
    %85 = tpu.reciprocal %84 {approx = true} : vector<4x8x1xf32> -> vector<4x8x1xf32>
    %86 = vector.broadcast %85 : vector<4x8x1xf32> to vector<4x8x8xf32>
    %87 = arith.mulf %82, %86 : vector<4x8x8xf32>
    %88 = arith.truncf %87 : vector<4x8x8xf32> to vector<4x8x8xbf16>
    %89 = vector.extract_strided_slice %73 {offsets = [0, 0, 0], sizes = [4, 8, 16], strides = [1, 1, 1]} : vector<4x8x32xbf16> to vector<4x8x16xbf16>
    "tpu.trace_start"() <{level = 10 : i32, message = "bqk,bkd->bqd"}> : () -> ()
    %cst_45 = arith.constant dense<0.000000e+00> : vector<4x8x16xf32>
    %90 = tpu.matmul %88, %89, %cst_45 {dimension_numbers = #tpu.dot_dimension_numbers<[2], [1], [1], [2], [0, 0, 0, 1, 1, 2], [0], [0]>} : vector<4x8x8xbf16>, vector<4x8x16xbf16>, vector<4x8x16xf32> -> vector<4x8x16xf32>
    "tpu.trace_stop"() : () -> ()
    %91 = vector.extract_strided_slice %67 {offsets = [0, 0, 16], sizes = [4, 8, 16], strides = [1, 1, 1]} : vector<4x8x32xbf16> to vector<4x8x16xbf16>
    %92 = vector.extract_strided_slice %70 {offsets = [0, 0, 16], sizes = [4, 8, 16], strides = [1, 1, 1]} : vector<4x8x32xbf16> to vector<4x8x16xbf16>
    "tpu.trace_start"() <{level = 10 : i32, message = "bqd,bkd->bqk"}> : () -> ()
    %cst_46 = arith.constant dense<0.000000e+00> : vector<4x8x8xf32>
    %93 = tpu.matmul %91, %92, %cst_46 {dimension_numbers = #tpu.dot_dimension_numbers<[2], [2], [1], [1], [0, 0, 0, 1, 1, 1], [0], [0]>} : vector<4x8x16xbf16>, vector<4x8x16xbf16>, vector<4x8x8xf32> -> vector<4x8x8xf32>
    "tpu.trace_stop"() : () -> ()
    %94 = arith.addf %93, %36 : vector<4x8x8xf32>
    %cst_47 = arith.constant dense<0xFF800000> : vector<4x8xf32>
    %95 = vector.multi_reduction <maximumf>, %94, %cst_47 [2] : vector<4x8x8xf32> to vector<4x8xf32>
    %96 = vector.shape_cast %95 : vector<4x8xf32> to vector<4x8x1xf32>
    %97 = vector.broadcast %96 : vector<4x8x1xf32> to vector<4x8x8xf32>
    %98 = arith.subf %94, %97 : vector<4x8x8xf32>
    %99 = math.exp %98 : vector<4x8x8xf32>
    %cst_48 = arith.constant dense<0.000000e+00> : vector<4x8xf32>
    %100 = vector.multi_reduction <add>, %99, %cst_48 [2] : vector<4x8x8xf32> to vector<4x8xf32>
    %101 = vector.shape_cast %100 : vector<4x8xf32> to vector<4x8x1xf32>
    %102 = tpu.reciprocal %101 {approx = true} : vector<4x8x1xf32> -> vector<4x8x1xf32>
    %103 = vector.broadcast %102 : vector<4x8x1xf32> to vector<4x8x8xf32>
    %104 = arith.mulf %99, %103 : vector<4x8x8xf32>
    %105 = arith.truncf %104 : vector<4x8x8xf32> to vector<4x8x8xbf16>
    %106 = vector.extract_strided_slice %73 {offsets = [0, 0, 16], sizes = [4, 8, 16], strides = [1, 1, 1]} : vector<4x8x32xbf16> to vector<4x8x16xbf16>
    "tpu.trace_start"() <{level = 10 : i32, message = "bqk,bkd->bqd"}> : () -> ()
    %cst_49 = arith.constant dense<0.000000e+00> : vector<4x8x16xf32>
    %107 = tpu.matmul %105, %106, %cst_49 {dimension_numbers = #tpu.dot_dimension_numbers<[2], [1], [1], [2], [0, 0, 0, 1, 1, 2], [0], [0]>} : vector<4x8x8xbf16>, vector<4x8x16xbf16>, vector<4x8x16xf32> -> vector<4x8x16xf32>
    "tpu.trace_stop"() : () -> ()
    %108 = tpu.concatenate %90, %107 in 2 : vector<4x8x16xf32>, vector<4x8x16xf32> -> vector<4x8x32xf32>
    %109 = vector.shape_cast %108 : vector<4x8x32xf32> to vector<32x32xf32>
    %110 = arith.truncf %109 : vector<32x32xf32> to vector<32x32xbf16>
    %cst_50 = arith.constant dense<0.000000e+00> : vector<32x32xf32>
    %111 = tpu.matmul %110, %40, %cst_50 {dimension_numbers = #tpu.dot_dimension_numbers<[1], [0], [0], [1], [0, 0, 1, 1], [], []>} : vector<32x32xbf16>, vector<32x32xbf16>, vector<32x32xf32> -> vector<32x32xf32>
    %112 = vector.broadcast %48 : vector<1x32xf32> to vector<32x32xf32>
    %113 = arith.addf %111, %112 : vector<32x32xf32>
    %114 = arith.addf %27, %113 : vector<32x32xf32>
    %cst_51 = arith.constant dense<0.000000e+00> : vector<32xf32>
    %115 = vector.multi_reduction <add>, %114, %cst_51 [1] : vector<32x32xf32> to vector<32xf32>
    %116 = vector.shape_cast %115 : vector<32xf32> to vector<32x1xf32>
    %cst_52 = arith.constant 3.200000e+01 : f32
    %117 = vector.broadcast %cst_52 : f32 to vector<32x1xf32>
    %118 = arith.divf %116, %117 : vector<32x1xf32>
    %119 = vector.broadcast %118 : vector<32x1xf32> to vector<32x32xf32>
    %120 = arith.subf %114, %119 : vector<32x32xf32>
    %121 = arith.mulf %120, %120 : vector<32x32xf32>
    %cst_53 = arith.constant dense<0.000000e+00> : vector<32xf32>
    %122 = vector.multi_reduction <add>, %121, %cst_53 [1] : vector<32x32xf32> to vector<32xf32>
    %123 = vector.shape_cast %122 : vector<32xf32> to vector<32x1xf32>
    %cst_54 = arith.constant 3.200000e+01 : f32
    %124 = vector.broadcast %cst_54 : f32 to vector<32x1xf32>
    %125 = arith.divf %123, %124 : vector<32x1xf32>
    %126 = vector.broadcast %118 : vector<32x1xf32> to vector<32x32xf32>
    %127 = arith.subf %114, %126 : vector<32x32xf32>
    %cst_55 = arith.constant 9.99999996E-13 : f32
    %128 = vector.broadcast %cst_55 : f32 to vector<32x1xf32>
    %129 = arith.addf %125, %128 : vector<32x1xf32>
    %130 = math.rsqrt %129 : vector<32x1xf32>
    %131 = vector.broadcast %130 : vector<32x1xf32> to vector<32x32xf32>
    %132 = arith.mulf %127, %131 : vector<32x32xf32>
    %133 = vector.broadcast %50 : vector<1x32xf32> to vector<32x32xf32>
    %134 = arith.mulf %132, %133 : vector<32x32xf32>
    %135 = vector.broadcast %52 : vector<1x32xf32> to vector<32x32xf32>
    %136 = arith.addf %134, %135 : vector<32x32xf32>
    %137 = arith.truncf %136 : vector<32x32xf32> to vector<32x32xbf16>
    %cst_56 = arith.constant dense<0.000000e+00> : vector<32x64xf32>
    %138 = tpu.matmul %137, %42, %cst_56 {dimension_numbers = #tpu.dot_dimension_numbers<[1], [0], [0], [1], [0, 0, 1, 1], [], []>} : vector<32x32xbf16>, vector<32x64xbf16>, vector<32x64xf32> -> vector<32x64xf32>
    %139 = vector.broadcast %54 : vector<1x64xf32> to vector<32x64xf32>
    %140 = arith.addf %138, %139 : vector<32x64xf32>
    %141 = arith.mulf %140, %140 : vector<32x64xf32>
    %142 = arith.mulf %140, %141 : vector<32x64xf32>
    %cst_57 = arith.constant 4.471500e-02 : f32
    %143 = vector.broadcast %cst_57 : f32 to vector<32x64xf32>
    %144 = arith.mulf %143, %142 : vector<32x64xf32>
    %145 = arith.addf %140, %144 : vector<32x64xf32>
    %cst_58 = arith.constant 0.797884583 : f32
    %146 = vector.broadcast %cst_58 : f32 to vector<32x64xf32>
    %147 = arith.mulf %146, %145 : vector<32x64xf32>
    %148 = math.tanh %147 : vector<32x64xf32>
    %cst_59 = arith.constant 1.000000e+00 : f32
    %149 = vector.broadcast %cst_59 : f32 to vector<32x64xf32>
    %150 = arith.addf %149, %148 : vector<32x64xf32>
    %cst_60 = arith.constant 5.000000e-01 : f32
    %151 = vector.broadcast %cst_60 : f32 to vector<32x64xf32>
    %152 = arith.mulf %151, %150 : vector<32x64xf32>
    %153 = arith.mulf %140, %152 : vector<32x64xf32>
    %154 = arith.truncf %153 : vector<32x64xf32> to vector<32x64xbf16>
    %cst_61 = arith.constant dense<0.000000e+00> : vector<32x32xf32>
    %155 = tpu.matmul %154, %44, %cst_61 {dimension_numbers = #tpu.dot_dimension_numbers<[1], [0], [0], [1], [0, 0, 1, 1], [], []>} : vector<32x64xbf16>, vector<64x32xbf16>, vector<32x32xf32> -> vector<32x32xf32>
    %156 = vector.broadcast %56 : vector<1x32xf32> to vector<32x32xf32>
    %157 = arith.addf %155, %156 : vector<32x32xf32>
    %158 = arith.addf %136, %157 : vector<32x32xf32>
    %cst_62 = arith.constant dense<0.000000e+00> : vector<32xf32>
    %159 = vector.multi_reduction <add>, %158, %cst_62 [1] : vector<32x32xf32> to vector<32xf32>
    %160 = vector.shape_cast %159 : vector<32xf32> to vector<32x1xf32>
    %cst_63 = arith.constant 3.200000e+01 : f32
    %161 = vector.broadcast %cst_63 : f32 to vector<32x1xf32>
    %162 = arith.divf %160, %161 : vector<32x1xf32>
    %163 = vector.broadcast %162 : vector<32x1xf32> to vector<32x32xf32>
    %164 = arith.subf %158, %163 : vector<32x32xf32>
    %165 = arith.mulf %164, %164 : vector<32x32xf32>
    %cst_64 = arith.constant dense<0.000000e+00> : vector<32xf32>
    %166 = vector.multi_reduction <add>, %165, %cst_64 [1] : vector<32x32xf32> to vector<32xf32>
    %167 = vector.shape_cast %166 : vector<32xf32> to vector<32x1xf32>
    %cst_65 = arith.constant 3.200000e+01 : f32
    %168 = vector.broadcast %cst_65 : f32 to vector<32x1xf32>
    %169 = arith.divf %167, %168 : vector<32x1xf32>
    %170 = vector.broadcast %162 : vector<32x1xf32> to vector<32x32xf32>
    %171 = arith.subf %158, %170 : vector<32x32xf32>
    %cst_66 = arith.constant 9.99999996E-13 : f32
    %172 = vector.broadcast %cst_66 : f32 to vector<32x1xf32>
    %173 = arith.addf %169, %172 : vector<32x1xf32>
    %174 = math.rsqrt %173 : vector<32x1xf32>
    %175 = vector.broadcast %174 : vector<32x1xf32> to vector<32x32xf32>
    %176 = arith.mulf %171, %175 : vector<32x32xf32>
    %177 = vector.broadcast %58 : vector<1x32xf32> to vector<32x32xf32>
    %178 = arith.mulf %176, %177 : vector<32x32xf32>
    %179 = vector.broadcast %60 : vector<1x32xf32> to vector<32x32xf32>
    %180 = arith.addf %178, %179 : vector<32x32xf32>
    %c0_67 = arith.constant 0 : index
    %c160 = arith.constant 160 : index
    %c0_68 = arith.constant 0 : index
    %181 = vector.load %arg3[%c0_67, %c160, %c0_68] : memref<1x320x96xbf16, #tpu.memory_space<vmem>>, vector<1x32x96xbf16>
    %182 = vector.shape_cast %181 : vector<1x32x96xbf16> to vector<32x96xbf16>
    %c0_69 = arith.constant 0 : index
    %c192 = arith.constant 192 : index
    %c0_70 = arith.constant 0 : index
    %183 = vector.load %arg3[%c0_69, %c192, %c0_70] : memref<1x320x96xbf16, #tpu.memory_space<vmem>>, vector<1x32x32xbf16>
    %184 = vector.shape_cast %183 : vector<1x32x32xbf16> to vector<32x32xbf16>
    %c0_71 = arith.constant 0 : index
    %c224 = arith.constant 224 : index
    %c0_72 = arith.constant 0 : index
    %185 = vector.load %arg3[%c0_71, %c224, %c0_72] : memref<1x320x96xbf16, #tpu.memory_space<vmem>>, vector<1x32x64xbf16>
    %186 = vector.shape_cast %185 : vector<1x32x64xbf16> to vector<32x64xbf16>
    %c0_73 = arith.constant 0 : index
    %c256 = arith.constant 256 : index
    %c0_74 = arith.constant 0 : index
    %187 = vector.load %arg3[%c0_73, %c256, %c0_74] : memref<1x320x96xbf16, #tpu.memory_space<vmem>>, vector<1x64x32xbf16>
    %188 = vector.shape_cast %187 : vector<1x64x32xbf16> to vector<64x32xbf16>
    %c0_75 = arith.constant 0 : index
    %c10 = arith.constant 10 : index
    %c0_76 = arith.constant 0 : index
    %189 = vector.load %arg4[%c0_75, %c10, %c0_76] : memref<1x24x96xf32, #tpu.memory_space<vmem>>, vector<1x1x96xf32>
    %190 = vector.shape_cast %189 : vector<1x1x96xf32> to vector<1x96xf32>
    %c0_77 = arith.constant 0 : index
    %c11 = arith.constant 11 : index
    %c0_78 = arith.constant 0 : index
    %191 = vector.load %arg4[%c0_77, %c11, %c0_78] : memref<1x24x96xf32, #tpu.memory_space<vmem>>, vector<1x1x32xf32>
    %192 = vector.shape_cast %191 : vector<1x1x32xf32> to vector<1x32xf32>
    %c0_79 = arith.constant 0 : index
    %c12 = arith.constant 12 : index
    %c0_80 = arith.constant 0 : index
    %193 = vector.load %arg4[%c0_79, %c12, %c0_80] : memref<1x24x96xf32, #tpu.memory_space<vmem>>, vector<1x1x32xf32>
    %194 = vector.shape_cast %193 : vector<1x1x32xf32> to vector<1x32xf32>
    %c0_81 = arith.constant 0 : index
    %c13 = arith.constant 13 : index
    %c0_82 = arith.constant 0 : index
    %195 = vector.load %arg4[%c0_81, %c13, %c0_82] : memref<1x24x96xf32, #tpu.memory_space<vmem>>, vector<1x1x32xf32>
    %196 = vector.shape_cast %195 : vector<1x1x32xf32> to vector<1x32xf32>
    %c0_83 = arith.constant 0 : index
    %c14 = arith.constant 14 : index
    %c0_84 = arith.constant 0 : index
    %197 = vector.load %arg4[%c0_83, %c14, %c0_84] : memref<1x24x96xf32, #tpu.memory_space<vmem>>, vector<1x1x64xf32>
    %198 = vector.shape_cast %197 : vector<1x1x64xf32> to vector<1x64xf32>
    %c0_85 = arith.constant 0 : index
    %c15 = arith.constant 15 : index
    %c0_86 = arith.constant 0 : index
    %199 = vector.load %arg4[%c0_85, %c15, %c0_86] : memref<1x24x96xf32, #tpu.memory_space<vmem>>, vector<1x1x32xf32>
    %200 = vector.shape_cast %199 : vector<1x1x32xf32> to vector<1x32xf32>
    %c0_87 = arith.constant 0 : index
    %c16 = arith.constant 16 : index
    %c0_88 = arith.constant 0 : index
    %201 = vector.load %arg4[%c0_87, %c16, %c0_88] : memref<1x24x96xf32, #tpu.memory_space<vmem>>, vector<1x1x32xf32>
    %202 = vector.shape_cast %201 : vector<1x1x32xf32> to vector<1x32xf32>
    %c0_89 = arith.constant 0 : index
    %c17 = arith.constant 17 : index
    %c0_90 = arith.constant 0 : index
    %203 = vector.load %arg4[%c0_89, %c17, %c0_90] : memref<1x24x96xf32, #tpu.memory_space<vmem>>, vector<1x1x32xf32>
    %204 = vector.shape_cast %203 : vector<1x1x32xf32> to vector<1x32xf32>
    %205 = arith.truncf %180 : vector<32x32xf32> to vector<32x32xbf16>
    %cst_91 = arith.constant dense<0.000000e+00> : vector<32x96xf32>
    %206 = tpu.matmul %205, %182, %cst_91 {dimension_numbers = #tpu.dot_dimension_numbers<[1], [0], [0], [1], [0, 0, 1, 1], [], []>} : vector<32x32xbf16>, vector<32x96xbf16>, vector<32x96xf32> -> vector<32x96xf32>
    %207 = vector.broadcast %190 : vector<1x96xf32> to vector<32x96xf32>
    %208 = arith.addf %206, %207 : vector<32x96xf32>
    %209 = vector.extract_strided_slice %208 {offsets = [0, 0], sizes = [32, 32], strides = [1, 1]} : vector<32x96xf32> to vector<32x32xf32>
    %210 = vector.shape_cast %209 : vector<32x32xf32> to vector<4x8x32xf32>
    %211 = arith.truncf %210 : vector<4x8x32xf32> to vector<4x8x32xbf16>
    %212 = vector.extract_strided_slice %208 {offsets = [0, 32], sizes = [32, 32], strides = [1, 1]} : vector<32x96xf32> to vector<32x32xf32>
    %213 = vector.shape_cast %212 : vector<32x32xf32> to vector<4x8x32xf32>
    %214 = arith.truncf %213 : vector<4x8x32xf32> to vector<4x8x32xbf16>
    %215 = vector.extract_strided_slice %208 {offsets = [0, 64], sizes = [32, 32], strides = [1, 1]} : vector<32x96xf32> to vector<32x32xf32>
    %216 = vector.shape_cast %215 : vector<32x32xf32> to vector<4x8x32xf32>
    %217 = arith.truncf %216 : vector<4x8x32xf32> to vector<4x8x32xbf16>
    %218 = vector.extract_strided_slice %211 {offsets = [0, 0, 0], sizes = [4, 8, 16], strides = [1, 1, 1]} : vector<4x8x32xbf16> to vector<4x8x16xbf16>
    %219 = vector.extract_strided_slice %214 {offsets = [0, 0, 0], sizes = [4, 8, 16], strides = [1, 1, 1]} : vector<4x8x32xbf16> to vector<4x8x16xbf16>
    "tpu.trace_start"() <{level = 10 : i32, message = "bqd,bkd->bqk"}> : () -> ()
    %cst_92 = arith.constant dense<0.000000e+00> : vector<4x8x8xf32>
    %220 = tpu.matmul %218, %219, %cst_92 {dimension_numbers = #tpu.dot_dimension_numbers<[2], [2], [1], [1], [0, 0, 0, 1, 1, 1], [0], [0]>} : vector<4x8x16xbf16>, vector<4x8x16xbf16>, vector<4x8x8xf32> -> vector<4x8x8xf32>
    "tpu.trace_stop"() : () -> ()
    %221 = arith.addf %220, %36 : vector<4x8x8xf32>
    %cst_93 = arith.constant dense<0xFF800000> : vector<4x8xf32>
    %222 = vector.multi_reduction <maximumf>, %221, %cst_93 [2] : vector<4x8x8xf32> to vector<4x8xf32>
    %223 = vector.shape_cast %222 : vector<4x8xf32> to vector<4x8x1xf32>
    %224 = vector.broadcast %223 : vector<4x8x1xf32> to vector<4x8x8xf32>
    %225 = arith.subf %221, %224 : vector<4x8x8xf32>
    %226 = math.exp %225 : vector<4x8x8xf32>
    %cst_94 = arith.constant dense<0.000000e+00> : vector<4x8xf32>
    %227 = vector.multi_reduction <add>, %226, %cst_94 [2] : vector<4x8x8xf32> to vector<4x8xf32>
    %228 = vector.shape_cast %227 : vector<4x8xf32> to vector<4x8x1xf32>
    %229 = tpu.reciprocal %228 {approx = true} : vector<4x8x1xf32> -> vector<4x8x1xf32>
    %230 = vector.broadcast %229 : vector<4x8x1xf32> to vector<4x8x8xf32>
    %231 = arith.mulf %226, %230 : vector<4x8x8xf32>
    %232 = arith.truncf %231 : vector<4x8x8xf32> to vector<4x8x8xbf16>
    %233 = vector.extract_strided_slice %217 {offsets = [0, 0, 0], sizes = [4, 8, 16], strides = [1, 1, 1]} : vector<4x8x32xbf16> to vector<4x8x16xbf16>
    "tpu.trace_start"() <{level = 10 : i32, message = "bqk,bkd->bqd"}> : () -> ()
    %cst_95 = arith.constant dense<0.000000e+00> : vector<4x8x16xf32>
    %234 = tpu.matmul %232, %233, %cst_95 {dimension_numbers = #tpu.dot_dimension_numbers<[2], [1], [1], [2], [0, 0, 0, 1, 1, 2], [0], [0]>} : vector<4x8x8xbf16>, vector<4x8x16xbf16>, vector<4x8x16xf32> -> vector<4x8x16xf32>
    "tpu.trace_stop"() : () -> ()
    %235 = vector.extract_strided_slice %211 {offsets = [0, 0, 16], sizes = [4, 8, 16], strides = [1, 1, 1]} : vector<4x8x32xbf16> to vector<4x8x16xbf16>
    %236 = vector.extract_strided_slice %214 {offsets = [0, 0, 16], sizes = [4, 8, 16], strides = [1, 1, 1]} : vector<4x8x32xbf16> to vector<4x8x16xbf16>
    "tpu.trace_start"() <{level = 10 : i32, message = "bqd,bkd->bqk"}> : () -> ()
    %cst_96 = arith.constant dense<0.000000e+00> : vector<4x8x8xf32>
    %237 = tpu.matmul %235, %236, %cst_96 {dimension_numbers = #tpu.dot_dimension_numbers<[2], [2], [1], [1], [0, 0, 0, 1, 1, 1], [0], [0]>} : vector<4x8x16xbf16>, vector<4x8x16xbf16>, vector<4x8x8xf32> -> vector<4x8x8xf32>
    "tpu.trace_stop"() : () -> ()
    %238 = arith.addf %237, %36 : vector<4x8x8xf32>
    %cst_97 = arith.constant dense<0xFF800000> : vector<4x8xf32>
    %239 = vector.multi_reduction <maximumf>, %238, %cst_97 [2] : vector<4x8x8xf32> to vector<4x8xf32>
    %240 = vector.shape_cast %239 : vector<4x8xf32> to vector<4x8x1xf32>
    %241 = vector.broadcast %240 : vector<4x8x1xf32> to vector<4x8x8xf32>
    %242 = arith.subf %238, %241 : vector<4x8x8xf32>
    %243 = math.exp %242 : vector<4x8x8xf32>
    %cst_98 = arith.constant dense<0.000000e+00> : vector<4x8xf32>
    %244 = vector.multi_reduction <add>, %243, %cst_98 [2] : vector<4x8x8xf32> to vector<4x8xf32>
    %245 = vector.shape_cast %244 : vector<4x8xf32> to vector<4x8x1xf32>
    %246 = tpu.reciprocal %245 {approx = true} : vector<4x8x1xf32> -> vector<4x8x1xf32>
    %247 = vector.broadcast %246 : vector<4x8x1xf32> to vector<4x8x8xf32>
    %248 = arith.mulf %243, %247 : vector<4x8x8xf32>
    %249 = arith.truncf %248 : vector<4x8x8xf32> to vector<4x8x8xbf16>
    %250 = vector.extract_strided_slice %217 {offsets = [0, 0, 16], sizes = [4, 8, 16], strides = [1, 1, 1]} : vector<4x8x32xbf16> to vector<4x8x16xbf16>
    "tpu.trace_start"() <{level = 10 : i32, message = "bqk,bkd->bqd"}> : () -> ()
    %cst_99 = arith.constant dense<0.000000e+00> : vector<4x8x16xf32>
    %251 = tpu.matmul %249, %250, %cst_99 {dimension_numbers = #tpu.dot_dimension_numbers<[2], [1], [1], [2], [0, 0, 0, 1, 1, 2], [0], [0]>} : vector<4x8x8xbf16>, vector<4x8x16xbf16>, vector<4x8x16xf32> -> vector<4x8x16xf32>
    "tpu.trace_stop"() : () -> ()
    %252 = tpu.concatenate %234, %251 in 2 : vector<4x8x16xf32>, vector<4x8x16xf32> -> vector<4x8x32xf32>
    %253 = vector.shape_cast %252 : vector<4x8x32xf32> to vector<32x32xf32>
    %254 = arith.truncf %253 : vector<32x32xf32> to vector<32x32xbf16>
    %cst_100 = arith.constant dense<0.000000e+00> : vector<32x32xf32>
    %255 = tpu.matmul %254, %184, %cst_100 {dimension_numbers = #tpu.dot_dimension_numbers<[1], [0], [0], [1], [0, 0, 1, 1], [], []>} : vector<32x32xbf16>, vector<32x32xbf16>, vector<32x32xf32> -> vector<32x32xf32>
    %256 = vector.broadcast %192 : vector<1x32xf32> to vector<32x32xf32>
    %257 = arith.addf %255, %256 : vector<32x32xf32>
    %258 = arith.addf %180, %257 : vector<32x32xf32>
    %cst_101 = arith.constant dense<0.000000e+00> : vector<32xf32>
    %259 = vector.multi_reduction <add>, %258, %cst_101 [1] : vector<32x32xf32> to vector<32xf32>
    %260 = vector.shape_cast %259 : vector<32xf32> to vector<32x1xf32>
    %cst_102 = arith.constant 3.200000e+01 : f32
    %261 = vector.broadcast %cst_102 : f32 to vector<32x1xf32>
    %262 = arith.divf %260, %261 : vector<32x1xf32>
    %263 = vector.broadcast %262 : vector<32x1xf32> to vector<32x32xf32>
    %264 = arith.subf %258, %263 : vector<32x32xf32>
    %265 = arith.mulf %264, %264 : vector<32x32xf32>
    %cst_103 = arith.constant dense<0.000000e+00> : vector<32xf32>
    %266 = vector.multi_reduction <add>, %265, %cst_103 [1] : vector<32x32xf32> to vector<32xf32>
    %267 = vector.shape_cast %266 : vector<32xf32> to vector<32x1xf32>
    %cst_104 = arith.constant 3.200000e+01 : f32
    %268 = vector.broadcast %cst_104 : f32 to vector<32x1xf32>
    %269 = arith.divf %267, %268 : vector<32x1xf32>
    %270 = vector.broadcast %262 : vector<32x1xf32> to vector<32x32xf32>
    %271 = arith.subf %258, %270 : vector<32x32xf32>
    %cst_105 = arith.constant 9.99999996E-13 : f32
    %272 = vector.broadcast %cst_105 : f32 to vector<32x1xf32>
    %273 = arith.addf %269, %272 : vector<32x1xf32>
    %274 = math.rsqrt %273 : vector<32x1xf32>
    %275 = vector.broadcast %274 : vector<32x1xf32> to vector<32x32xf32>
    %276 = arith.mulf %271, %275 : vector<32x32xf32>
    %277 = vector.broadcast %194 : vector<1x32xf32> to vector<32x32xf32>
    %278 = arith.mulf %276, %277 : vector<32x32xf32>
    %279 = vector.broadcast %196 : vector<1x32xf32> to vector<32x32xf32>
    %280 = arith.addf %278, %279 : vector<32x32xf32>
    %281 = arith.truncf %280 : vector<32x32xf32> to vector<32x32xbf16>
    %cst_106 = arith.constant dense<0.000000e+00> : vector<32x64xf32>
    %282 = tpu.matmul %281, %186, %cst_106 {dimension_numbers = #tpu.dot_dimension_numbers<[1], [0], [0], [1], [0, 0, 1, 1], [], []>} : vector<32x32xbf16>, vector<32x64xbf16>, vector<32x64xf32> -> vector<32x64xf32>
    %283 = vector.broadcast %198 : vector<1x64xf32> to vector<32x64xf32>
    %284 = arith.addf %282, %283 : vector<32x64xf32>
    %285 = arith.mulf %284, %284 : vector<32x64xf32>
    %286 = arith.mulf %284, %285 : vector<32x64xf32>
    %cst_107 = arith.constant 4.471500e-02 : f32
    %287 = vector.broadcast %cst_107 : f32 to vector<32x64xf32>
    %288 = arith.mulf %287, %286 : vector<32x64xf32>
    %289 = arith.addf %284, %288 : vector<32x64xf32>
    %cst_108 = arith.constant 0.797884583 : f32
    %290 = vector.broadcast %cst_108 : f32 to vector<32x64xf32>
    %291 = arith.mulf %290, %289 : vector<32x64xf32>
    %292 = math.tanh %291 : vector<32x64xf32>
    %cst_109 = arith.constant 1.000000e+00 : f32
    %293 = vector.broadcast %cst_109 : f32 to vector<32x64xf32>
    %294 = arith.addf %293, %292 : vector<32x64xf32>
    %cst_110 = arith.constant 5.000000e-01 : f32
    %295 = vector.broadcast %cst_110 : f32 to vector<32x64xf32>
    %296 = arith.mulf %295, %294 : vector<32x64xf32>
    %297 = arith.mulf %284, %296 : vector<32x64xf32>
    %298 = arith.truncf %297 : vector<32x64xf32> to vector<32x64xbf16>
    %cst_111 = arith.constant dense<0.000000e+00> : vector<32x32xf32>
    %299 = tpu.matmul %298, %188, %cst_111 {dimension_numbers = #tpu.dot_dimension_numbers<[1], [0], [0], [1], [0, 0, 1, 1], [], []>} : vector<32x64xbf16>, vector<64x32xbf16>, vector<32x32xf32> -> vector<32x32xf32>
    %300 = vector.broadcast %200 : vector<1x32xf32> to vector<32x32xf32>
    %301 = arith.addf %299, %300 : vector<32x32xf32>
    %302 = arith.addf %280, %301 : vector<32x32xf32>
    %cst_112 = arith.constant dense<0.000000e+00> : vector<32xf32>
    %303 = vector.multi_reduction <add>, %302, %cst_112 [1] : vector<32x32xf32> to vector<32xf32>
    %304 = vector.shape_cast %303 : vector<32xf32> to vector<32x1xf32>
    %cst_113 = arith.constant 3.200000e+01 : f32
    %305 = vector.broadcast %cst_113 : f32 to vector<32x1xf32>
    %306 = arith.divf %304, %305 : vector<32x1xf32>
    %307 = vector.broadcast %306 : vector<32x1xf32> to vector<32x32xf32>
    %308 = arith.subf %302, %307 : vector<32x32xf32>
    %309 = arith.mulf %308, %308 : vector<32x32xf32>
    %cst_114 = arith.constant dense<0.000000e+00> : vector<32xf32>
    %310 = vector.multi_reduction <add>, %309, %cst_114 [1] : vector<32x32xf32> to vector<32xf32>
    %311 = vector.shape_cast %310 : vector<32xf32> to vector<32x1xf32>
    %cst_115 = arith.constant 3.200000e+01 : f32
    %312 = vector.broadcast %cst_115 : f32 to vector<32x1xf32>
    %313 = arith.divf %311, %312 : vector<32x1xf32>
    %314 = vector.broadcast %306 : vector<32x1xf32> to vector<32x32xf32>
    %315 = arith.subf %302, %314 : vector<32x32xf32>
    %cst_116 = arith.constant 9.99999996E-13 : f32
    %316 = vector.broadcast %cst_116 : f32 to vector<32x1xf32>
    %317 = arith.addf %313, %316 : vector<32x1xf32>
    %318 = math.rsqrt %317 : vector<32x1xf32>
    %319 = vector.broadcast %318 : vector<32x1xf32> to vector<32x32xf32>
    %320 = arith.mulf %315, %319 : vector<32x32xf32>
    %321 = vector.broadcast %202 : vector<1x32xf32> to vector<32x32xf32>
    %322 = arith.mulf %320, %321 : vector<32x32xf32>
    %323 = vector.broadcast %204 : vector<1x32xf32> to vector<32x32xf32>
    %324 = arith.addf %322, %323 : vector<32x32xf32>
    %325 = vector.extract_strided_slice %324 {offsets = [0, 0], sizes = [1, 32], strides = [1, 1]} : vector<32x32xf32> to vector<1x32xf32>
    %326 = vector.extract_strided_slice %324 {offsets = [8, 0], sizes = [1, 32], strides = [1, 1]} : vector<32x32xf32> to vector<1x32xf32>
    %327 = vector.extract_strided_slice %324 {offsets = [16, 0], sizes = [1, 32], strides = [1, 1]} : vector<32x32xf32> to vector<1x32xf32>
    %328 = vector.extract_strided_slice %324 {offsets = [24, 0], sizes = [1, 32], strides = [1, 1]} : vector<32x32xf32> to vector<1x32xf32>
    %329 = tpu.concatenate %325, %326, %327, %328 in 1 : vector<1x32xf32>, vector<1x32xf32>, vector<1x32xf32>, vector<1x32xf32> -> vector<1x128xf32>
    %c0_117 = arith.constant 0 : index
    %c0_118 = arith.constant 0 : index
    %c0_119 = arith.constant 0 : index
    %330 = vector.load %arg5[%c0_117, %c0_118, %c0_119] : memref<1x1x128xf32, #tpu.memory_space<vmem>>, vector<1x1x128xf32>
    %331 = vector.shape_cast %330 : vector<1x1x128xf32> to vector<1x128xf32>
    %332 = vector.shape_cast %329 : vector<1x128xf32> to vector<1x1x128xf32>
    tpu.vector_store %arg5[%c0_117, %c0_118, %c0_119], %332 {strides = array<i32>} : memref<1x1x128xf32, #tpu.memory_space<vmem>>, vector<1x1x128xf32>,
    return
  }
  func.func @transform_0(%arg0: i32) -> (i32, i32, i32) {
    %c0_i32 = arith.constant 0 : i32
    %c0_i32_0 = arith.constant 0 : i32
    %c0_i32_1 = arith.constant 0 : i32
    return %arg0, %c0_i32, %c0_i32_0 : i32, i32, i32
  }
  func.func @transform_1(%arg0: i32) -> (i32, i32, i32) {
    %c0_i32 = arith.constant 0 : i32
    %c0_i32_0 = arith.constant 0 : i32
    %c0_i32_1 = arith.constant 0 : i32
    return %arg0, %c0_i32, %c0_i32_0 : i32, i32, i32
  }
  func.func @transform_2(%arg0: i32) -> (i32, i32, i32) {
    %c0_i32 = arith.constant 0 : i32
    %c0_i32_0 = arith.constant 0 : i32
    %c0_i32_1 = arith.constant 0 : i32
    return %arg0, %c0_i32, %c0_i32_0 : i32, i32, i32
  }
  func.func @transform_3(%arg0: i32) -> (i32, i32, i32) {
    %c0_i32 = arith.constant 0 : i32
    %c0_i32_0 = arith.constant 0 : i32
    %c0_i32_1 = arith.constant 0 : i32
    return %arg0, %c0_i32, %c0_i32_0 : i32, i32, i32
  }
  func.func @transform_4(%arg0: i32) -> (i32, i32, i32) {
    %c0_i32 = arith.constant 0 : i32
    %c0_i32_0 = arith.constant 0 : i32
    %c0_i32_1 = arith.constant 0 : i32
    return %arg0, %c0_i32, %c0_i32_0 : i32, i32, i32
  }
}

</mosaic_0001>

<llo_original>
// kernel: biencoder_forward.1
$region0: #{biencoder_forward.1}
  #allocation0 [shape = 'u32[]', space=smem, size = 0x4, offset = 0x4, fixed_abs, tag = 'smem constant byte address 0x4 - core index']
  #allocation1 [shape = 'u32[144,128]{1,0:T(1,128)}', space=vmem, size = 0x12000, scoped, tag = 'internal scratch']
  %s0 = inlined_call_operand.vmem [shape: f32[2,32,32], index: 0, kind: input, shape index: {}]
  %s1 = inlined_call_operand.vmem [shape: f32[2,4,8], index: 1, kind: input, shape index: {}]
  %s2 = inlined_call_operand.vmem [shape: bf16[2,320,96], index: 2, kind: input, shape index: {}]
  %s3 = inlined_call_operand.vmem [shape: f32[2,24,96], index: 3, kind: input, shape index: {}]
  %s4 = inlined_call_operand.vmem [shape: f32[2,1,128], index: 4, kind: output, shape index: {}]
  %s5 = sld [smem:[#allocation0]]
  $region49: #{biencoder_forward.1} parent=0
    _
  %s7 = ssub.s32 1, %s5
  %s8 = scalar_select 0, %s7, %s5
  loop: start=0, step=1, limit=4
  $region2: #{biencoder_forward.1} parent=0 // loop_pre_header
    _
  $region3: #{biencoder_forward.1} parent=0 // loop_header
    %s10 = sphi 0, %s14
    %p11 = scmp.ge.s32.totalorder %s10, 4
    %s20 = sphi 0, %s22
    %s23 = sphi 0, %s20
    %s24 = sphi 0, %s23
    %s40 = sphi 0, %s24
    %s46 = sphi 0, %s48
    %s49 = sphi 0, %s46
    %s50 = sphi 0, %s49
    %s66 = sphi 0, %s50
    %s72 = sphi 0, %s74
    %s75 = sphi 0, %s72
    %s76 = sphi 0, %s75
    %s92 = sphi 0, %s76
    %s98 = sphi 0, %s100
    %s101 = sphi 0, %s98
    %s102 = sphi 0, %s101
    %s118 = sphi 0, %s102
    %s124 = sphi 0, %s126
    %s127 = sphi 0, %s124
    %s128 = sphi 0, %s127
    %s144 = sphi 0, %s128
  $region4: #{biencoder_forward.1} parent=0 // loop_header_branch
    %13 = sbr.rel (%p11) target = $region8
  $region5: #{biencoder_forward.1} parent=0 // loop_body
    %s15 = ssub.s32 %s10, 1
    %s16 = ssub.s32 %s10, 2
    %s17 = sadd.s32 %s10, 1
    %s18 = ssub.s32 %s10, %s17
    %p19 = scmp.eq.s32.totalorder %s18, 0
    %s21 = sadd.s32 %s20, 1
    %s22 = scalar_select %p19, %s20, %s21
    %p25 = pneg %p19
    %p26 = scmp.eq.s32.totalorder %s10, 1
    %p27 = por %p25, %p26
    %p28 = scmp.ne.s32.totalorder %s20, %s23
    %p29 = scmp.eq.s32.totalorder %s10, 0
    %p30 = por %p28, %p29
    %p31 = scmp.ne.s32.totalorder %s20, %s23
    %p32 = scmp.eq.s32.totalorder %s15, 1
    %p33 = por %p31, %p32
    %p34 = scmp.ne.s32.totalorder %s23, %s24
    %p35 = scmp.eq.s32.totalorder %s15, 0
    %p36 = por %p34, %p35
    %p37 = scmp.ne.s32.totalorder %s23, %s24
    %p38 = scmp.eq.s32.totalorder %s16, 1
    %p39 = por %p37, %p38
    %p41 = scmp.ne.s32.totalorder %s24, %s40
    %p42 = scmp.eq.s32.totalorder %s16, 0
    %p43 = por %p41, %p42
    %s44 = ssub.s32 %s10, %s17
    %p45 = scmp.eq.s32.totalorder %s44, 0
    %s47 = sadd.s32 %s46, 1
    %s48 = scalar_select %p45, %s46, %s47
    %p51 = pneg %p45
    %p52 = scmp.eq.s32.totalorder %s10, 1
    %p53 = por %p51, %p52
    %p54 = scmp.ne.s32.totalorder %s46, %s49
    %p55 = scmp.eq.s32.totalorder %s10, 0
    %p56 = por %p54, %p55
    %p57 = scmp.ne.s32.totalorder %s46, %s49
    %p58 = scmp.eq.s32.totalorder %s15, 1
    %p59 = por %p57, %p58
    %p60 = scmp.ne.s32.totalorder %s49, %s50
    %p61 = scmp.eq.s32.totalorder %s15, 0
    %p62 = por %p60, %p61
    %p63 = scmp.ne.s32.totalorder %s49, %s50
    %p64 = scmp.eq.s32.totalorder %s16, 1
    %p65 = por %p63, %p64
    %p67 = scmp.ne.s32.totalorder %s50, %s66
    %p68 = scmp.eq.s32.totalorder %s16, 0
    %p69 = por %p67, %p68
    %s70 = ssub.s32 %s10, %s17
    %p71 = scmp.eq.s32.totalorder %s70, 0
    %s73 = sadd.s32 %s72, 1
    %s74 = scalar_select %p71, %s72, %s73
    %p77 = pneg %p71
    %p78 = scmp.eq.s32.totalorder %s10, 1
    %p79 = por %p77, %p78
    %p80 = scmp.ne.s32.totalorder %s72, %s75
    %p81 = scmp.eq.s32.totalorder %s10, 0
    %p82 = por %p80, %p81
    %p83 = scmp.ne.s32.totalorder %s72, %s75
    %p84 = scmp.eq.s32.totalorder %s15, 1
    %p85 = por %p83, %p84
    %p86 = scmp.ne.s32.totalorder %s75, %s76
    %p87 = scmp.eq.s32.totalorder %s15, 0
    %p88 = por %p86, %p87
    %p89 = scmp.ne.s32.totalorder %s75, %s76
    %p90 = scmp.eq.s32.totalorder %s16, 1
    %p91 = por %p89, %p90
    %p93 = scmp.ne.s32.totalorder %s76, %s92
    %p94 = scmp.eq.s32.totalorder %s16, 0
    %p95 = por %p93, %p94
    %s96 = ssub.s32 %s10, %s17
    %p97 = scmp.eq.s32.totalorder %s96, 0
    %s99 = sadd.s32 %s98, 1
    %s100 = scalar_select %p97, %s98, %s99
    %p103 = pneg %p97
    %p104 = scmp.eq.s32.totalorder %s10, 1
    %p105 = por %p103, %p104
    %p106 = scmp.ne.s32.totalorder %s98, %s101
    %p107 = scmp.eq.s32.totalorder %s10, 0
    %p108 = por %p106, %p107
    %p109 = scmp.ne.s32.totalorder %s98, %s101
    %p110 = scmp.eq.s32.totalorder %s15, 1
    %p111 = por %p109, %p110
    %p112 = scmp.ne.s32.totalorder %s101, %s102
    %p113 = scmp.eq.s32.totalorder %s15, 0
    %p114 = por %p112, %p113
    %p115 = scmp.ne.s32.totalorder %s101, %s102
    %p116 = scmp.eq.s32.totalorder %s16, 1
    %p117 = por %p115, %p116
    %p119 = scmp.ne.s32.totalorder %s102, %s118
    %p120 = scmp.eq.s32.totalorder %s16, 0
    %p121 = por %p119, %p120
    %s122 = ssub.s32 %s10, %s17
    %p123 = scmp.eq.s32.totalorder %s122, 0
    %s125 = sadd.s32 %s124, 1
    %s126 = scalar_select %p123, %s124, %s125
    %p129 = pneg %p123
    %p130 = scmp.eq.s32.totalorder %s10, 1
    %p131 = por %p129, %p130
    %p132 = scmp.ne.s32.totalorder %s124, %s127
    %p133 = scmp.eq.s32.totalorder %s10, 0
    %p134 = por %p132, %p133
    %p135 = scmp.ne.s32.totalorder %s124, %s127
    %p136 = scmp.eq.s32.totalorder %s15, 1
    %p137 = por %p135, %p136
    %p138 = scmp.ne.s32.totalorder %s127, %s128
    %p139 = scmp.eq.s32.totalorder %s15, 0
    %p140 = por %p138, %p139
    %p141 = scmp.ne.s32.totalorder %s127, %s128
    %p142 = scmp.eq.s32.totalorder %s16, 1
    %p143 = por %p141, %p142
    %p145 = scmp.ne.s32.totalorder %s128, %s144
    %p146 = scmp.eq.s32.totalorder %s16, 0
    %p147 = por %p145, %p146
    %p148 = scmp.le.s32.totalorder 1, %s10
    %p149 = scmp.lt.s32.totalorder %s10, 3
    %p150 = pnand %p148, %p149
    %p151 = pneg %p150
    // Predicated region
    $region9: #{biencoder_forward.1} parent=5 // pred_check
      _
    $region10: #{biencoder_forward.1} parent=5 // pred_check_branch
      %153 = sbr.rel (%p150) target = $region12
    $region11: #{biencoder_forward.1} parent=5 // pred_region
      %s154 = ssub.s32 %s10, 1
    $region12: #{biencoder_forward.1} parent=5 // pred_fallthru
      _
    %p155 = scmp.lt.s32.totalorder %s10, 2
    // Predicated region
    $region13: #{biencoder_forward.1} parent=5 // pred_check
      %p156 = pneg %p155
    $region14: #{biencoder_forward.1} parent=5 // pred_check_branch
      %158 = sbr.rel (%p156) target = $region16
    $region15: #{biencoder_forward.1} parent=5 // pred_region
      // Predicated region
      $region17: #{biencoder_forward.1} parent=15 // pred_check
        %p159 = pneg %p30
      $region18: #{biencoder_forward.1} parent=15 // pred_check_branch
        %161 = sbr.rel (%p159) target = $region20
      $region19: #{biencoder_forward.1} parent=15 // pred_region
        %p162 = scmp.lt.s32.totalorder %s10, 1
        %s163 = scalar_select %p162, %s10, 1
        %s164 = smul.addr %s163, 4
        %s165 = smul.addr %s164, 8
        %s166 = scalar_lea.vmem %s0, %s165
      $region20: #{biencoder_forward.1} parent=15 // pred_fallthru
        _
      // Predicated region
      $region21: #{biencoder_forward.1} parent=15 // pred_check
        %p167 = pneg %p56
      $region22: #{biencoder_forward.1} parent=15 // pred_check_branch
        %169 = sbr.rel (%p167) target = $region24
      $region23: #{biencoder_forward.1} parent=15 // pred_region
        %p170 = scmp.lt.s32.totalorder %s10, 1
        %s171 = scalar_select %p170, %s10, 1
        %s172 = smul.addr %s171, 4
        %s173 = scalar_lea.vmem %s1, %s172
      $region24: #{biencoder_forward.1} parent=15 // pred_fallthru
        _
      // Predicated region
      $region25: #{biencoder_forward.1} parent=15 // pred_check
        %p174 = pneg %p82
      $region26: #{biencoder_forward.1} parent=15 // pred_check_branch
        %176 = sbr.rel (%p174) target = $region28
      $region27: #{biencoder_forward.1} parent=15 // pred_region
        %p177 = scmp.lt.s32.totalorder %s10, 1
        %s178 = scalar_select %p177, %s10, 1
        %s179 = smul.addr %s178, 40
        %s180 = smul.addr %s179, 4
        %s181 = scalar_lea.vmem %s2, %s180
      $region28: #{biencoder_forward.1} parent=15 // pred_fallthru
        _
      // Predicated region
      $region29: #{biencoder_forward.1} parent=15 // pred_check
        %p182 = pneg %p108
      $region30: #{biencoder_forward.1} parent=15 // pred_check_branch
        %184 = sbr.rel (%p182) target = $region32
      $region31: #{biencoder_forward.1} parent=15 // pred_region
        %p185 = scmp.lt.s32.totalorder %s10, 1
        %s186 = scalar_select %p185, %s10, 1
        %s187 = smul.addr %s186, 3
        %s188 = smul.addr %s187, 8
        %s189 = scalar_lea.vmem %s3, %s188
      $region32: #{biencoder_forward.1} parent=15 // pred_fallthru
        _
    $region16: #{biencoder_forward.1} parent=5 // pred_fallthru
      _
    %p190 = scmp.le.s32.totalorder 1, %s10
    %p191 = scmp.lt.s32.totalorder %s10, 3
    %p192 = pnand %p190, %p191
    %p193 = pneg %p192
    // Predicated region
    $region33: #{biencoder_forward.1} parent=5 // pred_check
      _
    $region34: #{biencoder_forward.1} parent=5 // pred_check_branch
      %195 = sbr.rel (%p192) target = $region36
    $region35: #{biencoder_forward.1} parent=5 // pred_region
      %s196 = ssub.s32 %s10, 1
      %p197 = scmp.lt.s32.totalorder %s15, 1
      %s198 = scalar_select %p197, %s15, 1
      %s199 = smul.addr %s198, 4
      %s200 = smul.addr %s199, 8
      %s201 = scalar_lea.vmem %s0, %s200
      %p202 = pneg %p36
      %p203 = pneg %p33
      %p204 = scmp.lt.s32.totalorder %s15, 1
      %s205 = scalar_select %p204, %s15, 1
      %s206 = smul.addr %s205, 4
      %s207 = scalar_lea.vmem %s1, %s206
      %p208 = pneg %p62
      %p209 = pneg %p59
      %p210 = scmp.lt.s32.totalorder %s15, 1
      %s211 = scalar_select %p210, %s15, 1
      %s212 = smul.addr %s211, 40
      %s213 = smul.addr %s212, 4
      %s214 = scalar_lea.vmem %s2, %s213
      %p215 = pneg %p88
      %p216 = pneg %p85
      %p217 = scmp.lt.s32.totalorder %s15, 1
      %s218 = scalar_select %p217, %s15, 1
      %s219 = smul.addr %s218, 3
      %s220 = smul.addr %s219, 8
      %s221 = scalar_lea.vmem %s3, %s220
      %p222 = pneg %p114
      %p223 = pneg %p111
      %p224 = pneg %p140
      %p225 = pneg %p137
      %p226 = scmp.lt.s32.totalorder %s15, 1
      %s227 = scalar_select %p226, %s15, 1
      %s228 = scalar_lea.vmem %s4, %s227
      %p229 = scmp.lt.s32.totalorder %s15, 1
      %s230 = scalar_select %p229, %s15, 1
      %s231 = smul.addr %s230, 4
      %s232 = smul.addr %s231, 8
      %s233 = scalar_lea.vmem %s0, %s232
      %p234 = scmp.lt.s32.totalorder %s15, 1
      %s235 = scalar_select %p234, %s15, 1
      %s236 = smul.addr %s235, 4
      %s237 = scalar_lea.vmem %s1, %s236
      %p238 = scmp.lt.s32.totalorder %s15, 1
      %s239 = scalar_select %p238, %s15, 1
      %s240 = smul.addr %s239, 40
      %s241 = smul.addr %s240, 4
      %s242 = scalar_lea.vmem %s2, %s241
      %p243 = scmp.lt.s32.totalorder %s15, 1
      %s244 = scalar_select %p243, %s15, 1
      %s245 = smul.addr %s244, 3
      %s246 = smul.addr %s245, 8
      %s247 = scalar_lea.vmem %s3, %s246
      %p248 = scmp.lt.s32.totalorder %s15, 1
      %s249 = scalar_select %p248, %s15, 1
      %s250 = scalar_lea.vmem %s4, %s249
      %v252 = vld [vmem:[%s233] sm:$0xff]
      %v253 = vld [vmem:[%s233 + $0x8] sm:$0xff]
      %v254 = vld [vmem:[%s233 + $0x10] sm:$0xff]
      %v255 = vld [vmem:[%s233 + $0x18] sm:$0xff]
      %v256 = vld [vmem:[%s247] sm:$0x1]
      %v257 = vld [vmem:[%s247 + $0x1] sm:$0x1]
      %vm258 = vcmask 261120
      %v259 = vsel %vm258, %v252, 0.0
      %260 = vadd.xlane.f32.xlu0 %v259
      %v261 = vpop.xlane.xlu0 %260
      %v262 = vsel %vm258, %v253, 0.0
      %263 = vadd.xlane.f32.xlu0 %v262
      %v264 = vpop.xlane.xlu0 %263
      %v265 = vsel %vm258, %v254, 0.0
      %266 = vadd.xlane.f32.xlu0 %v265
      %v267 = vpop.xlane.xlu0 %266
      %v268 = vsel %vm258, %v255, 0.0
      %269 = vadd.xlane.f32.xlu0 %v268
      %v270 = vpop.xlane.xlu0 %269
      %v271 = vrcp.pop 32.0
      %v272 = vmul.f32 %v261, %v271
      %v273 = vmul.f32 %v264, %v271
      %v274 = vmul.f32 %v267, %v271
      %v275 = vmul.f32 %v270, %v271
      %v276 = vsub.f32 %v252, %v272
      %v277 = vsub.f32 %v253, %v273
      %v278 = vsub.f32 %v254, %v274
      %v279 = vsub.f32 %v255, %v275
      %v280 = vmul.f32 %v276, %v276
      %v281 = vmul.f32 %v277, %v277
      %v282 = vmul.f32 %v278, %v278
      %v283 = vmul.f32 %v279, %v279
      %v284 = vsel %vm258, %v280, 0.0
      %285 = vadd.xlane.f32.xlu0 %v284
      %v286 = vpop.xlane.xlu0 %285
      %v287 = vsel %vm258, %v281, 0.0
      %288 = vadd.xlane.f32.xlu0 %v287
      %v289 = vpop.xlane.xlu0 %288
      %v290 = vsel %vm258, %v282, 0.0
      %291 = vadd.xlane.f32.xlu0 %v290
      %v292 = vpop.xlane.xlu0 %291
      %v293 = vsel %vm258, %v283, 0.0
      %294 = vadd.xlane.f32.xlu0 %v293
      %v295 = vpop.xlane.xlu0 %294
      %v296 = vmul.f32 %v286, %v271
      %v297 = vmul.f32 %v289, %v271
      %v298 = vmul.f32 %v292, %v271
      %v299 = vmul.f32 %v295, %v271
      %v300 = vadd.f32 %v296, 1e-12
      %v301 = vadd.f32 %v297, 1e-12
      %v302 = vadd.f32 %v298, 1e-12
      %v303 = vadd.f32 %v299, 1e-12
      %v304 = vrsqrt.pop %v300
      %v305 = vrsqrt.pop %v301
      %v306 = vrsqrt.pop %v302
      %v307 = vrsqrt.pop %v303
      %v308 = vmul.f32 %v276, %v304
      %v309 = vmul.f32 %v277, %v305
      %v310 = vmul.f32 %v278, %v306
      %v311 = vmul.f32 %v279, %v307
      %v312 = vlaneseq
      %v313 = vshrl.u32 %v312, 7
      %v314 = vsub.s32 0, %v313
      %v315 = vrot.slane %v256, %v314
      %v316 = vmul.f32 %v308, %v315
      %v317 = vmul.f32 %v309, %v315
      %v318 = vmul.f32 %v310, %v315
      %v319 = vmul.f32 %v311, %v315
      %v320 = vlaneseq
      %v321 = vshrl.u32 %v320, 7
      %v322 = vsub.s32 0, %v321
      %v323 = vrot.slane %v257, %v322
      %v324 = vadd.f32 %v316, %v323
      %v325 = vadd.f32 %v317, %v323
      %v326 = vadd.f32 %v318, %v323
      %v327 = vadd.f32 %v319, %v323
      %v328 = vld [vmem:[%s237] sm:$0xf]
      %v329 = vsub.f32 1.0, %v328
      %v330 = vmul.f32 %v329, -1e+09
      %v333 = vunpack.c.l.s4 1966171168
      %v334 = vunpack.c.0.s8 %v333
      %v335 = vlaneseq
      %v336 = vshrl.u32 %v335, 7
      %v337 = vsub.s32 %v334, %v336
      %v338 = vrot.slane %v330, %v337
      %v339 = vcombine.high %v338, %v338
      %v341 = vunpack.c.l.s4 1966171168
      %v342 = vunpack.c.0.s8 %v341
      %v343 = vlaneseq
      %v344 = vshrl.u32 %v343, 7
      %v345 = vsub.s32 %v342, %v344
      %v346 = vrot.slane %v338, %v345
      %v348 = vunpack.c.l.s4 1966171168
      %v349 = vunpack.c.0.s8 %v348
      %v350 = vlaneseq
      %v351 = vshrl.u32 %v350, 7
      %v352 = vsub.s32 %v349, %v351
      %v353 = vrot.slane %v339, %v352
      %v354 = vcombine.high %v346, %v346
      %v355 = vcombine.high %v353, %v353
      %v356 = vlaneseq
      %v357 = vshrl.u32 %v356, 7
      %v358 = vsub.s32 0, %v357
      %v359 = vrot.slane %v346, %v358
      %v360 = vlaneseq
      %v361 = vshrl.u32 %v360, 7
      %v362 = vsub.s32 0, %v361
      %v363 = vrot.slane %v353, %v362
      %v364 = vlaneseq
      %v365 = vshrl.u32 %v364, 7
      %v366 = vsub.s32 0, %v365
      %v367 = vrot.slane %v354, %v366
      %v368 = vlaneseq
      %v369 = vshrl.u32 %v368, 7
      %v370 = vsub.s32 0, %v369
      %v371 = vrot.slane %v355, %v370
      %v376 = vld [vmem:[%s242] sm:$0xf]
      %v377 = vld [vmem:[%s242 + $0x4] sm:$0xf]
      %v378 = vld [vmem:[%s242 + $0x8] sm:$0xf]
      %v379 = vld [vmem:[%s242 + $0xc] sm:$0xf]
      %v380 = vld [vmem:[%s242 + $0x10] sm:$0xf]
      %v381 = vld [vmem:[%s242 + $0x14] sm:$0xf]
      %v382 = vld [vmem:[%s242 + $0x18] sm:$0xf]
      %v383 = vld [vmem:[%s242 + $0x1c] sm:$0xf]
      %v384 = vld [vmem:[%s242 + $0x20] sm:$0xf]
      %v385 = vld [vmem:[%s242 + $0x24] sm:$0xf]
      %v386 = vld [vmem:[%s242 + $0x28] sm:$0xf]
      %v387 = vld [vmem:[%s242 + $0x2c] sm:$0xf]
      %v388 = vld [vmem:[%s242 + $0x30] sm:$0xf]
      %v389 = vld [vmem:[%s242 + $0x34] sm:$0xf]
      %v390 = vld [vmem:[%s242 + $0x38] sm:$0xf]
      %v391 = vld [vmem:[%s242 + $0x3c] sm:$0xf]
      %v392 = vld [vmem:[%s242 + $0x40] sm:$0xf]
      %v393 = vld [vmem:[%s242 + $0x44] sm:$0xf]
      %v394 = vld [vmem:[%s242 + $0x48] sm:$0xf]
      %v395 = vld [vmem:[%s242 + $0x4c] sm:$0xf]
      %v396 = vld [vmem:[%s247 + $0x2] sm:$0x1]
      %v397 = vld [vmem:[%s247 + $0x3] sm:$0x1]
      %v398 = vld [vmem:[%s247 + $0x4] sm:$0x1]
      %v399 = vld [vmem:[%s247 + $0x5] sm:$0x1]
      %v400 = vld [vmem:[%s247 + $0x6] sm:$0x1]
      %v401 = vld [vmem:[%s247 + $0x7] sm:$0x1]
      %v402 = vld [vmem:[%s247 + $0x8] sm:$0x1]
      %v403 = vld [vmem:[%s247 + $0x9] sm:$0x1]
      %v404 = vpack.c.bf16 %v325, %v324
      %v405 = vpack.c.bf16 %v327, %v326
      %v406 = vlaneseq
      %v407 = vshrl.u32 %v406, 7
      %v408 = vsub.s32 0, %v407
      %v409 = vrot.slane %v396, %v408
      %v414 = vunpack.c.l.b16 %v376
      %v415 = vunpack.c.l.b16 %v377
      %v416 = vunpack.c.l.b16 %v378
      %v417 = vunpack.c.l.b16 %v379
      %v418 = vpack.c.b16 %v415, %v414
      %v419 = vpack.c.b16 %v417, %v416
      %v423 = vsel %vm258, %v404, 0
      %v426 = vsel %vm258, %v405, 0
      %428 = vmatprep.subr.bf16.mxu0 0
      %429 = vmatpush1.bf16.msra.mxu0 %v418
      %430 = vmatprep.subr.bf16.mxu0 0
      %431 = vmatpush1.bf16.msra.mxu0 %v419
      %432 = vmatprep.subr.bf16.mxu0 0
      %433 = vmatpush1.bf16.msra.mxu0 0
      %434 = vmatprep.subr.bf16.mxu0 0
      %435 = vmatpush1.bf16.msra.mxu0 0
      %436 = vmatprep.subr.bf16.mxu0 0
      %437 = vmatpush1.bf16.msra.mxu0 0
      %438 = vmatprep.subr.bf16.mxu0 0
      %439 = vmatpush1.bf16.msra.mxu0 0
      %440 = vmatprep.subr.bf16.mxu0 0
      %441 = vmatpush1.bf16.msra.mxu0 0
      %442 = vmatprep.subr.bf16.mxu0 0
      %443 = vmatpush1.bf16.msra.mxu0 0
      %444 = vmatprep.subr.bf16.mxu0 0
      %445 = vmatpush1.bf16.msra.mxu0 0
      %446 = vmatprep.subr.bf16.mxu0 0
      %447 = vmatpush1.bf16.msra.mxu0 0
      %448 = vmatprep.subr.bf16.mxu0 0
      %449 = vmatpush1.bf16.msra.mxu0 0
      %450 = vmatprep.subr.bf16.mxu0 0
      %451 = vmatpush1.bf16.msra.mxu0 0
      %452 = vmatprep.subr.bf16.mxu0 0
      %453 = vmatpush1.bf16.msra.mxu0 0
      %454 = vmatprep.subr.bf16.mxu0 0
      %455 = vmatpush1.bf16.msra.mxu0 0
      %456 = vmatprep.subr.bf16.mxu0 0
      %457 = vmatpush1.bf16.msra.mxu0 0
      %458 = vmatprep.subr.bf16.mxu0 0
      %459 = vmatpush1.bf16.msra.mxu0 0
      %460 = vmatprep.mubr.bf16.mxu0 0
      %461 = vmatmul.mubr.bf16.gmra.mrb[0].mxu0 %v423
      %v462 = vpop.f32.mrb[0].mxu0
      %v463 = vadd.f32 %v409, %v462
      %v464 = vpop.f32.mrb[0].mxu0
      %v465 = vpop.f32.mrb[0].mxu0
      %v466 = vadd.f32 %v409, %v465
      %v467 = vpop.f32.mrb[0].mxu0
      %468 = vmatprep.mubr.bf16.mxu0 0
      %469 = vmatmul.mubr.bf16.gmra.mrb[0].mxu0 %v426
      %v470 = vpop.f32.mrb[0].mxu0
      %v471 = vadd.f32 %v409, %v470
      %v472 = vpop.f32.mrb[0].mxu0
      %v473 = vpop.f32.mrb[0].mxu0
      %v474 = vadd.f32 %v409, %v473
      %v475 = vpop.f32.mrb[0].mxu0
      %476 = vdwg.mxu0
      %v477 = vpack.c.bf16 %v463, %v463
      %v478 = vpack.c.bf16 %v466, %v466
      %v479 = vpack.c.bf16 %v471, %v471
      %v480 = vpack.c.bf16 %v474, %v474
      %482 = vrot.lane.b32.xlu0 %v477, 96
      %v483 = vpop.permute.xlu0 %482
      %vm484 = vcmask 130048
      %v486 = vsel %vm484, %v477, 0
      %v489 = vsel %vm484, %v483, 0
      %491 = vmatprep.subr.bf16.mxu0 0
      %492 = vmatpush1.bf16.xpose.msra.mxu0 %v489
      %493 = vmatprep.subr.bf16.mxu0 0
      %494 = vmatpush1.bf16.xpose.msra.mxu0 0
      %495 = vmatprep.subr.bf16.mxu0 0
      %496 = vmatpush1.bf16.xpose.msra.mxu0 0
      %497 = vmatprep.subr.bf16.mxu0 0
      %498 = vmatpush1.bf16.xpose.msra.mxu0 0
      %499 = vmatprep.subr.bf16.mxu0 0
      %500 = vmatpush1.bf16.xpose.msra.mxu0 0
      %501 = vmatprep.subr.bf16.mxu0 0
      %502 = vmatpush1.bf16.xpose.msra.mxu0 0
      %503 = vmatprep.subr.bf16.mxu0 0
      %504 = vmatpush1.bf16.xpose.msra.mxu0 0
      %505 = vmatprep.subr.bf16.mxu0 0
      %506 = vmatpush1.bf16.xpose.msra.mxu0 0
      %507 = vmatprep.subr.bf16.mxu0 0
      %508 = vmatpush1.bf16.xpose.msra.mxu0 0
      %509 = vmatprep.subr.bf16.mxu0 0
      %510 = vmatpush1.bf16.xpose.msra.mxu0 0
      %511 = vmatprep.subr.bf16.mxu0 0
      %512 = vmatpush1.bf16.xpose.msra.mxu0 0
      %513 = vmatprep.subr.bf16.mxu0 0
      %514 = vmatpush1.bf16.xpose.msra.mxu0 0
      %515 = vmatprep.subr.bf16.mxu0 0
      %516 = vmatpush1.bf16.xpose.msra.mxu0 0
      %517 = vmatprep.subr.bf16.mxu0 0
      %518 = vmatpush1.bf16.xpose.msra.mxu0 0
      %519 = vmatprep.subr.bf16.mxu0 0
      %520 = vmatpush1.bf16.xpose.msra.mxu0 0
      %521 = vmatprep.subr.bf16.mxu0 0
      %522 = vmatpush1.bf16.xpose.msra.mxu0 0
      %523 = vmatprep.mubr.bf16.mxu0 0
      %524 = vmatmul.mubr.bf16.gmra.mrb[0].mxu0 %v486
      %v525 = vpop.f32.mrb[0].mxu0
      %v526 = vadd.f32 %v359, %v525
      %v527 = vpop.f32.mrb[0].mxu0
      %v528 = vpop.f32.mrb[0].mxu0
      %v529 = vpop.f32.mrb[0].mxu0
      %530 = vdwg.mxu0
      %532 = vrot.lane.b32.xlu0 %v478, 96
      %v533 = vpop.permute.xlu0 %532
      %v535 = vsel %vm484, %v478, 0
      %v538 = vsel %vm484, %v533, 0
      %540 = vmatprep.subr.bf16.mxu0 0
      %541 = vmatpush1.bf16.xpose.msra.mxu0 %v538
      %542 = vmatprep.subr.bf16.mxu0 0
      %543 = vmatpush1.bf16.xpose.msra.mxu0 0
      %544 = vmatprep.subr.bf16.mxu0 0
      %545 = vmatpush1.bf16.xpose.msra.mxu0 0
      %546 = vmatprep.subr.bf16.mxu0 0
      %547 = vmatpush1.bf16.xpose.msra.mxu0 0
      %548 = vmatprep.subr.bf16.mxu0 0
      %549 = vmatpush1.bf16.xpose.msra.mxu0 0
      %550 = vmatprep.subr.bf16.mxu0 0
      %551 = vmatpush1.bf16.xpose.msra.mxu0 0
      %552 = vmatprep.subr.bf16.mxu0 0
      %553 = vmatpush1.bf16.xpose.msra.mxu0 0
      %554 = vmatprep.subr.bf16.mxu0 0
      %555 = vmatpush1.bf16.xpose.msra.mxu0 0
      %556 = vmatprep.subr.bf16.mxu0 0
      %557 = vmatpush1.bf16.xpose.msra.mxu0 0
      %558 = vmatprep.subr.bf16.mxu0 0
      %559 = vmatpush1.bf16.xpose.msra.mxu0 0
      %560 = vmatprep.subr.bf16.mxu0 0
      %561 = vmatpush1.bf16.xpose.msra.mxu0 0
      %562 = vmatprep.subr.bf16.mxu0 0
      %563 = vmatpush1.bf16.xpose.msra.mxu0 0
      %564 = vmatprep.subr.bf16.mxu0 0
      %565 = vmatpush1.bf16.xpose.msra.mxu0 0
      %566 = vmatprep.subr.bf16.mxu0 0
      %567 = vmatpush1.bf16.xpose.msra.mxu0 0
      %568 = vmatprep.subr.bf16.mxu0 0
      %569 = vmatpush1.bf16.xpose.msra.mxu0 0
      %570 = vmatprep.subr.bf16.mxu0 0
      %571 = vmatpush1.bf16.xpose.msra.mxu0 0
      %572 = vmatprep.mubr.bf16.mxu0 0
      %573 = vmatmul.mubr.bf16.gmra.mrb[0].mxu0 %v535
      %v574 = vpop.f32.mrb[0].mxu0
      %v575 = vadd.f32 %v363, %v574
      %v576 = vpop.f32.mrb[0].mxu0
      %v577 = vpop.f32.mrb[0].mxu0
      %v578 = vpop.f32.mrb[0].mxu0
      %579 = vdwg.mxu0
      %581 = vrot.lane.b32.xlu0 %v479, 96
      %v582 = vpop.permute.xlu0 %581
      %v584 = vsel %vm484, %v479, 0
      %v587 = vsel %vm484, %v582, 0
      %589 = vmatprep.subr.bf16.mxu0 0
      %590 = vmatpush1.bf16.xpose.msra.mxu0 %v587
      %591 = vmatprep.subr.bf16.mxu0 0
      %592 = vmatpush1.bf16.xpose.msra.mxu0 0
      %593 = vmatprep.subr.bf16.mxu0 0
      %594 = vmatpush1.bf16.xpose.msra.mxu0 0
      %595 = vmatprep.subr.bf16.mxu0 0
      %596 = vmatpush1.bf16.xpose.msra.mxu0 0
      %597 = vmatprep.subr.bf16.mxu0 0
      %598 = vmatpush1.bf16.xpose.msra.mxu0 0
      %599 = vmatprep.subr.bf16.mxu0 0
      %600 = vmatpush1.bf16.xpose.msra.mxu0 0
      %601 = vmatprep.subr.bf16.mxu0 0
      %602 = vmatpush1.bf16.xpose.msra.mxu0 0
      %603 = vmatprep.subr.bf16.mxu0 0
      %604 = vmatpush1.bf16.xpose.msra.mxu0 0
      %605 = vmatprep.subr.bf16.mxu0 0
      %606 = vmatpush1.bf16.xpose.msra.mxu0 0
      %607 = vmatprep.subr.bf16.mxu0 0
      %608 = vmatpush1.bf16.xpose.msra.mxu0 0
      %609 = vmatprep.subr.bf16.mxu0 0
      %610 = vmatpush1.bf16.xpose.msra.mxu0 0
      %611 = vmatprep.subr.bf16.mxu0 0
      %612 = vmatpush1.bf16.xpose.msra.mxu0 0
      %613 = vmatprep.subr.bf16.mxu0 0
      %614 = vmatpush1.bf16.xpose.msra.mxu0 0
      %615 = vmatprep.subr.bf16.mxu0 0
      %616 = vmatpush1.bf16.xpose.msra.mxu0 0
      %617 = vmatprep.subr.bf16.mxu0 0
      %618 = vmatpush1.bf16.xpose.msra.mxu0 0
      %619 = vmatprep.subr.bf16.mxu0 0
      %620 = vmatpush1.bf16.xpose.msra.mxu0 0
      %621 = vmatprep.mubr.bf16.mxu0 0
      %622 = vmatmul.mubr.bf16.gmra.mrb[0].mxu0 %v584
      %v623 = vpop.f32.mrb[0].mxu0
      %v624 = vadd.f32 %v367, %v623
      %v625 = vpop.f32.mrb[0].mxu0
      %v626 = vpop.f32.mrb[0].mxu0
      %v627 = vpop.f32.mrb[0].mxu0
      %628 = vdwg.mxu0
      %630 = vrot.lane.b32.xlu0 %v480, 96
      %v631 = vpop.permute.xlu0 %630
      %v633 = vsel %vm484, %v480, 0
      %v636 = vsel %vm484, %v631, 0
      %638 = vmatprep.subr.bf16.mxu0 0
      %639 = vmatpush1.bf16.xpose.msra.mxu0 %v636
      %640 = vmatprep.subr.bf16.mxu0 0
      %641 = vmatpush1.bf16.xpose.msra.mxu0 0
      %642 = vmatprep.subr.bf16.mxu0 0
      %643 = vmatpush1.bf16.xpose.msra.mxu0 0
      %644 = vmatprep.subr.bf16.mxu0 0
      %645 = vmatpush1.bf16.xpose.msra.mxu0 0
      %646 = vmatprep.subr.bf16.mxu0 0
      %647 = vmatpush1.bf16.xpose.msra.mxu0 0
      %648 = vmatprep.subr.bf16.mxu0 0
      %649 = vmatpush1.bf16.xpose.msra.mxu0 0
      %650 = vmatprep.subr.bf16.mxu0 0
      %651 = vmatpush1.bf16.xpose.msra.mxu0 0
      %652 = vmatprep.subr.bf16.mxu0 0
      %653 = vmatpush1.bf16.xpose.msra.mxu0 0
      %654 = vmatprep.subr.bf16.mxu0 0
      %655 = vmatpush1.bf16.xpose.msra.mxu0 0
      %656 = vmatprep.subr.bf16.mxu0 0
      %657 = vmatpush1.bf16.xpose.msra.mxu0 0
      %658 = vmatprep.subr.bf16.mxu0 0
      %659 = vmatpush1.bf16.xpose.msra.mxu0 0
      %660 = vmatprep.subr.bf16.mxu0 0
      %661 = vmatpush1.bf16.xpose.msra.mxu0 0
      %662 = vmatprep.subr.bf16.mxu0 0
      %663 = vmatpush1.bf16.xpose.msra.mxu0 0
      %664 = vmatprep.subr.bf16.mxu0 0
      %665 = vmatpush1.bf16.xpose.msra.mxu0 0
      %666 = vmatprep.subr.bf16.mxu0 0
      %667 = vmatpush1.bf16.xpose.msra.mxu0 0
      %668 = vmatprep.subr.bf16.mxu0 0
      %669 = vmatpush1.bf16.xpose.msra.mxu0 0
      %670 = vmatprep.mubr.bf16.mxu0 0
      %671 = vmatmul.mubr.bf16.gmra.mrb[0].mxu0 %v633
      %v672 = vpop.f32.mrb[0].mxu0
      %v673 = vadd.f32 %v371, %v672
      %v674 = vpop.f32.mrb[0].mxu0
      %v675 = vpop.f32.mrb[0].mxu0
      %v676 = vpop.f32.mrb[0].mxu0
      %677 = vdwg.mxu0
      %vm678 = vcmask 64512
      %v679 = vsel %vm678, %v526, -inf
      %680 = vmax.xlane.f32.xlu0 %v679
      %v681 = vpop.xlane.xlu0 %680
      %v682 = vsel %vm678, %v575, -inf
      %683 = vmax.xlane.f32.xlu0 %v682
      %v684 = vpop.xlane.xlu0 %683
      %v685 = vsel %vm678, %v624, -inf
      %686 = vmax.xlane.f32.xlu0 %v685
      %v687 = vpop.xlane.xlu0 %686
      %v688 = vsel %vm678, %v673, -inf
      %689 = vmax.xlane.f32.xlu0 %v688
      %v690 = vpop.xlane.xlu0 %689
      %v691 = vsub.f32 %v526, %v681
      %v692 = vsub.f32 %v575, %v684
      %v693 = vsub.f32 %v624, %v687
      %v694 = vsub.f32 %v673, %v690
      %v695 = vmul.f32 %v691, 1.442695
      %v696 = vpow.pop %v695
      %v697 = vmul.f32 %v692, 1.442695
      %v698 = vpow.pop %v697
      %v699 = vmul.f32 %v693, 1.442695
      %v700 = vpow.pop %v699
      %v701 = vmul.f32 %v694, 1.442695
      %v702 = vpow.pop %v701
      %v703 = vsel %vm678, %v696, 0.0
      %704 = vadd.xlane.f32.xlu0 %v703
      %v705 = vpop.xlane.xlu0 %704
      %v706 = vsel %vm678, %v698, 0.0
      %707 = vadd.xlane.f32.xlu0 %v706
      %v708 = vpop.xlane.xlu0 %707
      %v709 = vsel %vm678, %v700, 0.0
      %710 = vadd.xlane.f32.xlu0 %v709
      %v711 = vpop.xlane.xlu0 %710
      %v712 = vsel %vm678, %v702, 0.0
      %713 = vadd.xlane.f32.xlu0 %v712
      %v714 = vpop.xlane.xlu0 %713
      %v715 = vrcp.pop %v705
      %v716 = vrcp.pop %v708
      %v717 = vrcp.pop %v711
      %v718 = vrcp.pop %v714
      %v719 = vmul.f32 %v696, %v715
      %v720 = vmul.f32 %v698, %v716
      %v721 = vmul.f32 %v700, %v717
      %v722 = vmul.f32 %v702, %v718
      %v723 = vpack.c.bf16 %v719, %v719
      %v724 = vpack.c.bf16 %v720, %v720
      %v725 = vpack.c.bf16 %v721, %v721
      %v726 = vpack.c.bf16 %v722, %v722
      %727 = vrot.lane.b32.xlu0 %v477, 64
      %v728 = vpop.permute.xlu0 %727
      %v730 = vsel %vm678, %v723, 0
      %vm732 = vcmask 1043456
      %v734 = vsel %vm732, %v728, 0
      %736 = vmatprep.subr.bf16.mxu0 0
      %737 = vmatpush1.bf16.msra.mxu0 %v734
      %738 = vmatprep.subr.bf16.mxu0 0
      %739 = vmatpush1.bf16.msra.mxu0 0
      %740 = vmatprep.subr.bf16.mxu0 0
      %741 = vmatpush1.bf16.msra.mxu0 0
      %742 = vmatprep.subr.bf16.mxu0 0
      %743 = vmatpush1.bf16.msra.mxu0 0
      %744 = vmatprep.subr.bf16.mxu0 0
      %745 = vmatpush1.bf16.msra.mxu0 0
      %746 = vmatprep.subr.bf16.mxu0 0
      %747 = vmatpush1.bf16.msra.mxu0 0
      %748 = vmatprep.subr.bf16.mxu0 0
      %749 = vmatpush1.bf16.msra.mxu0 0
      %750 = vmatprep.subr.bf16.mxu0 0
      %751 = vmatpush1.bf16.msra.mxu0 0
      %752 = vmatprep.subr.bf16.mxu0 0
      %753 = vmatpush1.bf16.msra.mxu0 0
      %754 = vmatprep.subr.bf16.mxu0 0
      %755 = vmatpush1.bf16.msra.mxu0 0
      %756 = vmatprep.subr.bf16.mxu0 0
      %757 = vmatpush1.bf16.msra.mxu0 0
      %758 = vmatprep.subr.bf16.mxu0 0
      %759 = vmatpush1.bf16.msra.mxu0 0
      %760 = vmatprep.subr.bf16.mxu0 0
      %761 = vmatpush1.bf16.msra.mxu0 0
      %762 = vmatprep.subr.bf16.mxu0 0
      %763 = vmatpush1.bf16.msra.mxu0 0
      %764 = vmatprep.subr.bf16.mxu0 0
      %765 = vmatpush1.bf16.msra.mxu0 0
      %766 = vmatprep.subr.bf16.mxu0 0
      %767 = vmatpush1.bf16.msra.mxu0 0
      %768 = vmatprep.mubr.bf16.mxu0 0
      %769 = vmatmul.mubr.bf16.gmra.mrb[0].mxu0 %v730
      %v770 = vpop.f32.mrb[0].mxu0
      %v771 = vadd.f32 0.0, %v770
      %v772 = vpop.f32.mrb[0].mxu0
      %v773 = vpop.f32.mrb[0].mxu0
      %v774 = vpop.f32.mrb[0].mxu0
      %775 = vdwg.mxu0
      %776 = vrot.lane.b32.xlu0 %v478, 64
      %v777 = vpop.permute.xlu0 %776
      %v779 = vsel %vm678, %v724, 0
      %v782 = vsel %vm732, %v777, 0
      %784 = vmatprep.subr.bf16.mxu0 0
      %785 = vmatpush1.bf16.msra.mxu0 %v782
      %786 = vmatprep.subr.bf16.mxu0 0
      %787 = vmatpush1.bf16.msra.mxu0 0
      %788 = vmatprep.subr.bf16.mxu0 0
      %789 = vmatpush1.bf16.msra.mxu0 0
      %790 = vmatprep.subr.bf16.mxu0 0
      %791 = vmatpush1.bf16.msra.mxu0 0
      %792 = vmatprep.subr.bf16.mxu0 0
      %793 = vmatpush1.bf16.msra.mxu0 0
      %794 = vmatprep.subr.bf16.mxu0 0
      %795 = vmatpush1.bf16.msra.mxu0 0
      %796 = vmatprep.subr.bf16.mxu0 0
      %797 = vmatpush1.bf16.msra.mxu0 0
      %798 = vmatprep.subr.bf16.mxu0 0
      %799 = vmatpush1.bf16.msra.mxu0 0
      %800 = vmatprep.subr.bf16.mxu0 0
      %801 = vmatpush1.bf16.msra.mxu0 0
      %802 = vmatprep.subr.bf16.mxu0 0
      %803 = vmatpush1.bf16.msra.mxu0 0
      %804 = vmatprep.subr.bf16.mxu0 0
      %805 = vmatpush1.bf16.msra.mxu0 0
      %806 = vmatprep.subr.bf16.mxu0 0
      %807 = vmatpush1.bf16.msra.mxu0 0
      %808 = vmatprep.subr.bf16.mxu0 0
      %809 = vmatpush1.bf16.msra.mxu0 0
      %810 = vmatprep.subr.bf16.mxu0 0
      %811 = vmatpush1.bf16.msra.mxu0 0
      %812 = vmatprep.subr.bf16.mxu0 0
      %813 = vmatpush1.bf16.msra.mxu0 0
      %814 = vmatprep.subr.bf16.mxu0 0
      %815 = vmatpush1.bf16.msra.mxu0 0
      %816 = vmatprep.mubr.bf16.mxu0 0
      %817 = vmatmul.mubr.bf16.gmra.mrb[0].mxu0 %v779
      %v818 = vpop.f32.mrb[0].mxu0
      %v819 = vadd.f32 0.0, %v818
      %v820 = vpop.f32.mrb[0].mxu0
      %v821 = vpop.f32.mrb[0].mxu0
      %v822 = vpop.f32.mrb[0].mxu0
      %823 = vdwg.mxu0
      %824 = vrot.lane.b32.xlu0 %v479, 64
      %v825 = vpop.permute.xlu0 %824
      %v827 = vsel %vm678, %v725, 0
      %v830 = vsel %vm732, %v825, 0
      %832 = vmatprep.subr.bf16.mxu0 0
      %833 = vmatpush1.bf16.msra.mxu0 %v830
      %834 = vmatprep.subr.bf16.mxu0 0
      %835 = vmatpush1.bf16.msra.mxu0 0
      %836 = vmatprep.subr.bf16.mxu0 0
      %837 = vmatpush1.bf16.msra.mxu0 0
      %838 = vmatprep.subr.bf16.mxu0 0
      %839 = vmatpush1.bf16.msra.mxu0 0
      %840 = vmatprep.subr.bf16.mxu0 0
      %841 = vmatpush1.bf16.msra.mxu0 0
      %842 = vmatprep.subr.bf16.mxu0 0
      %843 = vmatpush1.bf16.msra.mxu0 0
      %844 = vmatprep.subr.bf16.mxu0 0
      %845 = vmatpush1.bf16.msra.mxu0 0
      %846 = vmatprep.subr.bf16.mxu0 0
      %847 = vmatpush1.bf16.msra.mxu0 0
      %848 = vmatprep.subr.bf16.mxu0 0
      %849 = vmatpush1.bf16.msra.mxu0 0
      %850 = vmatprep.subr.bf16.mxu0 0
      %851 = vmatpush1.bf16.msra.mxu0 0
      %852 = vmatprep.subr.bf16.mxu0 0
      %853 = vmatpush1.bf16.msra.mxu0 0
      %854 = vmatprep.subr.bf16.mxu0 0
      %855 = vmatpush1.bf16.msra.mxu0 0
      %856 = vmatprep.subr.bf16.mxu0 0
      %857 = vmatpush1.bf16.msra.mxu0 0
      %858 = vmatprep.subr.bf16.mxu0 0
      %859 = vmatpush1.bf16.msra.mxu0 0
      %860 = vmatprep.subr.bf16.mxu0 0
      %861 = vmatpush1.bf16.msra.mxu0 0
      %862 = vmatprep.subr.bf16.mxu0 0
      %863 = vmatpush1.bf16.msra.mxu0 0
      %864 = vmatprep.mubr.bf16.mxu0 0
      %865 = vmatmul.mubr.bf16.gmra.mrb[0].mxu0 %v827
      %v866 = vpop.f32.mrb[0].mxu0
      %v867 = vadd.f32 0.0, %v866
      %v868 = vpop.f32.mrb[0].mxu0
      %v869 = vpop.f32.mrb[0].mxu0
      %v870 = vpop.f32.mrb[0].mxu0
      %871 = vdwg.mxu0
      %872 = vrot.lane.b32.xlu0 %v480, 64
      %v873 = vpop.permute.xlu0 %872
      %v875 = vsel %vm678, %v726, 0
      %v878 = vsel %vm732, %v873, 0
      %880 = vmatprep.subr.bf16.mxu0 0
      %881 = vmatpush1.bf16.msra.mxu0 %v878
      %882 = vmatprep.subr.bf16.mxu0 0
      %883 = vmatpush1.bf16.msra.mxu0 0
      %884 = vmatprep.subr.bf16.mxu0 0
      %885 = vmatpush1.bf16.msra.mxu0 0
      %886 = vmatprep.subr.bf16.mxu0 0
      %887 = vmatpush1.bf16.msra.mxu0 0
      %888 = vmatprep.subr.bf16.mxu0 0
      %889 = vmatpush1.bf16.msra.mxu0 0
      %890 = vmatprep.subr.bf16.mxu0 0
      %891 = vmatpush1.bf16.msra.mxu0 0
      %892 = vmatprep.subr.bf16.mxu0 0
      %893 = vmatpush1.bf16.msra.mxu0 0
      %894 = vmatprep.subr.bf16.mxu0 0
      %895 = vmatpush1.bf16.msra.mxu0 0
      %896 = vmatprep.subr.bf16.mxu0 0
      %897 = vmatpush1.bf16.msra.mxu0 0
      %898 = vmatprep.subr.bf16.mxu0 0
      %899 = vmatpush1.bf16.msra.mxu0 0
      %900 = vmatprep.subr.bf16.mxu0 0
      %901 = vmatpush1.bf16.msra.mxu0 0
      %902 = vmatprep.subr.bf16.mxu0 0
      %903 = vmatpush1.bf16.msra.mxu0 0
      %904 = vmatprep.subr.bf16.mxu0 0
      %905 = vmatpush1.bf16.msra.mxu0 0
      %906 = vmatprep.subr.bf16.mxu0 0
      %907 = vmatpush1.bf16.msra.mxu0 0
      %908 = vmatprep.subr.bf16.mxu0 0
      %909 = vmatpush1.bf16.msra.mxu0 0
      %910 = vmatprep.subr.bf16.mxu0 0
      %911 = vmatpush1.bf16.msra.mxu0 0
      %912 = vmatprep.mubr.bf16.mxu0 0
      %913 = vmatmul.mubr.bf16.gmra.mrb[0].mxu0 %v875
      %v914 = vpop.f32.mrb[0].mxu0
      %v915 = vadd.f32 0.0, %v914
      %v916 = vpop.f32.mrb[0].mxu0
      %v917 = vpop.f32.mrb[0].mxu0
      %v918 = vpop.f32.mrb[0].mxu0
      %919 = vdwg.mxu0
      %920 = vrot.lane.b32.xlu0 %v477, 112
      %v921 = vpop.permute.xlu0 %920
      %922 = vrot.lane.b32.xlu0 %v477, 80
      %v923 = vpop.permute.xlu0 %922
      %v925 = vsel %vm484, %v921, 0
      %v928 = vsel %vm484, %v923, 0
      %930 = vmatprep.subr.bf16.mxu0 0
      %931 = vmatpush1.bf16.xpose.msra.mxu0 %v928
      %932 = vmatprep.subr.bf16.mxu0 0
      %933 = vmatpush1.bf16.xpose.msra.mxu0 0
      %934 = vmatprep.subr.bf16.mxu0 0
      %935 = vmatpush1.bf16.xpose.msra.mxu0 0
      %936 = vmatprep.subr.bf16.mxu0 0
      %937 = vmatpush1.bf16.xpose.msra.mxu0 0
      %938 = vmatprep.subr.bf16.mxu0 0
      %939 = vmatpush1.bf16.xpose.msra.mxu0 0
      %940 = vmatprep.subr.bf16.mxu0 0
      %941 = vmatpush1.bf16.xpose.msra.mxu0 0
      %942 = vmatprep.subr.bf16.mxu0 0
      %943 = vmatpush1.bf16.xpose.msra.mxu0 0
      %944 = vmatprep.subr.bf16.mxu0 0
      %945 = vmatpush1.bf16.xpose.msra.mxu0 0
      %946 = vmatprep.subr.bf16.mxu0 0
      %947 = vmatpush1.bf16.xpose.msra.mxu0 0
      %948 = vmatprep.subr.bf16.mxu0 0
      %949 = vmatpush1.bf16.xpose.msra.mxu0 0
      %950 = vmatprep.subr.bf16.mxu0 0
      %951 = vmatpush1.bf16.xpose.msra.mxu0 0
      %952 = vmatprep.subr.bf16.mxu0 0
      %953 = vmatpush1.bf16.xpose.msra.mxu0 0
      %954 = vmatprep.subr.bf16.mxu0 0
      %955 = vmatpush1.bf16.xpose.msra.mxu0 0
      %956 = vmatprep.subr.bf16.mxu0 0
      %957 = vmatpush1.bf16.xpose.msra.mxu0 0
      %958 = vmatprep.subr.bf16.mxu0 0
      %959 = vmatpush1.bf16.xpose.msra.mxu0 0
      %960 = vmatprep.subr.bf16.mxu0 0
      %961 = vmatpush1.bf16.xpose.msra.mxu0 0
      %962 = vmatprep.mubr.bf16.mxu0 0
      %963 = vmatmul.mubr.bf16.gmra.mrb[0].mxu0 %v925
      %v964 = vpop.f32.mrb[0].mxu0
      %v965 = vadd.f32 %v359, %v964
      %v966 = vpop.f32.mrb[0].mxu0
      %v967 = vpop.f32.mrb[0].mxu0
      %v968 = vpop.f32.mrb[0].mxu0
      %969 = vdwg.mxu0
      %970 = vrot.lane.b32.xlu0 %v478, 112
      %v971 = vpop.permute.xlu0 %970
      %972 = vrot.lane.b32.xlu0 %v478, 80
      %v973 = vpop.permute.xlu0 %972
      %v975 = vsel %vm484, %v971, 0
      %v978 = vsel %vm484, %v973, 0
      %980 = vmatprep.subr.bf16.mxu0 0
      %981 = vmatpush1.bf16.xpose.msra.mxu0 %v978
      %982 = vmatprep.subr.bf16.mxu0 0
      %983 = vmatpush1.bf16.xpose.msra.mxu0 0
      %984 = vmatprep.subr.bf16.mxu0 0
      %985 = vmatpush1.bf16.xpose.msra.mxu0 0
      %986 = vmatprep.subr.bf16.mxu0 0
      %987 = vmatpush1.bf16.xpose.msra.mxu0 0
      %988 = vmatprep.subr.bf16.mxu0 0
      %989 = vmatpush1.bf16.xpose.msra.mxu0 0
      %990 = vmatprep.subr.bf16.mxu0 0
      %991 = vmatpush1.bf16.xpose.msra.mxu0 0
      %992 = vmatprep.subr.bf16.mxu0 0
      %993 = vmatpush1.bf16.xpose.msra.mxu0 0
      %994 = vmatprep.subr.bf16.mxu0 0
      %995 = vmatpush1.bf16.xpose.msra.mxu0 0
      %996 = vmatprep.subr.bf16.mxu0 0
      %997 = vmatpush1.bf16.xpose.msra.mxu0 0
      %998 = vmatprep.subr.bf16.mxu0 0
      %999 = vmatpush1.bf16.xpose.msra.mxu0 0
      %1000 = vmatprep.subr.bf16.mxu0 0
      %1001 = vmatpush1.bf16.xpose.msra.mxu0 0
      %1002 = vmatprep.subr.bf16.mxu0 0
      %1003 = vmatpush1.bf16.xpose.msra.mxu0 0
      %1004 = vmatprep.subr.bf16.mxu0 0
      %1005 = vmatpush1.bf16.xpose.msra.mxu0 0
      %1006 = vmatprep.subr.bf16.mxu0 0
      %1007 = vmatpush1.bf16.xpose.msra.mxu0 0
      %1008 = vmatprep.subr.bf16.mxu0 0
      %1009 = vmatpush1.bf16.xpose.msra.mxu0 0
      %1010 = vmatprep.subr.bf16.mxu0 0
      %1011 = vmatpush1.bf16.xpose.msra.mxu0 0
      %1012 = vmatprep.mubr.bf16.mxu0 0
      %1013 = vmatmul.mubr.bf16.gmra.mrb[0].mxu0 %v975
      %v1014 = vpop.f32.mrb[0].mxu0
      %v1015 = vadd.f32 %v363, %v1014
      %v1016 = vpop.f32.mrb[0].mxu0
      %v1017 = vpop.f32.mrb[0].mxu0
      %v1018 = vpop.f32.mrb[0].mxu0
      %1019 = vdwg.mxu0
      %1020 = vrot.lane.b32.xlu0 %v479, 112
      %v1021 = vpop.permute.xlu0 %1020
      %1022 = vrot.lane.b32.xlu0 %v479, 80
      %v1023 = vpop.permute.xlu0 %1022
      %v1025 = vsel %vm484, %v1021, 0
      %v1028 = vsel %vm484, %v1023, 0
      %1030 = vmatprep.subr.bf16.mxu0 0
      %1031 = vmatpush1.bf16.xpose.msra.mxu0 %v1028
      %1032 = vmatprep.subr.bf16.mxu0 0
      %1033 = vmatpush1.bf16.xpose.msra.mxu0 0
      %1034 = vmatprep.subr.bf16.mxu0 0
      %1035 = vmatpush1.bf16.xpose.msra.mxu0 0
      %1036 = vmatprep.subr.bf16.mxu0 0
      %1037 = vmatpush1.bf16.xpose.msra.mxu0 0
      %1038 = vmatprep.subr.bf16.mxu0 0
      %1039 = vmatpush1.bf16.xpose.msra.mxu0 0
      %1040 = vmatprep.subr.bf16.mxu0 0
      %1041 = vmatpush1.bf16.xpose.msra.mxu0 0
      %1042 = vmatprep.subr.bf16.mxu0 0
      %1043 = vmatpush1.bf16.xpose.msra.mxu0 0
      %1044 = vmatprep.subr.bf16.mxu0 0
      %1045 = vmatpush1.bf16.xpose.msra.mxu0 0
      %1046 = vmatprep.subr.bf16.mxu0 0
      %1047 = vmatpush1.bf16.xpose.msra.mxu0 0
      %1048 = vmatprep.subr.bf16.mxu0 0
      %1049 = vmatpush1.bf16.xpose.msra.mxu0 0
      %1050 = vmatprep.subr.bf16.mxu0 0
      %1051 = vmatpush1.bf16.xpose.msra.mxu0 0
      %1052 = vmatprep.subr.bf16.mxu0 0
      %1053 = vmatpush1.bf16.xpose.msra.mxu0 0
      %1054 = vmatprep.subr.bf16.mxu0 0
      %1055 = vmatpush1.bf16.xpose.msra.mxu0 0
      %1056 = vmatprep.subr.bf16.mxu0 0
      %1057 = vmatpush1.bf16.xpose.msra.mxu0 0
      %1058 = vmatprep.subr.bf16.mxu0 0
      %1059 = vmatpush1.bf16.xpose.msra.mxu0 0
      %1060 = vmatprep.subr.bf16.mxu0 0
      %1061 = vmatpush1.bf16.xpose.msra.mxu0 0
      %1062 = vmatprep.mubr.bf16.mxu0 0
      %1063 = vmatmul.mubr.bf16.gmra.mrb[0].mxu0 %v1025
      %v1064 = vpop.f32.mrb[0].mxu0
      %v1065 = vadd.f32 %v367, %v1064
      %v1066 = vpop.f32.mrb[0].mxu0
      %v1067 = vpop.f32.mrb[0].mxu0
      %v1068 = vpop.f32.mrb[0].mxu0
      %1069 = vdwg.mxu0
      %1070 = vrot.lane.b32.xlu0 %v480, 112
      %v1071 = vpop.permute.xlu0 %1070
      %1072 = vrot.lane.b32.xlu0 %v480, 80
      %v1073 = vpop.permute.xlu0 %1072
      %v1075 = vsel %vm484, %v1071, 0
      %v1078 = vsel %vm484, %v1073, 0
      %1080 = vmatprep.subr.bf16.mxu0 0
      %1081 = vmatpush1.bf16.xpose.msra.mxu0 %v1078
      %1082 = vmatprep.subr.bf16.mxu0 0
      %1083 = vmatpush1.bf16.xpose.msra.mxu0 0
      %1084 = vmatprep.subr.bf16.mxu0 0
      %1085 = vmatpush1.bf16.xpose.msra.mxu0 0
      %1086 = vmatprep.subr.bf16.mxu0 0
      %1087 = vmatpush1.bf16.xpose.msra.mxu0 0
      %1088 = vmatprep.subr.bf16.mxu0 0
      %1089 = vmatpush1.bf16.xpose.msra.mxu0 0
      %1090 = vmatprep.subr.bf16.mxu0 0
      %1091 = vmatpush1.bf16.xpose.msra.mxu0 0
      %1092 = vmatprep.subr.bf16.mxu0 0
      %1093 = vmatpush1.bf16.xpose.msra.mxu0 0
      %1094 = vmatprep.subr.bf16.mxu0 0
      %1095 = vmatpush1.bf16.xpose.msra.mxu0 0
      %1096 = vmatprep.subr.bf16.mxu0 0
      %1097 = vmatpush1.bf16.xpose.msra.mxu0 0
      %1098 = vmatprep.subr.bf16.mxu0 0
      %1099 = vmatpush1.bf16.xpose.msra.mxu0 0
      %1100 = vmatprep.subr.bf16.mxu0 0
      %1101 = vmatpush1.bf16.xpose.msra.mxu0 0
      %1102 = vmatprep.subr.bf16.mxu0 0
      %1103 = vmatpush1.bf16.xpose.msra.mxu0 0
      %1104 = vmatprep.subr.bf16.mxu0 0
      %1105 = vmatpush1.bf16.xpose.msra.mxu0 0
      %1106 = vmatprep.subr.bf16.mxu0 0
      %1107 = vmatpush1.bf16.xpose.msra.mxu0 0
      %1108 = vmatprep.subr.bf16.mxu0 0
      %1109 = vmatpush1.bf16.xpose.msra.mxu0 0
      %1110 = vmatprep.subr.bf16.mxu0 0
      %1111 = vmatpush1.bf16.xpose.msra.mxu0 0
      %1112 = vmatprep.mubr.bf16.mxu0 0
      %1113 = vmatmul.mubr.bf16.gmra.mrb[0].mxu0 %v1075
      %v1114 = vpop.f32.mrb[0].mxu0
      %v1115 = vadd.f32 %v371, %v1114
      %v1116 = vpop.f32.mrb[0].mxu0
      %v1117 = vpop.f32.mrb[0].mxu0
      %v1118 = vpop.f32.mrb[0].mxu0
      %1119 = vdwg.mxu0
      %v1120 = vsel %vm678, %v965, -inf
      %1121 = vmax.xlane.f32.xlu0 %v1120
      %v1122 = vpop.xlane.xlu0 %1121
      %v1123 = vsel %vm678, %v1015, -inf
      %1124 = vmax.xlane.f32.xlu0 %v1123
      %v1125 = vpop.xlane.xlu0 %1124
      %v1126 = vsel %vm678, %v1065, -inf
      %1127 = vmax.xlane.f32.xlu0 %v1126
      %v1128 = vpop.xlane.xlu0 %1127
      %v1129 = vsel %vm678, %v1115, -inf
      %1130 = vmax.xlane.f32.xlu0 %v1129
      %v1131 = vpop.xlane.xlu0 %1130
      %v1132 = vsub.f32 %v965, %v1122
      %v1133 = vsub.f32 %v1015, %v1125
      %v1134 = vsub.f32 %v1065, %v1128
      %v1135 = vsub.f32 %v1115, %v1131
      %v1136 = vmul.f32 %v1132, 1.442695
      %v1137 = vpow.pop %v1136
      %v1138 = vmul.f32 %v1133, 1.442695
      %v1139 = vpow.pop %v1138
      %v1140 = vmul.f32 %v1134, 1.442695
      %v1141 = vpow.pop %v1140
      %v1142 = vmul.f32 %v1135, 1.442695
      %v1143 = vpow.pop %v1142
      %v1144 = vsel %vm678, %v1137, 0.0
      %1145 = vadd.xlane.f32.xlu0 %v1144
      %v1146 = vpop.xlane.xlu0 %1145
      %v1147 = vsel %vm678, %v1139, 0.0
      %1148 = vadd.xlane.f32.xlu0 %v1147
      %v1149 = vpop.xlane.xlu0 %1148
      %v1150 = vsel %vm678, %v1141, 0.0
      %1151 = vadd.xlane.f32.xlu0 %v1150
      %v1152 = vpop.xlane.xlu0 %1151
      %v1153 = vsel %vm678, %v1143, 0.0
      %1154 = vadd.xlane.f32.xlu0 %v1153
      %v1155 = vpop.xlane.xlu0 %1154
      %v1156 = vrcp.pop %v1146
      %v1157 = vrcp.pop %v1149
      %v1158 = vrcp.pop %v1152
      %v1159 = vrcp.pop %v1155
      %v1160 = vmul.f32 %v1137, %v1156
      %v1161 = vmul.f32 %v1139, %v1157
      %v1162 = vmul.f32 %v1141, %v1158
      %v1163 = vmul.f32 %v1143, %v1159
      %v1164 = vpack.c.bf16 %v1160, %v1160
      %v1165 = vpack.c.bf16 %v1161, %v1161
      %v1166 = vpack.c.bf16 %v1162, %v1162
      %v1167 = vpack.c.bf16 %v1163, %v1163
      %1168 = vrot.lane.b32.xlu0 %v477, 48
      %v1169 = vpop.permute.xlu0 %1168
      %v1171 = vsel %vm678, %v1164, 0
      %v1174 = vsel %vm732, %v1169, 0
      %1176 = vmatprep.subr.bf16.mxu0 0
      %1177 = vmatpush1.bf16.msra.mxu0 %v1174
      %1178 = vmatprep.subr.bf16.mxu0 0
      %1179 = vmatpush1.bf16.msra.mxu0 0
      %1180 = vmatprep.subr.bf16.mxu0 0
      %1181 = vmatpush1.bf16.msra.mxu0 0
      %1182 = vmatprep.subr.bf16.mxu0 0
      %1183 = vmatpush1.bf16.msra.mxu0 0
      %1184 = vmatprep.subr.bf16.mxu0 0
      %1185 = vmatpush1.bf16.msra.mxu0 0
      %1186 = vmatprep.subr.bf16.mxu0 0
      %1187 = vmatpush1.bf16.msra.mxu0 0
      %1188 = vmatprep.subr.bf16.mxu0 0
      %1189 = vmatpush1.bf16.msra.mxu0 0
      %1190 = vmatprep.subr.bf16.mxu0 0
      %1191 = vmatpush1.bf16.msra.mxu0 0
      %1192 = vmatprep.subr.bf16.mxu0 0
      %1193 = vmatpush1.bf16.msra.mxu0 0
      %1194 = vmatprep.subr.bf16.mxu0 0
      %1195 = vmatpush1.bf16.msra.mxu0 0
      %1196 = vmatprep.subr.bf16.mxu0 0
      %1197 = vmatpush1.bf16.msra.mxu0 0
      %1198 = vmatprep.subr.bf16.mxu0 0
      %1199 = vmatpush1.bf16.msra.mxu0 0
      %1200 = vmatprep.subr.bf16.mxu0 0
      %1201 = vmatpush1.bf16.msra.mxu0 0
      %1202 = vmatprep.subr.bf16.mxu0 0
      %1203 = vmatpush1.bf16.msra.mxu0 0
      %1204 = vmatprep.subr.bf16.mxu0 0
      %1205 = vmatpush1.bf16.msra.mxu0 0
      %1206 = vmatprep.subr.bf16.mxu0 0
      %1207 = vmatpush1.bf16.msra.mxu0 0
      %1208 = vmatprep.mubr.bf16.mxu0 0
      %1209 = vmatmul.mubr.bf16.gmra.mrb[0].mxu0 %v1171
      %v1210 = vpop.f32.mrb[0].mxu0
      %v1211 = vadd.f32 0.0, %v1210
      %v1212 = vpop.f32.mrb[0].mxu0
      %v1213 = vpop.f32.mrb[0].mxu0
      %v1214 = vpop.f32.mrb[0].mxu0
      %1215 = vdwg.mxu0
      %1216 = vrot.lane.b32.xlu0 %v478, 48
      %v1217 = vpop.permute.xlu0 %1216
      %v1219 = vsel %vm678, %v1165, 0
      %v1222 = vsel %vm732, %v1217, 0
      %1224 = vmatprep.subr.bf16.mxu0 0
      %1225 = vmatpush1.bf16.msra.mxu0 %v1222
      %1226 = vmatprep.subr.bf16.mxu0 0
      %1227 = vmatpush1.bf16.msra.mxu0 0
      %1228 = vmatprep.subr.bf16.mxu0 0
      %1229 = vmatpush1.bf16.msra.mxu0 0
      %1230 = vmatprep.subr.bf16.mxu0 0
      %1231 = vmatpush1.bf16.msra.mxu0 0
      %1232 = vmatprep.subr.bf16.mxu0 0
      %1233 = vmatpush1.bf16.msra.mxu0 0
      %1234 = vmatprep.subr.bf16.mxu0 0
      %1235 = vmatpush1.bf16.msra.mxu0 0
      %1236 = vmatprep.subr.bf16.mxu0 0
      %1237 = vmatpush1.bf16.msra.mxu0 0
      %1238 = vmatprep.subr.bf16.mxu0 0
      %1239 = vmatpush1.bf16.msra.mxu0 0
      %1240 = vmatprep.subr.bf16.mxu0 0
      %1241 = vmatpush1.bf16.msra.mxu0 0
      %1242 = vmatprep.subr.bf16.mxu0 0
      %1243 = vmatpush1.bf16.msra.mxu0 0
      %1244 = vmatprep.subr.bf16.mxu0 0
      %1245 = vmatpush1.bf16.msra.mxu0 0
      %1246 = vmatprep.subr.bf16.mxu0 0
      %1247 = vmatpush1.bf16.msra.mxu0 0
      %1248 = vmatprep.subr.bf16.mxu0 0
      %1249 = vmatpush1.bf16.msra.mxu0 0
      %1250 = vmatprep.subr.bf16.mxu0 0
      %1251 = vmatpush1.bf16.msra.mxu0 0
      %1252 = vmatprep.subr.bf16.mxu0 0
      %1253 = vmatpush1.bf16.msra.mxu0 0
      %1254 = vmatprep.subr.bf16.mxu0 0
      %1255 = vmatpush1.bf16.msra.mxu0 0
      %1256 = vmatprep.mubr.bf16.mxu0 0
      %1257 = vmatmul.mubr.bf16.gmra.mrb[0].mxu0 %v1219
      %v1258 = vpop.f32.mrb[0].mxu0
      %v1259 = vadd.f32 0.0, %v1258
      %v1260 = vpop.f32.mrb[0].mxu0
      %v1261 = vpop.f32.mrb[0].mxu0
      %v1262 = vpop.f32.mrb[0].mxu0
      %1263 = vdwg.mxu0
      %1264 = vrot.lane.b32.xlu0 %v479, 48
      %v1265 = vpop.permute.xlu0 %1264
      %v1267 = vsel %vm678, %v1166, 0
      %v1270 = vsel %vm732, %v1265, 0
      %1272 = vmatprep.subr.bf16.mxu0 0
      %1273 = vmatpush1.bf16.msra.mxu0 %v1270
      %1274 = vmatprep.subr.bf16.mxu0 0
      %1275 = vmatpush1.bf16.msra.mxu0 0
      %1276 = vmatprep.subr.bf16.mxu0 0
      %1277 = vmatpush1.bf16.msra.mxu0 0
      %1278 = vmatprep.subr.bf16.mxu0 0
      %1279 = vmatpush1.bf16.msra.mxu0 0
      %1280 = vmatprep.subr.bf16.mxu0 0
      %1281 = vmatpush1.bf16.msra.mxu0 0
      %1282 = vmatprep.subr.bf16.mxu0 0
      %1283 = vmatpush1.bf16.msra.mxu0 0
      %1284 = vmatprep.subr.bf16.mxu0 0
      %1285 = vmatpush1.bf16.msra.mxu0 0
      %1286 = vmatprep.subr.bf16.mxu0 0
      %1287 = vmatpush1.bf16.msra.mxu0 0
      %1288 = vmatprep.subr.bf16.mxu0 0
      %1289 = vmatpush1.bf16.msra.mxu0 0
      %1290 = vmatprep.subr.bf16.mxu0 0
      %1291 = vmatpush1.bf16.msra.mxu0 0
      %1292 = vmatprep.subr.bf16.mxu0 0
      %1293 = vmatpush1.bf16.msra.mxu0 0
      %1294 = vmatprep.subr.bf16.mxu0 0
      %1295 = vmatpush1.bf16.msra.mxu0 0
      %1296 = vmatprep.subr.bf16.mxu0 0
      %1297 = vmatpush1.bf16.msra.mxu0 0
      %1298 = vmatprep.subr.bf16.mxu0 0
      %1299 = vmatpush1.bf16.msra.mxu0 0
      %1300 = vmatprep.subr.bf16.mxu0 0
      %1301 = vmatpush1.bf16.msra.mxu0 0
      %1302 = vmatprep.subr.bf16.mxu0 0
      %1303 = vmatpush1.bf16.msra.mxu0 0
      %1304 = vmatprep.mubr.bf16.mxu0 0
      %1305 = vmatmul.mubr.bf16.gmra.mrb[0].mxu0 %v1267
      %v1306 = vpop.f32.mrb[0].mxu0
      %v1307 = vadd.f32 0.0, %v1306
      %v1308 = vpop.f32.mrb[0].mxu0
      %v1309 = vpop.f32.mrb[0].mxu0
      %v1310 = vpop.f32.mrb[0].mxu0
      %1311 = vdwg.mxu0
      %1312 = vrot.lane.b32.xlu0 %v480, 48
      %v1313 = vpop.permute.xlu0 %1312
      %v1315 = vsel %vm678, %v1167, 0
      %v1318 = vsel %vm732, %v1313, 0
      %1320 = vmatprep.subr.bf16.mxu0 0
      %1321 = vmatpush1.bf16.msra.mxu0 %v1318
      %1322 = vmatprep.subr.bf16.mxu0 0
      %1323 = vmatpush1.bf16.msra.mxu0 0
      %1324 = vmatprep.subr.bf16.mxu0 0
      %1325 = vmatpush1.bf16.msra.mxu0 0
      %1326 = vmatprep.subr.bf16.mxu0 0
      %1327 = vmatpush1.bf16.msra.mxu0 0
      %1328 = vmatprep.subr.bf16.mxu0 0
      %1329 = vmatpush1.bf16.msra.mxu0 0
      %1330 = vmatprep.subr.bf16.mxu0 0
      %1331 = vmatpush1.bf16.msra.mxu0 0
      %1332 = vmatprep.subr.bf16.mxu0 0
      %1333 = vmatpush1.bf16.msra.mxu0 0
      %1334 = vmatprep.subr.bf16.mxu0 0
      %1335 = vmatpush1.bf16.msra.mxu0 0
      %1336 = vmatprep.subr.bf16.mxu0 0
      %1337 = vmatpush1.bf16.msra.mxu0 0
      %1338 = vmatprep.subr.bf16.mxu0 0
      %1339 = vmatpush1.bf16.msra.mxu0 0
      %1340 = vmatprep.subr.bf16.mxu0 0
      %1341 = vmatpush1.bf16.msra.mxu0 0
      %1342 = vmatprep.subr.bf16.mxu0 0
      %1343 = vmatpush1.bf16.msra.mxu0 0
      %1344 = vmatprep.subr.bf16.mxu0 0
      %1345 = vmatpush1.bf16.msra.mxu0 0
      %1346 = vmatprep.subr.bf16.mxu0 0
      %1347 = vmatpush1.bf16.msra.mxu0 0
      %1348 = vmatprep.subr.bf16.mxu0 0
      %1349 = vmatpush1.bf16.msra.mxu0 0
      %1350 = vmatprep.subr.bf16.mxu0 0
      %1351 = vmatpush1.bf16.msra.mxu0 0
      %1352 = vmatprep.mubr.bf16.mxu0 0
      %1353 = vmatmul.mubr.bf16.gmra.mrb[0].mxu0 %v1315
      %v1354 = vpop.f32.mrb[0].mxu0
      %v1355 = vadd.f32 0.0, %v1354
      %v1356 = vpop.f32.mrb[0].mxu0
      %v1357 = vpop.f32.mrb[0].mxu0
      %v1358 = vpop.f32.mrb[0].mxu0
      %1359 = vdwg.mxu0
      %1364 = vrot.lane.b32.xlu0 %v1211, 16
      %v1365 = vpop.permute.xlu0 %1364
      %1366 = vrot.lane.b32.xlu0 %v1259, 16
      %v1367 = vpop.permute.xlu0 %1366
      %1368 = vrot.lane.b32.xlu0 %v1307, 16
      %v1369 = vpop.permute.xlu0 %1368
      %1370 = vrot.lane.b32.xlu0 %v1355, 16
      %v1371 = vpop.permute.xlu0 %1370
      %v1376 = vsel %vm484, %v771, %v1365
      %v1377 = vsel %vm484, %v819, %v1367
      %v1378 = vsel %vm484, %v867, %v1369
      %v1379 = vsel %vm484, %v915, %v1371
      %v1380 = vpack.c.bf16 %v1377, %v1376
      %v1381 = vpack.c.bf16 %v1379, %v1378
      %v1382 = vlaneseq
      %v1383 = vshrl.u32 %v1382, 7
      %v1384 = vsub.s32 0, %v1383
      %v1385 = vrot.slane %v397, %v1384
      %v1390 = vunpack.c.l.b16 %v380
      %v1391 = vunpack.c.l.b16 %v381
      %v1392 = vunpack.c.l.b16 %v382
      %v1393 = vunpack.c.l.b16 %v383
      %v1394 = vpack.c.b16 %v1391, %v1390
      %v1395 = vpack.c.b16 %v1393, %v1392
      %v1399 = vsel %vm258, %v1380, 0
      %v1402 = vsel %vm258, %v1381, 0
      %1404 = vmatprep.subr.bf16.mxu0 0
      %1405 = vmatpush1.bf16.msra.mxu0 %v1394
      %1406 = vmatprep.subr.bf16.mxu0 0
      %1407 = vmatpush1.bf16.msra.mxu0 %v1395
      %1408 = vmatprep.subr.bf16.mxu0 0
      %1409 = vmatpush1.bf16.msra.mxu0 0
      %1410 = vmatprep.subr.bf16.mxu0 0
      %1411 = vmatpush1.bf16.msra.mxu0 0
      %1412 = vmatprep.subr.bf16.mxu0 0
      %1413 = vmatpush1.bf16.msra.mxu0 0
      %1414 = vmatprep.subr.bf16.mxu0 0
      %1415 = vmatpush1.bf16.msra.mxu0 0
      %1416 = vmatprep.subr.bf16.mxu0 0
      %1417 = vmatpush1.bf16.msra.mxu0 0
      %1418 = vmatprep.subr.bf16.mxu0 0
      %1419 = vmatpush1.bf16.msra.mxu0 0
      %1420 = vmatprep.subr.bf16.mxu0 0
      %1421 = vmatpush1.bf16.msra.mxu0 0
      %1422 = vmatprep.subr.bf16.mxu0 0
      %1423 = vmatpush1.bf16.msra.mxu0 0
      %1424 = vmatprep.subr.bf16.mxu0 0
      %1425 = vmatpush1.bf16.msra.mxu0 0
      %1426 = vmatprep.subr.bf16.mxu0 0
      %1427 = vmatpush1.bf16.msra.mxu0 0
      %1428 = vmatprep.subr.bf16.mxu0 0
      %1429 = vmatpush1.bf16.msra.mxu0 0
      %1430 = vmatprep.subr.bf16.mxu0 0
      %1431 = vmatpush1.bf16.msra.mxu0 0
      %1432 = vmatprep.subr.bf16.mxu0 0
      %1433 = vmatpush1.bf16.msra.mxu0 0
      %1434 = vmatprep.subr.bf16.mxu0 0
      %1435 = vmatpush1.bf16.msra.mxu0 0
      %1436 = vmatprep.mubr.bf16.mxu0 0
      %1437 = vmatmul.mubr.bf16.gmra.mrb[0].mxu0 %v1399
      %v1438 = vpop.f32.mrb[0].mxu0
      %v1439 = vadd.f32 %v1385, %v1438
      %v1440 = vpop.f32.mrb[0].mxu0
      %v1441 = vpop.f32.mrb[0].mxu0
      %v1442 = vadd.f32 %v1385, %v1441
      %v1443 = vpop.f32.mrb[0].mxu0
      %1444 = vmatprep.mubr.bf16.mxu0 0
      %1445 = vmatmul.mubr.bf16.gmra.mrb[0].mxu0 %v1402
      %v1446 = vpop.f32.mrb[0].mxu0
      %v1447 = vadd.f32 %v1385, %v1446
      %v1448 = vpop.f32.mrb[0].mxu0
      %v1449 = vpop.f32.mrb[0].mxu0
      %v1450 = vadd.f32 %v1385, %v1449
      %v1451 = vpop.f32.mrb[0].mxu0
      %1452 = vdwg.mxu0
      %v1453 = vadd.f32 %v324, %v1439
      %v1454 = vadd.f32 %v325, %v1442
      %v1455 = vadd.f32 %v326, %v1447
      %v1456 = vadd.f32 %v327, %v1450
      %v1457 = vsel %vm258, %v1453, 0.0
      %1458 = vadd.xlane.f32.xlu0 %v1457
      %v1459 = vpop.xlane.xlu0 %1458
      %v1460 = vsel %vm258, %v1454, 0.0
      %1461 = vadd.xlane.f32.xlu0 %v1460
      %v1462 = vpop.xlane.xlu0 %1461
      %v1463 = vsel %vm258, %v1455, 0.0
      %1464 = vadd.xlane.f32.xlu0 %v1463
      %v1465 = vpop.xlane.xlu0 %1464
      %v1466 = vsel %vm258, %v1456, 0.0
      %1467 = vadd.xlane.f32.xlu0 %v1466
      %v1468 = vpop.xlane.xlu0 %1467
      %v1469 = vmul.f32 %v1459, %v271
      %v1470 = vmul.f32 %v1462, %v271
      %v1471 = vmul.f32 %v1465, %v271
      %v1472 = vmul.f32 %v1468, %v271
      %v1473 = vsub.f32 %v1453, %v1469
      %v1474 = vsub.f32 %v1454, %v1470
      %v1475 = vsub.f32 %v1455, %v1471
      %v1476 = vsub.f32 %v1456, %v1472
      %v1477 = vmul.f32 %v1473, %v1473
      %v1478 = vmul.f32 %v1474, %v1474
      %v1479 = vmul.f32 %v1475, %v1475
      %v1480 = vmul.f32 %v1476, %v1476
      %v1481 = vsel %vm258, %v1477, 0.0
      %1482 = vadd.xlane.f32.xlu0 %v1481
      %v1483 = vpop.xlane.xlu0 %1482
      %v1484 = vsel %vm258, %v1478, 0.0
      %1485 = vadd.xlane.f32.xlu0 %v1484
      %v1486 = vpop.xlane.xlu0 %1485
      %v1487 = vsel %vm258, %v1479, 0.0
      %1488 = vadd.xlane.f32.xlu0 %v1487
      %v1489 = vpop.xlane.xlu0 %1488
      %v1490 = vsel %vm258, %v1480, 0.0
      %1491 = vadd.xlane.f32.xlu0 %v1490
      %v1492 = vpop.xlane.xlu0 %1491
      %v1493 = vmul.f32 %v1483, %v271
      %v1494 = vmul.f32 %v1486, %v271
      %v1495 = vmul.f32 %v1489, %v271
      %v1496 = vmul.f32 %v1492, %v271
      %v1497 = vadd.f32 %v1493, 1e-12
      %v1498 = vadd.f32 %v1494, 1e-12
      %v1499 = vadd.f32 %v1495, 1e-12
      %v1500 = vadd.f32 %v1496, 1e-12
      %v1501 = vrsqrt.pop %v1497
      %v1502 = vrsqrt.pop %v1498
      %v1503 = vrsqrt.pop %v1499
      %v1504 = vrsqrt.pop %v1500
      %v1505 = vmul.f32 %v1473, %v1501
      %v1506 = vmul.f32 %v1474, %v1502
      %v1507 = vmul.f32 %v1475, %v1503
      %v1508 = vmul.f32 %v1476, %v1504
      %v1509 = vlaneseq
      %v1510 = vshrl.u32 %v1509, 7
      %v1511 = vsub.s32 0, %v1510
      %v1512 = vrot.slane %v398, %v1511
      %v1513 = vmul.f32 %v1505, %v1512
      %v1514 = vmul.f32 %v1506, %v1512
      %v1515 = vmul.f32 %v1507, %v1512
      %v1516 = vmul.f32 %v1508, %v1512
      %v1517 = vlaneseq
      %v1518 = vshrl.u32 %v1517, 7
      %v1519 = vsub.s32 0, %v1518
      %v1520 = vrot.slane %v399, %v1519
      %v1521 = vadd.f32 %v1513, %v1520
      %v1522 = vadd.f32 %v1514, %v1520
      %v1523 = vadd.f32 %v1515, %v1520
      %v1524 = vadd.f32 %v1516, %v1520
      %v1525 = vpack.c.bf16 %v1522, %v1521
      %v1526 = vpack.c.bf16 %v1524, %v1523
      %v1527 = vlaneseq
      %v1528 = vshrl.u32 %v1527, 7
      %v1529 = vsub.s32 0, %v1528
      %v1530 = vrot.slane %v400, %v1529
      %v1535 = vunpack.c.l.b16 %v384
      %v1536 = vunpack.c.l.b16 %v385
      %v1537 = vunpack.c.l.b16 %v386
      %v1538 = vunpack.c.l.b16 %v387
      %v1539 = vpack.c.b16 %v1536, %v1535
      %v1540 = vpack.c.b16 %v1538, %v1537
      %v1544 = vsel %vm258, %v1525, 0
      %v1547 = vsel %vm258, %v1526, 0
      %1549 = vmatprep.subr.bf16.mxu0 0
      %1550 = vmatpush1.bf16.msra.mxu0 %v1539
      %1551 = vmatprep.subr.bf16.mxu0 0
      %1552 = vmatpush1.bf16.msra.mxu0 %v1540
      %1553 = vmatprep.subr.bf16.mxu0 0
      %1554 = vmatpush1.bf16.msra.mxu0 0
      %1555 = vmatprep.subr.bf16.mxu0 0
      %1556 = vmatpush1.bf16.msra.mxu0 0
      %1557 = vmatprep.subr.bf16.mxu0 0
      %1558 = vmatpush1.bf16.msra.mxu0 0
      %1559 = vmatprep.subr.bf16.mxu0 0
      %1560 = vmatpush1.bf16.msra.mxu0 0
      %1561 = vmatprep.subr.bf16.mxu0 0
      %1562 = vmatpush1.bf16.msra.mxu0 0
      %1563 = vmatprep.subr.bf16.mxu0 0
      %1564 = vmatpush1.bf16.msra.mxu0 0
      %1565 = vmatprep.subr.bf16.mxu0 0
      %1566 = vmatpush1.bf16.msra.mxu0 0
      %1567 = vmatprep.subr.bf16.mxu0 0
      %1568 = vmatpush1.bf16.msra.mxu0 0
      %1569 = vmatprep.subr.bf16.mxu0 0
      %1570 = vmatpush1.bf16.msra.mxu0 0
      %1571 = vmatprep.subr.bf16.mxu0 0
      %1572 = vmatpush1.bf16.msra.mxu0 0
      %1573 = vmatprep.subr.bf16.mxu0 0
      %1574 = vmatpush1.bf16.msra.mxu0 0
      %1575 = vmatprep.subr.bf16.mxu0 0
      %1576 = vmatpush1.bf16.msra.mxu0 0
      %1577 = vmatprep.subr.bf16.mxu0 0
      %1578 = vmatpush1.bf16.msra.mxu0 0
      %1579 = vmatprep.subr.bf16.mxu0 0
      %1580 = vmatpush1.bf16.msra.mxu0 0
      %1581 = vmatprep.mubr.bf16.mxu0 0
      %1582 = vmatmul.mubr.bf16.gmra.mrb[0].mxu0 %v1544
      %v1583 = vpop.f32.mrb[0].mxu0
      %v1584 = vadd.f32 %v1530, %v1583
      %v1585 = vpop.f32.mrb[0].mxu0
      %v1586 = vpop.f32.mrb[0].mxu0
      %v1587 = vadd.f32 %v1530, %v1586
      %v1588 = vpop.f32.mrb[0].mxu0
      %1589 = vmatprep.mubr.bf16.mxu0 0
      %1590 = vmatmul.mubr.bf16.gmra.mrb[0].mxu0 %v1547
      %v1591 = vpop.f32.mrb[0].mxu0
      %v1592 = vadd.f32 %v1530, %v1591
      %v1593 = vpop.f32.mrb[0].mxu0
      %v1594 = vpop.f32.mrb[0].mxu0
      %v1595 = vadd.f32 %v1530, %v1594
      %v1596 = vpop.f32.mrb[0].mxu0
      %1597 = vdwg.mxu0
      %v1598 = vmul.f32 %v1584, %v1584
      %v1599 = vmul.f32 %v1587, %v1587
      %v1600 = vmul.f32 %v1592, %v1592
      %v1601 = vmul.f32 %v1595, %v1595
      %v1602 = vmul.f32 %v1584, %v1598
      %v1603 = vmul.f32 %v1587, %v1599
      %v1604 = vmul.f32 %v1592, %v1600
      %v1605 = vmul.f32 %v1595, %v1601
      %v1606 = vmul.f32 %v1602, 0.044715
      %v1607 = vmul.f32 %v1603, 0.044715
      %v1608 = vmul.f32 %v1604, 0.044715
      %v1609 = vmul.f32 %v1605, 0.044715
      %v1610 = vadd.f32 %v1584, %v1606
      %v1611 = vadd.f32 %v1587, %v1607
      %v1612 = vadd.f32 %v1592, %v1608
      %v1613 = vadd.f32 %v1595, %v1609
      %v1614 = vmul.f32 %v1610, 0.7978846
      %v1615 = vmul.f32 %v1611, 0.7978846
      %v1616 = vmul.f32 %v1612, 0.7978846
      %v1617 = vmul.f32 %v1613, 0.7978846
      %v1618 = vtanh.pop %v1614
      %v1619 = vtanh.pop %v1615
      %v1620 = vtanh.pop %v1616
      %v1621 = vtanh.pop %v1617
      %v1622 = vadd.f32 %v1618, 1.0
      %v1623 = vadd.f32 %v1619, 1.0
      %v1624 = vadd.f32 %v1620, 1.0
      %v1625 = vadd.f32 %v1621, 1.0
      %v1626 = vmul.f32 %v1622, 0.5
      %v1627 = vmul.f32 %v1623, 0.5
      %v1628 = vmul.f32 %v1624, 0.5
      %v1629 = vmul.f32 %v1625, 0.5
      %v1630 = vmul.f32 %v1584, %v1626
      %v1631 = vmul.f32 %v1587, %v1627
      %v1632 = vmul.f32 %v1592, %v1628
      %v1633 = vmul.f32 %v1595, %v1629
      %v1634 = vpack.c.bf16 %v1631, %v1630
      %v1635 = vpack.c.bf16 %v1633, %v1632
      %v1636 = vlaneseq
      %v1637 = vshrl.u32 %v1636, 7
      %v1638 = vsub.s32 0, %v1637
      %v1639 = vrot.slane %v401, %v1638
      %v1648 = vunpack.c.l.b16 %v388
      %v1649 = vunpack.c.l.b16 %v389
      %v1650 = vunpack.c.l.b16 %v390
      %v1651 = vunpack.c.l.b16 %v391
      %v1652 = vunpack.c.l.b16 %v392
      %v1653 = vunpack.c.l.b16 %v393
      %v1654 = vunpack.c.l.b16 %v394
      %v1655 = vunpack.c.l.b16 %v395
      %v1656 = vpack.c.b16 %v1649, %v1648
      %v1657 = vpack.c.b16 %v1651, %v1650
      %v1658 = vpack.c.b16 %v1653, %v1652
      %v1659 = vpack.c.b16 %v1655, %v1654
      %vm1664 = vcmask 523264
      %v1666 = vsel %vm1664, %v1634, 0
      %v1669 = vsel %vm1664, %v1635, 0
      %1671 = vmatprep.subr.bf16.mxu0 0
      %1672 = vmatpush1.bf16.msra.mxu0 %v1656
      %1673 = vmatprep.subr.bf16.mxu0 0
      %1674 = vmatpush1.bf16.msra.mxu0 %v1657
      %1675 = vmatprep.subr.bf16.mxu0 0
      %1676 = vmatpush1.bf16.msra.mxu0 %v1658
      %1677 = vmatprep.subr.bf16.mxu0 0
      %1678 = vmatpush1.bf16.msra.mxu0 %v1659
      %1679 = vmatprep.subr.bf16.mxu0 0
      %1680 = vmatpush1.bf16.msra.mxu0 0
      %1681 = vmatprep.subr.bf16.mxu0 0
      %1682 = vmatpush1.bf16.msra.mxu0 0
      %1683 = vmatprep.subr.bf16.mxu0 0
      %1684 = vmatpush1.bf16.msra.mxu0 0
      %1685 = vmatprep.subr.bf16.mxu0 0
      %1686 = vmatpush1.bf16.msra.mxu0 0
      %1687 = vmatprep.subr.bf16.mxu0 0
      %1688 = vmatpush1.bf16.msra.mxu0 0
      %1689 = vmatprep.subr.bf16.mxu0 0
      %1690 = vmatpush1.bf16.msra.mxu0 0
      %1691 = vmatprep.subr.bf16.mxu0 0
      %1692 = vmatpush1.bf16.msra.mxu0 0
      %1693 = vmatprep.subr.bf16.mxu0 0
      %1694 = vmatpush1.bf16.msra.mxu0 0
      %1695 = vmatprep.subr.bf16.mxu0 0
      %1696 = vmatpush1.bf16.msra.mxu0 0
      %1697 = vmatprep.subr.bf16.mxu0 0
      %1698 = vmatpush1.bf16.msra.mxu0 0
      %1699 = vmatprep.subr.bf16.mxu0 0
      %1700 = vmatpush1.bf16.msra.mxu0 0
      %1701 = vmatprep.subr.bf16.mxu0 0
      %1702 = vmatpush1.bf16.msra.mxu0 0
      %1703 = vmatprep.mubr.bf16.mxu0 0
      %1704 = vmatmul.mubr.bf16.gmra.mrb[0].mxu0 %v1666
      %v1705 = vpop.f32.mrb[0].mxu0
      %v1706 = vadd.f32 %v1639, %v1705
      %v1707 = vpop.f32.mrb[0].mxu0
      %v1708 = vpop.f32.mrb[0].mxu0
      %v1709 = vadd.f32 %v1639, %v1708
      %v1710 = vpop.f32.mrb[0].mxu0
      %1711 = vmatprep.mubr.bf16.mxu0 0
      %1712 = vmatmul.mubr.bf16.gmra.mrb[0].mxu0 %v1669
      %v1713 = vpop.f32.mrb[0].mxu0
      %v1714 = vadd.f32 %v1639, %v1713
      %v1715 = vpop.f32.mrb[0].mxu0
      %v1716 = vpop.f32.mrb[0].mxu0
      %v1717 = vadd.f32 %v1639, %v1716
      %v1718 = vpop.f32.mrb[0].mxu0
      %1719 = vdwg.mxu0
      %v1720 = vadd.f32 %v1521, %v1706
      %v1721 = vadd.f32 %v1522, %v1709
      %v1722 = vadd.f32 %v1523, %v1714
      %v1723 = vadd.f32 %v1524, %v1717
      %v1724 = vsel %vm258, %v1720, 0.0
      %1725 = vadd.xlane.f32.xlu0 %v1724
      %v1726 = vpop.xlane.xlu0 %1725
      %v1727 = vsel %vm258, %v1721, 0.0
      %1728 = vadd.xlane.f32.xlu0 %v1727
      %v1729 = vpop.xlane.xlu0 %1728
      %v1730 = vsel %vm258, %v1722, 0.0
      %1731 = vadd.xlane.f32.xlu0 %v1730
      %v1732 = vpop.xlane.xlu0 %1731
      %v1733 = vsel %vm258, %v1723, 0.0
      %1734 = vadd.xlane.f32.xlu0 %v1733
      %v1735 = vpop.xlane.xlu0 %1734
      %v1736 = vmul.f32 %v1726, %v271
      %v1737 = vmul.f32 %v1729, %v271
      %v1738 = vmul.f32 %v1732, %v271
      %v1739 = vmul.f32 %v1735, %v271
      %v1740 = vsub.f32 %v1720, %v1736
      %v1741 = vsub.f32 %v1721, %v1737
      %v1742 = vsub.f32 %v1722, %v1738
      %v1743 = vsub.f32 %v1723, %v1739
      %v1744 = vmul.f32 %v1740, %v1740
      %v1745 = vmul.f32 %v1741, %v1741
      %v1746 = vmul.f32 %v1742, %v1742
      %v1747 = vmul.f32 %v1743, %v1743
      %v1748 = vsel %vm258, %v1744, 0.0
      %1749 = vadd.xlane.f32.xlu0 %v1748
      %v1750 = vpop.xlane.xlu0 %1749
      %v1751 = vsel %vm258, %v1745, 0.0
      %1752 = vadd.xlane.f32.xlu0 %v1751
      %v1753 = vpop.xlane.xlu0 %1752
      %v1754 = vsel %vm258, %v1746, 0.0
      %1755 = vadd.xlane.f32.xlu0 %v1754
      %v1756 = vpop.xlane.xlu0 %1755
      %v1757 = vsel %vm258, %v1747, 0.0
      %1758 = vadd.xlane.f32.xlu0 %v1757
      %v1759 = vpop.xlane.xlu0 %1758
      %v1760 = vmul.f32 %v1750, %v271
      %v1761 = vmul.f32 %v1753, %v271
      %v1762 = vmul.f32 %v1756, %v271
      %v1763 = vmul.f32 %v1759, %v271
      %v1764 = vadd.f32 %v1760, 1e-12
      %v1765 = vadd.f32 %v1761, 1e-12
      %v1766 = vadd.f32 %v1762, 1e-12
      %v1767 = vadd.f32 %v1763, 1e-12
      %v1768 = vrsqrt.pop %v1764
      %v1769 = vrsqrt.pop %v1765
      %v1770 = vrsqrt.pop %v1766
      %v1771 = vrsqrt.pop %v1767
      %v1772 = vmul.f32 %v1740, %v1768
      %v1773 = vmul.f32 %v1741, %v1769
      %v1774 = vmul.f32 %v1742, %v1770
      %v1775 = vmul.f32 %v1743, %v1771
      %v1776 = vlaneseq
      %v1777 = vshrl.u32 %v1776, 7
      %v1778 = vsub.s32 0, %v1777
      %v1779 = vrot.slane %v402, %v1778
      %v1780 = vmul.f32 %v1772, %v1779
      %v1781 = vmul.f32 %v1773, %v1779
      %v1782 = vmul.f32 %v1774, %v1779
      %v1783 = vmul.f32 %v1775, %v1779
      %v1784 = vlaneseq
      %v1785 = vshrl.u32 %v1784, 7
      %v1786 = vsub.s32 0, %v1785
      %v1787 = vrot.slane %v403, %v1786
      %v1788 = vadd.f32 %v1780, %v1787
      %v1789 = vadd.f32 %v1781, %v1787
      %v1790 = vadd.f32 %v1782, %v1787
      %v1791 = vadd.f32 %v1783, %v1787
      %v1792 = vld [vmem:[%s242 + $0x50] sm:$0xf]
      %v1793 = vld [vmem:[%s242 + $0x54] sm:$0xf]
      %v1794 = vld [vmem:[%s242 + $0x58] sm:$0xf]
      %v1795 = vld [vmem:[%s242 + $0x5c] sm:$0xf]
      %v1796 = vld [vmem:[%s242 + $0x60] sm:$0xf]
      %v1797 = vld [vmem:[%s242 + $0x64] sm:$0xf]
      %v1798 = vld [vmem:[%s242 + $0x68] sm:$0xf]
      %v1799 = vld [vmem:[%s242 + $0x6c] sm:$0xf]
      %v1800 = vld [vmem:[%s242 + $0x70] sm:$0xf]
      %v1801 = vld [vmem:[%s242 + $0x74] sm:$0xf]
      %v1802 = vld [vmem:[%s242 + $0x78] sm:$0xf]
      %v1803 = vld [vmem:[%s242 + $0x7c] sm:$0xf]
      %v1804 = vld [vmem:[%s242 + $0x80] sm:$0xf]
      %v1805 = vld [vmem:[%s242 + $0x84] sm:$0xf]
      %v1806 = vld [vmem:[%s242 + $0x88] sm:$0xf]
      %v1807 = vld [vmem:[%s242 + $0x8c] sm:$0xf]
      %v1808 = vld [vmem:[%s242 + $0x90] sm:$0xf]
      %v1809 = vld [vmem:[%s242 + $0x94] sm:$0xf]
      %v1810 = vld [vmem:[%s242 + $0x98] sm:$0xf]
      %v1811 = vld [vmem:[%s242 + $0x9c] sm:$0xf]
      %v1812 = vld [vmem:[%s247 + $0xa] sm:$0x1]
      %v1813 = vld [vmem:[%s247 + $0xb] sm:$0x1]
      %v1814 = vld [vmem:[%s247 + $0xc] sm:$0x1]
      %v1815 = vld [vmem:[%s247 + $0xd] sm:$0x1]
      %v1816 = vld [vmem:[%s247 + $0xe] sm:$0x1]
      %v1817 = vld [vmem:[%s247 + $0xf] sm:$0x1]
      %v1818 = vld [vmem:[%s247 + $0x10] sm:$0x1]
      %v1819 = vld [vmem:[%s247 + $0x11] sm:$0x1]
      %v1820 = vpack.c.bf16 %v1789, %v1788
      %v1821 = vpack.c.bf16 %v1791, %v1790
      %v1822 = vlaneseq
      %v1823 = vshrl.u32 %v1822, 7
      %v1824 = vsub.s32 0, %v1823
      %v1825 = vrot.slane %v1812, %v1824
      %v1830 = vunpack.c.l.b16 %v1792
      %v1831 = vunpack.c.l.b16 %v1793
      %v1832 = vunpack.c.l.b16 %v1794
      %v1833 = vunpack.c.l.b16 %v1795
      %v1834 = vpack.c.b16 %v1831, %v1830
      %v1835 = vpack.c.b16 %v1833, %v1832
      %v1839 = vsel %vm258, %v1820, 0
      %v1842 = vsel %vm258, %v1821, 0
      %1844 = vmatprep.subr.bf16.mxu0 0
      %1845 = vmatpush1.bf16.msra.mxu0 %v1834
      %1846 = vmatprep.subr.bf16.mxu0 0
      %1847 = vmatpush1.bf16.msra.mxu0 %v1835
      %1848 = vmatprep.subr.bf16.mxu0 0
      %1849 = vmatpush1.bf16.msra.mxu0 0
      %1850 = vmatprep.subr.bf16.mxu0 0
      %1851 = vmatpush1.bf16.msra.mxu0 0
      %1852 = vmatprep.subr.bf16.mxu0 0
      %1853 = vmatpush1.bf16.msra.mxu0 0
      %1854 = vmatprep.subr.bf16.mxu0 0
      %1855 = vmatpush1.bf16.msra.mxu0 0
      %1856 = vmatprep.subr.bf16.mxu0 0
      %1857 = vmatpush1.bf16.msra.mxu0 0
      %1858 = vmatprep.subr.bf16.mxu0 0
      %1859 = vmatpush1.bf16.msra.mxu0 0
      %1860 = vmatprep.subr.bf16.mxu0 0
      %1861 = vmatpush1.bf16.msra.mxu0 0
      %1862 = vmatprep.subr.bf16.mxu0 0
      %1863 = vmatpush1.bf16.msra.mxu0 0
      %1864 = vmatprep.subr.bf16.mxu0 0
      %1865 = vmatpush1.bf16.msra.mxu0 0
      %1866 = vmatprep.subr.bf16.mxu0 0
      %1867 = vmatpush1.bf16.msra.mxu0 0
      %1868 = vmatprep.subr.bf16.mxu0 0
      %1869 = vmatpush1.bf16.msra.mxu0 0
      %1870 = vmatprep.subr.bf16.mxu0 0
      %1871 = vmatpush1.bf16.msra.mxu0 0
      %1872 = vmatprep.subr.bf16.mxu0 0
      %1873 = vmatpush1.bf16.msra.mxu0 0
      %1874 = vmatprep.subr.bf16.mxu0 0
      %1875 = vmatpush1.bf16.msra.mxu0 0
      %1876 = vmatprep.mubr.bf16.mxu0 0
      %1877 = vmatmul.mubr.bf16.gmra.mrb[0].mxu0 %v1839
      %v1878 = vpop.f32.mrb[0].mxu0
      %v1879 = vadd.f32 %v1825, %v1878
      %v1880 = vpop.f32.mrb[0].mxu0
      %v1881 = vpop.f32.mrb[0].mxu0
      %v1882 = vadd.f32 %v1825, %v1881
      %v1883 = vpop.f32.mrb[0].mxu0
      %1884 = vmatprep.mubr.bf16.mxu0 0
      %1885 = vmatmul.mubr.bf16.gmra.mrb[0].mxu0 %v1842
      %v1886 = vpop.f32.mrb[0].mxu0
      %v1887 = vadd.f32 %v1825, %v1886
      %v1888 = vpop.f32.mrb[0].mxu0
      %v1889 = vpop.f32.mrb[0].mxu0
      %v1890 = vadd.f32 %v1825, %v1889
      %v1891 = vpop.f32.mrb[0].mxu0
      %1892 = vdwg.mxu0
      %v1893 = vpack.c.bf16 %v1879, %v1879
      %v1894 = vpack.c.bf16 %v1882, %v1882
      %v1895 = vpack.c.bf16 %v1887, %v1887
      %v1896 = vpack.c.bf16 %v1890, %v1890
      %1898 = vrot.lane.b32.xlu0 %v1893, 96
      %v1899 = vpop.permute.xlu0 %1898
      %v1901 = vsel %vm484, %v1893, 0
      %v1904 = vsel %vm484, %v1899, 0
      %1906 = vmatprep.subr.bf16.mxu0 0
      %1907 = vmatpush1.bf16.xpose.msra.mxu0 %v1904
      %1908 = vmatprep.subr.bf16.mxu0 0
      %1909 = vmatpush1.bf16.xpose.msra.mxu0 0
      %1910 = vmatprep.subr.bf16.mxu0 0
      %1911 = vmatpush1.bf16.xpose.msra.mxu0 0
      %1912 = vmatprep.subr.bf16.mxu0 0
      %1913 = vmatpush1.bf16.xpose.msra.mxu0 0
      %1914 = vmatprep.subr.bf16.mxu0 0
      %1915 = vmatpush1.bf16.xpose.msra.mxu0 0
      %1916 = vmatprep.subr.bf16.mxu0 0
      %1917 = vmatpush1.bf16.xpose.msra.mxu0 0
      %1918 = vmatprep.subr.bf16.mxu0 0
      %1919 = vmatpush1.bf16.xpose.msra.mxu0 0
      %1920 = vmatprep.subr.bf16.mxu0 0
      %1921 = vmatpush1.bf16.xpose.msra.mxu0 0
      %1922 = vmatprep.subr.bf16.mxu0 0
      %1923 = vmatpush1.bf16.xpose.msra.mxu0 0
      %1924 = vmatprep.subr.bf16.mxu0 0
      %1925 = vmatpush1.bf16.xpose.msra.mxu0 0
      %1926 = vmatprep.subr.bf16.mxu0 0
      %1927 = vmatpush1.bf16.xpose.msra.mxu0 0
      %1928 = vmatprep.subr.bf16.mxu0 0
      %1929 = vmatpush1.bf16.xpose.msra.mxu0 0
      %1930 = vmatprep.subr.bf16.mxu0 0
      %1931 = vmatpush1.bf16.xpose.msra.mxu0 0
      %1932 = vmatprep.subr.bf16.mxu0 0
      %1933 = vmatpush1.bf16.xpose.msra.mxu0 0
      %1934 = vmatprep.subr.bf16.mxu0 0
      %1935 = vmatpush1.bf16.xpose.msra.mxu0 0
      %1936 = vmatprep.subr.bf16.mxu0 0
      %1937 = vmatpush1.bf16.xpose.msra.mxu0 0
      %1938 = vmatprep.mubr.bf16.mxu0 0
      %1939 = vmatmul.mubr.bf16.gmra.mrb[0].mxu0 %v1901
      %v1940 = vpop.f32.mrb[0].mxu0
      %v1941 = vadd.f32 %v359, %v1940
      %v1942 = vpop.f32.mrb[0].mxu0
      %v1943 = vpop.f32.mrb[0].mxu0
      %v1944 = vpop.f32.mrb[0].mxu0
      %1945 = vdwg.mxu0
      %1947 = vrot.lane.b32.xlu0 %v1894, 96
      %v1948 = vpop.permute.xlu0 %1947
      %v1950 = vsel %vm484, %v1894, 0
      %v1953 = vsel %vm484, %v1948, 0
      %1955 = vmatprep.subr.bf16.mxu0 0
      %1956 = vmatpush1.bf16.xpose.msra.mxu0 %v1953
      %1957 = vmatprep.subr.bf16.mxu0 0
      %1958 = vmatpush1.bf16.xpose.msra.mxu0 0
      %1959 = vmatprep.subr.bf16.mxu0 0
      %1960 = vmatpush1.bf16.xpose.msra.mxu0 0
      %1961 = vmatprep.subr.bf16.mxu0 0
      %1962 = vmatpush1.bf16.xpose.msra.mxu0 0
      %1963 = vmatprep.subr.bf16.mxu0 0
      %1964 = vmatpush1.bf16.xpose.msra.mxu0 0
      %1965 = vmatprep.subr.bf16.mxu0 0
      %1966 = vmatpush1.bf16.xpose.msra.mxu0 0
      %1967 = vmatprep.subr.bf16.mxu0 0
      %1968 = vmatpush1.bf16.xpose.msra.mxu0 0
      %1969 = vmatprep.subr.bf16.mxu0 0
      %1970 = vmatpush1.bf16.xpose.msra.mxu0 0
      %1971 = vmatprep.subr.bf16.mxu0 0
      %1972 = vmatpush1.bf16.xpose.msra.mxu0 0
      %1973 = vmatprep.subr.bf16.mxu0 0
      %1974 = vmatpush1.bf16.xpose.msra.mxu0 0
      %1975 = vmatprep.subr.bf16.mxu0 0
      %1976 = vmatpush1.bf16.xpose.msra.mxu0 0
      %1977 = vmatprep.subr.bf16.mxu0 0
      %1978 = vmatpush1.bf16.xpose.msra.mxu0 0
      %1979 = vmatprep.subr.bf16.mxu0 0
      %1980 = vmatpush1.bf16.xpose.msra.mxu0 0
      %1981 = vmatprep.subr.bf16.mxu0 0
      %1982 = vmatpush1.bf16.xpose.msra.mxu0 0
      %1983 = vmatprep.subr.bf16.mxu0 0
      %1984 = vmatpush1.bf16.xpose.msra.mxu0 0
      %1985 = vmatprep.subr.bf16.mxu0 0
      %1986 = vmatpush1.bf16.xpose.msra.mxu0 0
      %1987 = vmatprep.mubr.bf16.mxu0 0
      %1988 = vmatmul.mubr.bf16.gmra.mrb[0].mxu0 %v1950
      %v1989 = vpop.f32.mrb[0].mxu0
      %v1990 = vadd.f32 %v363, %v1989
      %v1991 = vpop.f32.mrb[0].mxu0
      %v1992 = vpop.f32.mrb[0].mxu0
      %v1993 = vpop.f32.mrb[0].mxu0
      %1994 = vdwg.mxu0
      %1996 = vrot.lane.b32.xlu0 %v1895, 96
      %v1997 = vpop.permute.xlu0 %1996
      %v1999 = vsel %vm484, %v1895, 0
      %v2002 = vsel %vm484, %v1997, 0
      %2004 = vmatprep.subr.bf16.mxu0 0
      %2005 = vmatpush1.bf16.xpose.msra.mxu0 %v2002
      %2006 = vmatprep.subr.bf16.mxu0 0
      %2007 = vmatpush1.bf16.xpose.msra.mxu0 0
      %2008 = vmatprep.subr.bf16.mxu0 0
      %2009 = vmatpush1.bf16.xpose.msra.mxu0 0
      %2010 = vmatprep.subr.bf16.mxu0 0
      %2011 = vmatpush1.bf16.xpose.msra.mxu0 0
      %2012 = vmatprep.subr.bf16.mxu0 0
      %2013 = vmatpush1.bf16.xpose.msra.mxu0 0
      %2014 = vmatprep.subr.bf16.mxu0 0
      %2015 = vmatpush1.bf16.xpose.msra.mxu0 0
      %2016 = vmatprep.subr.bf16.mxu0 0
      %2017 = vmatpush1.bf16.xpose.msra.mxu0 0
      %2018 = vmatprep.subr.bf16.mxu0 0
      %2019 = vmatpush1.bf16.xpose.msra.mxu0 0
      %2020 = vmatprep.subr.bf16.mxu0 0
      %2021 = vmatpush1.bf16.xpose.msra.mxu0 0
      %2022 = vmatprep.subr.bf16.mxu0 0
      %2023 = vmatpush1.bf16.xpose.msra.mxu0 0
      %2024 = vmatprep.subr.bf16.mxu0 0
      %2025 = vmatpush1.bf16.xpose.msra.mxu0 0
      %2026 = vmatprep.subr.bf16.mxu0 0
      %2027 = vmatpush1.bf16.xpose.msra.mxu0 0
      %2028 = vmatprep.subr.bf16.mxu0 0
      %2029 = vmatpush1.bf16.xpose.msra.mxu0 0
      %2030 = vmatprep.subr.bf16.mxu0 0
      %2031 = vmatpush1.bf16.xpose.msra.mxu0 0
      %2032 = vmatprep.subr.bf16.mxu0 0
      %2033 = vmatpush1.bf16.xpose.msra.mxu0 0
      %2034 = vmatprep.subr.bf16.mxu0 0
      %2035 = vmatpush1.bf16.xpose.msra.mxu0 0
      %2036 = vmatprep.mubr.bf16.mxu0 0
      %2037 = vmatmul.mubr.bf16.gmra.mrb[0].mxu0 %v1999
      %v2038 = vpop.f32.mrb[0].mxu0
      %v2039 = vadd.f32 %v367, %v2038
      %v2040 = vpop.f32.mrb[0].mxu0
      %v2041 = vpop.f32.mrb[0].mxu0
      %v2042 = vpop.f32.mrb[0].mxu0
      %2043 = vdwg.mxu0
      %2045 = vrot.lane.b32.xlu0 %v1896, 96
      %v2046 = vpop.permute.xlu0 %2045
      %v2048 = vsel %vm484, %v1896, 0
      %v2051 = vsel %vm484, %v2046, 0
      %2053 = vmatprep.subr.bf16.mxu0 0
      %2054 = vmatpush1.bf16.xpose.msra.mxu0 %v2051
      %2055 = vmatprep.subr.bf16.mxu0 0
      %2056 = vmatpush1.bf16.xpose.msra.mxu0 0
      %2057 = vmatprep.subr.bf16.mxu0 0
      %2058 = vmatpush1.bf16.xpose.msra.mxu0 0
      %2059 = vmatprep.subr.bf16.mxu0 0
      %2060 = vmatpush1.bf16.xpose.msra.mxu0 0
      %2061 = vmatprep.subr.bf16.mxu0 0
      %2062 = vmatpush1.bf16.xpose.msra.mxu0 0
      %2063 = vmatprep.subr.bf16.mxu0 0
      %2064 = vmatpush1.bf16.xpose.msra.mxu0 0
      %2065 = vmatprep.subr.bf16.mxu0 0
      %2066 = vmatpush1.bf16.xpose.msra.mxu0 0
      %2067 = vmatprep.subr.bf16.mxu0 0
      %2068 = vmatpush1.bf16.xpose.msra.mxu0 0
      %2069 = vmatprep.subr.bf16.mxu0 0
      %2070 = vmatpush1.bf16.xpose.msra.mxu0 0
      %2071 = vmatprep.subr.bf16.mxu0 0
      %2072 = vmatpush1.bf16.xpose.msra.mxu0 0
      %2073 = vmatprep.subr.bf16.mxu0 0
      %2074 = vmatpush1.bf16.xpose.msra.mxu0 0
      %2075 = vmatprep.subr.bf16.mxu0 0
      %2076 = vmatpush1.bf16.xpose.msra.mxu0 0
      %2077 = vmatprep.subr.bf16.mxu0 0
      %2078 = vmatpush1.bf16.xpose.msra.mxu0 0
      %2079 = vmatprep.subr.bf16.mxu0 0
      %2080 = vmatpush1.bf16.xpose.msra.mxu0 0
      %2081 = vmatprep.subr.bf16.mxu0 0
      %2082 = vmatpush1.bf16.xpose.msra.mxu0 0
      %2083 = vmatprep.subr.bf16.mxu0 0
      %2084 = vmatpush1.bf16.xpose.msra.mxu0 0
      %2085 = vmatprep.mubr.bf16.mxu0 0
      %2086 = vmatmul.mubr.bf16.gmra.mrb[0].mxu0 %v2048
      %v2087 = vpop.f32.mrb[0].mxu0
      %v2088 = vadd.f32 %v371, %v2087
      %v2089 = vpop.f32.mrb[0].mxu0
      %v2090 = vpop.f32.mrb[0].mxu0
      %v2091 = vpop.f32.mrb[0].mxu0
      %2092 = vdwg.mxu0
      %v2093 = vsel %vm678, %v1941, -inf
      %2094 = vmax.xlane.f32.xlu0 %v2093
      %v2095 = vpop.xlane.xlu0 %2094
      %v2096 = vsel %vm678, %v1990, -inf
      %2097 = vmax.xlane.f32.xlu0 %v2096
      %v2098 = vpop.xlane.xlu0 %2097
      %v2099 = vsel %vm678, %v2039, -inf
      %2100 = vmax.xlane.f32.xlu0 %v2099
      %v2101 = vpop.xlane.xlu0 %2100
      %v2102 = vsel %vm678, %v2088, -inf
      %2103 = vmax.xlane.f32.xlu0 %v2102
      %v2104 = vpop.xlane.xlu0 %2103
      %v2105 = vsub.f32 %v1941, %v2095
      %v2106 = vsub.f32 %v1990, %v2098
      %v2107 = vsub.f32 %v2039, %v2101
      %v2108 = vsub.f32 %v2088, %v2104
      %v2109 = vmul.f32 %v2105, 1.442695
      %v2110 = vpow.pop %v2109
      %v2111 = vmul.f32 %v2106, 1.442695
      %v2112 = vpow.pop %v2111
      %v2113 = vmul.f32 %v2107, 1.442695
      %v2114 = vpow.pop %v2113
      %v2115 = vmul.f32 %v2108, 1.442695
      %v2116 = vpow.pop %v2115
      %v2117 = vsel %vm678, %v2110, 0.0
      %2118 = vadd.xlane.f32.xlu0 %v2117
      %v2119 = vpop.xlane.xlu0 %2118
      %v2120 = vsel %vm678, %v2112, 0.0
      %2121 = vadd.xlane.f32.xlu0 %v2120
      %v2122 = vpop.xlane.xlu0 %2121
      %v2123 = vsel %vm678, %v2114, 0.0
      %2124 = vadd.xlane.f32.xlu0 %v2123
      %v2125 = vpop.xlane.xlu0 %2124
      %v2126 = vsel %vm678, %v2116, 0.0
      %2127 = vadd.xlane.f32.xlu0 %v2126
      %v2128 = vpop.xlane.xlu0 %2127
      %v2129 = vrcp.pop %v2119
      %v2130 = vrcp.pop %v2122
      %v2131 = vrcp.pop %v2125
      %v2132 = vrcp.pop %v2128
      %v2133 = vmul.f32 %v2110, %v2129
      %v2134 = vmul.f32 %v2112, %v2130
      %v2135 = vmul.f32 %v2114, %v2131
      %v2136 = vmul.f32 %v2116, %v2132
      %v2137 = vpack.c.bf16 %v2133, %v2133
      %v2138 = vpack.c.bf16 %v2134, %v2134
      %v2139 = vpack.c.bf16 %v2135, %v2135
      %v2140 = vpack.c.bf16 %v2136, %v2136
      %2141 = vrot.lane.b32.xlu0 %v1893, 64
      %v2142 = vpop.permute.xlu0 %2141
      %v2144 = vsel %vm678, %v2137, 0
      %v2147 = vsel %vm732, %v2142, 0
      %2149 = vmatprep.subr.bf16.mxu0 0
      %2150 = vmatpush1.bf16.msra.mxu0 %v2147
      %2151 = vmatprep.subr.bf16.mxu0 0
      %2152 = vmatpush1.bf16.msra.mxu0 0
      %2153 = vmatprep.subr.bf16.mxu0 0
      %2154 = vmatpush1.bf16.msra.mxu0 0
      %2155 = vmatprep.subr.bf16.mxu0 0
      %2156 = vmatpush1.bf16.msra.mxu0 0
      %2157 = vmatprep.subr.bf16.mxu0 0
      %2158 = vmatpush1.bf16.msra.mxu0 0
      %2159 = vmatprep.subr.bf16.mxu0 0
      %2160 = vmatpush1.bf16.msra.mxu0 0
      %2161 = vmatprep.subr.bf16.mxu0 0
      %2162 = vmatpush1.bf16.msra.mxu0 0
      %2163 = vmatprep.subr.bf16.mxu0 0
      %2164 = vmatpush1.bf16.msra.mxu0 0
      %2165 = vmatprep.subr.bf16.mxu0 0
      %2166 = vmatpush1.bf16.msra.mxu0 0
      %2167 = vmatprep.subr.bf16.mxu0 0
      %2168 = vmatpush1.bf16.msra.mxu0 0
      %2169 = vmatprep.subr.bf16.mxu0 0
      %2170 = vmatpush1.bf16.msra.mxu0 0
      %2171 = vmatprep.subr.bf16.mxu0 0
      %2172 = vmatpush1.bf16.msra.mxu0 0
      %2173 = vmatprep.subr.bf16.mxu0 0
      %2174 = vmatpush1.bf16.msra.mxu0 0
      %2175 = vmatprep.subr.bf16.mxu0 0
      %2176 = vmatpush1.bf16.msra.mxu0 0
      %2177 = vmatprep.subr.bf16.mxu0 0
      %2178 = vmatpush1.bf16.msra.mxu0 0
      %2179 = vmatprep.subr.bf16.mxu0 0
      %2180 = vmatpush1.bf16.msra.mxu0 0
      %2181 = vmatprep.mubr.bf16.mxu0 0
      %2182 = vmatmul.mubr.bf16.gmra.mrb[0].mxu0 %v2144
      %v2183 = vpop.f32.mrb[0].mxu0
      %v2184 = vadd.f32 0.0, %v2183
      %v2185 = vpop.f32.mrb[0].mxu0
      %v2186 = vpop.f32.mrb[0].mxu0
      %v2187 = vpop.f32.mrb[0].mxu0
      %2188 = vdwg.mxu0
      %2189 = vrot.lane.b32.xlu0 %v1894, 64
      %v2190 = vpop.permute.xlu0 %2189
      %v2192 = vsel %vm678, %v2138, 0
      %v2195 = vsel %vm732, %v2190, 0
      %2197 = vmatprep.subr.bf16.mxu0 0
      %2198 = vmatpush1.bf16.msra.mxu0 %v2195
      %2199 = vmatprep.subr.bf16.mxu0 0
      %2200 = vmatpush1.bf16.msra.mxu0 0
      %2201 = vmatprep.subr.bf16.mxu0 0
      %2202 = vmatpush1.bf16.msra.mxu0 0
      %2203 = vmatprep.subr.bf16.mxu0 0
      %2204 = vmatpush1.bf16.msra.mxu0 0
      %2205 = vmatprep.subr.bf16.mxu0 0
      %2206 = vmatpush1.bf16.msra.mxu0 0
      %2207 = vmatprep.subr.bf16.mxu0 0
      %2208 = vmatpush1.bf16.msra.mxu0 0
      %2209 = vmatprep.subr.bf16.mxu0 0
      %2210 = vmatpush1.bf16.msra.mxu0 0
      %2211 = vmatprep.subr.bf16.mxu0 0
      %2212 = vmatpush1.bf16.msra.mxu0 0
      %2213 = vmatprep.subr.bf16.mxu0 0
      %2214 = vmatpush1.bf16.msra.mxu0 0
      %2215 = vmatprep.subr.bf16.mxu0 0
      %2216 = vmatpush1.bf16.msra.mxu0 0
      %2217 = vmatprep.subr.bf16.mxu0 0
      %2218 = vmatpush1.bf16.msra.mxu0 0
      %2219 = vmatprep.subr.bf16.mxu0 0
      %2220 = vmatpush1.bf16.msra.mxu0 0
      %2221 = vmatprep.subr.bf16.mxu0 0
      %2222 = vmatpush1.bf16.msra.mxu0 0
      %2223 = vmatprep.subr.bf16.mxu0 0
      %2224 = vmatpush1.bf16.msra.mxu0 0
      %2225 = vmatprep.subr.bf16.mxu0 0
      %2226 = vmatpush1.bf16.msra.mxu0 0
      %2227 = vmatprep.subr.bf16.mxu0 0
      %2228 = vmatpush1.bf16.msra.mxu0 0
      %2229 = vmatprep.mubr.bf16.mxu0 0
      %2230 = vmatmul.mubr.bf16.gmra.mrb[0].mxu0 %v2192
      %v2231 = vpop.f32.mrb[0].mxu0
      %v2232 = vadd.f32 0.0, %v2231
      %v2233 = vpop.f32.mrb[0].mxu0
      %v2234 = vpop.f32.mrb[0].mxu0
      %v2235 = vpop.f32.mrb[0].mxu0
      %2236 = vdwg.mxu0
      %2237 = vrot.lane.b32.xlu0 %v1895, 64
      %v2238 = vpop.permute.xlu0 %2237
      %v2240 = vsel %vm678, %v2139, 0
      %v2243 = vsel %vm732, %v2238, 0
      %2245 = vmatprep.subr.bf16.mxu0 0
      %2246 = vmatpush1.bf16.msra.mxu0 %v2243
      %2247 = vmatprep.subr.bf16.mxu0 0
      %2248 = vmatpush1.bf16.msra.mxu0 0
      %2249 = vmatprep.subr.bf16.mxu0 0
      %2250 = vmatpush1.bf16.msra.mxu0 0
      %2251 = vmatprep.subr.bf16.mxu0 0
      %2252 = vmatpush1.bf16.msra.mxu0 0
      %2253 = vmatprep.subr.bf16.mxu0 0
      %2254 = vmatpush1.bf16.msra.mxu0 0
      %2255 = vmatprep.subr.bf16.mxu0 0
      %2256 = vmatpush1.bf16.msra.mxu0 0
      %2257 = vmatprep.subr.bf16.mxu0 0
      %2258 = vmatpush1.bf16.msra.mxu0 0
      %2259 = vmatprep.subr.bf16.mxu0 0
      %2260 = vmatpush1.bf16.msra.mxu0 0
      %2261 = vmatprep.subr.bf16.mxu0 0
      %2262 = vmatpush1.bf16.msra.mxu0 0
      %2263 = vmatprep.subr.bf16.mxu0 0
      %2264 = vmatpush1.bf16.msra.mxu0 0
      %2265 = vmatprep.subr.bf16.mxu0 0
      %2266 = vmatpush1.bf16.msra.mxu0 0
      %2267 = vmatprep.subr.bf16.mxu0 0
      %2268 = vmatpush1.bf16.msra.mxu0 0
      %2269 = vmatprep.subr.bf16.mxu0 0
      %2270 = vmatpush1.bf16.msra.mxu0 0
      %2271 = vmatprep.subr.bf16.mxu0 0
      %2272 = vmatpush1.bf16.msra.mxu0 0
      %2273 = vmatprep.subr.bf16.mxu0 0
      %2274 = vmatpush1.bf16.msra.mxu0 0
      %2275 = vmatprep.subr.bf16.mxu0 0
      %2276 = vmatpush1.bf16.msra.mxu0 0
      %2277 = vmatprep.mubr.bf16.mxu0 0
      %2278 = vmatmul.mubr.bf16.gmra.mrb[0].mxu0 %v2240
      %v2279 = vpop.f32.mrb[0].mxu0
      %v2280 = vadd.f32 0.0, %v2279
      %v2281 = vpop.f32.mrb[0].mxu0
      %v2282 = vpop.f32.mrb[0].mxu0
      %v2283 = vpop.f32.mrb[0].mxu0
      %2284 = vdwg.mxu0
      %2285 = vrot.lane.b32.xlu0 %v1896, 64
      %v2286 = vpop.permute.xlu0 %2285
      %v2288 = vsel %vm678, %v2140, 0
      %v2291 = vsel %vm732, %v2286, 0
      %2293 = vmatprep.subr.bf16.mxu0 0
      %2294 = vmatpush1.bf16.msra.mxu0 %v2291
      %2295 = vmatprep.subr.bf16.mxu0 0
      %2296 = vmatpush1.bf16.msra.mxu0 0
      %2297 = vmatprep.subr.bf16.mxu0 0
      %2298 = vmatpush1.bf16.msra.mxu0 0
      %2299 = vmatprep.subr.bf16.mxu0 0
      %2300 = vmatpush1.bf16.msra.mxu0 0
      %2301 = vmatprep.subr.bf16.mxu0 0
      %2302 = vmatpush1.bf16.msra.mxu0 0
      %2303 = vmatprep.subr.bf16.mxu0 0
      %2304 = vmatpush1.bf16.msra.mxu0 0
      %2305 = vmatprep.subr.bf16.mxu0 0
      %2306 = vmatpush1.bf16.msra.mxu0 0
      %2307 = vmatprep.subr.bf16.mxu0 0
      %2308 = vmatpush1.bf16.msra.mxu0 0
      %2309 = vmatprep.subr.bf16.mxu0 0
      %2310 = vmatpush1.bf16.msra.mxu0 0
      %2311 = vmatprep.subr.bf16.mxu0 0
      %2312 = vmatpush1.bf16.msra.mxu0 0
      %2313 = vmatprep.subr.bf16.mxu0 0
      %2314 = vmatpush1.bf16.msra.mxu0 0
      %2315 = vmatprep.subr.bf16.mxu0 0
      %2316 = vmatpush1.bf16.msra.mxu0 0
      %2317 = vmatprep.subr.bf16.mxu0 0
      %2318 = vmatpush1.bf16.msra.mxu0 0
      %2319 = vmatprep.subr.bf16.mxu0 0
      %2320 = vmatpush1.bf16.msra.mxu0 0
      %2321 = vmatprep.subr.bf16.mxu0 0
      %2322 = vmatpush1.bf16.msra.mxu0 0
      %2323 = vmatprep.subr.bf16.mxu0 0
      %2324 = vmatpush1.bf16.msra.mxu0 0
      %2325 = vmatprep.mubr.bf16.mxu0 0
      %2326 = vmatmul.mubr.bf16.gmra.mrb[0].mxu0 %v2288
      %v2327 = vpop.f32.mrb[0].mxu0
      %v2328 = vadd.f32 0.0, %v2327
      %v2329 = vpop.f32.mrb[0].mxu0
      %v2330 = vpop.f32.mrb[0].mxu0
      %v2331 = vpop.f32.mrb[0].mxu0
      %2332 = vdwg.mxu0
      %2333 = vrot.lane.b32.xlu0 %v1893, 112
      %v2334 = vpop.permute.xlu0 %2333
      %2335 = vrot.lane.b32.xlu0 %v1893, 80
      %v2336 = vpop.permute.xlu0 %2335
      %v2338 = vsel %vm484, %v2334, 0
      %v2341 = vsel %vm484, %v2336, 0
      %2343 = vmatprep.subr.bf16.mxu0 0
      %2344 = vmatpush1.bf16.xpose.msra.mxu0 %v2341
      %2345 = vmatprep.subr.bf16.mxu0 0
      %2346 = vmatpush1.bf16.xpose.msra.mxu0 0
      %2347 = vmatprep.subr.bf16.mxu0 0
      %2348 = vmatpush1.bf16.xpose.msra.mxu0 0
      %2349 = vmatprep.subr.bf16.mxu0 0
      %2350 = vmatpush1.bf16.xpose.msra.mxu0 0
      %2351 = vmatprep.subr.bf16.mxu0 0
      %2352 = vmatpush1.bf16.xpose.msra.mxu0 0
      %2353 = vmatprep.subr.bf16.mxu0 0
      %2354 = vmatpush1.bf16.xpose.msra.mxu0 0
      %2355 = vmatprep.subr.bf16.mxu0 0
      %2356 = vmatpush1.bf16.xpose.msra.mxu0 0
      %2357 = vmatprep.subr.bf16.mxu0 0
      %2358 = vmatpush1.bf16.xpose.msra.mxu0 0
      %2359 = vmatprep.subr.bf16.mxu0 0
      %2360 = vmatpush1.bf16.xpose.msra.mxu0 0
      %2361 = vmatprep.subr.bf16.mxu0 0
      %2362 = vmatpush1.bf16.xpose.msra.mxu0 0
      %2363 = vmatprep.subr.bf16.mxu0 0
      %2364 = vmatpush1.bf16.xpose.msra.mxu0 0
      %2365 = vmatprep.subr.bf16.mxu0 0
      %2366 = vmatpush1.bf16.xpose.msra.mxu0 0
      %2367 = vmatprep.subr.bf16.mxu0 0
      %2368 = vmatpush1.bf16.xpose.msra.mxu0 0
      %2369 = vmatprep.subr.bf16.mxu0 0
      %2370 = vmatpush1.bf16.xpose.msra.mxu0 0
      %2371 = vmatprep.subr.bf16.mxu0 0
      %2372 = vmatpush1.bf16.xpose.msra.mxu0 0
      %2373 = vmatprep.subr.bf16.mxu0 0
      %2374 = vmatpush1.bf16.xpose.msra.mxu0 0
      %2375 = vmatprep.mubr.bf16.mxu0 0
      %2376 = vmatmul.mubr.bf16.gmra.mrb[0].mxu0 %v2338
      %v2377 = vpop.f32.mrb[0].mxu0
      %v2378 = vadd.f32 %v359, %v2377
      %v2379 = vpop.f32.mrb[0].mxu0
      %v2380 = vpop.f32.mrb[0].mxu0
      %v2381 = vpop.f32.mrb[0].mxu0
      %2382 = vdwg.mxu0
      %2383 = vrot.lane.b32.xlu0 %v1894, 112
      %v2384 = vpop.permute.xlu0 %2383
      %2385 = vrot.lane.b32.xlu0 %v1894, 80
      %v2386 = vpop.permute.xlu0 %2385
      %v2388 = vsel %vm484, %v2384, 0
      %v2391 = vsel %vm484, %v2386, 0
      %2393 = vmatprep.subr.bf16.mxu0 0
      %2394 = vmatpush1.bf16.xpose.msra.mxu0 %v2391
      %2395 = vmatprep.subr.bf16.mxu0 0
      %2396 = vmatpush1.bf16.xpose.msra.mxu0 0
      %2397 = vmatprep.subr.bf16.mxu0 0
      %2398 = vmatpush1.bf16.xpose.msra.mxu0 0
      %2399 = vmatprep.subr.bf16.mxu0 0
      %2400 = vmatpush1.bf16.xpose.msra.mxu0 0
      %2401 = vmatprep.subr.bf16.mxu0 0
      %2402 = vmatpush1.bf16.xpose.msra.mxu0 0
      %2403 = vmatprep.subr.bf16.mxu0 0
      %2404 = vmatpush1.bf16.xpose.msra.mxu0 0
      %2405 = vmatprep.subr.bf16.mxu0 0
      %2406 = vmatpush1.bf16.xpose.msra.mxu0 0
      %2407 = vmatprep.subr.bf16.mxu0 0
      %2408 = vmatpush1.bf16.xpose.msra.mxu0 0
      %2409 = vmatprep.subr.bf16.mxu0 0
      %2410 = vmatpush1.bf16.xpose.msra.mxu0 0
      %2411 = vmatprep.subr.bf16.mxu0 0
      %2412 = vmatpush1.bf16.xpose.msra.mxu0 0
      %2413 = vmatprep.subr.bf16.mxu0 0
      %2414 = vmatpush1.bf16.xpose.msra.mxu0 0
      %2415 = vmatprep.subr.bf16.mxu0 0
      %2416 = vmatpush1.bf16.xpose.msra.mxu0 0
      %2417 = vmatprep.subr.bf16.mxu0 0
      %2418 = vmatpush1.bf16.xpose.msra.mxu0 0
      %2419 = vmatprep.subr.bf16.mxu0 0
      %2420 = vmatpush1.bf16.xpose.msra.mxu0 0
      %2421 = vmatprep.subr.bf16.mxu0 0
      %2422 = vmatpush1.bf16.xpose.msra.mxu0 0
      %2423 = vmatprep.subr.bf16.mxu0 0
      %2424 = vmatpush1.bf16.xpose.msra.mxu0 0
      %2425 = vmatprep.mubr.bf16.mxu0 0
      %2426 = vmatmul.mubr.bf16.gmra.mrb[0].mxu0 %v2388
      %v2427 = vpop.f32.mrb[0].mxu0
      %v2428 = vadd.f32 %v363, %v2427
      %v2429 = vpop.f32.mrb[0].mxu0
      %v2430 = vpop.f32.mrb[0].mxu0
      %v2431 = vpop.f32.mrb[0].mxu0
      %2432 = vdwg.mxu0
      %2433 = vrot.lane.b32.xlu0 %v1895, 112
      %v2434 = vpop.permute.xlu0 %2433
      %2435 = vrot.lane.b32.xlu0 %v1895, 80
      %v2436 = vpop.permute.xlu0 %2435
      %v2438 = vsel %vm484, %v2434, 0
      %v2441 = vsel %vm484, %v2436, 0
      %2443 = vmatprep.subr.bf16.mxu0 0
      %2444 = vmatpush1.bf16.xpose.msra.mxu0 %v2441
      %2445 = vmatprep.subr.bf16.mxu0 0
      %2446 = vmatpush1.bf16.xpose.msra.mxu0 0
      %2447 = vmatprep.subr.bf16.mxu0 0
      %2448 = vmatpush1.bf16.xpose.msra.mxu0 0
      %2449 = vmatprep.subr.bf16.mxu0 0
      %2450 = vmatpush1.bf16.xpose.msra.mxu0 0
      %2451 = vmatprep.subr.bf16.mxu0 0
      %2452 = vmatpush1.bf16.xpose.msra.mxu0 0
      %2453 = vmatprep.subr.bf16.mxu0 0
      %2454 = vmatpush1.bf16.xpose.msra.mxu0 0
      %2455 = vmatprep.subr.bf16.mxu0 0
      %2456 = vmatpush1.bf16.xpose.msra.mxu0 0
      %2457 = vmatprep.subr.bf16.mxu0 0
      %2458 = vmatpush1.bf16.xpose.msra.mxu0 0
      %2459 = vmatprep.subr.bf16.mxu0 0
      %2460 = vmatpush1.bf16.xpose.msra.mxu0 0
      %2461 = vmatprep.subr.bf16.mxu0 0
      %2462 = vmatpush1.bf16.xpose.msra.mxu0 0
      %2463 = vmatprep.subr.bf16.mxu0 0
      %2464 = vmatpush1.bf16.xpose.msra.mxu0 0
      %2465 = vmatprep.subr.bf16.mxu0 0
      %2466 = vmatpush1.bf16.xpose.msra.mxu0 0
      %2467 = vmatprep.subr.bf16.mxu0 0
      %2468 = vmatpush1.bf16.xpose.msra.mxu0 0
      %2469 = vmatprep.subr.bf16.mxu0 0
      %2470 = vmatpush1.bf16.xpose.msra.mxu0 0
      %2471 = vmatprep.subr.bf16.mxu0 0
      %2472 = vmatpush1.bf16.xpose.msra.mxu0 0
      %2473 = vmatprep.subr.bf16.mxu0 0
      %2474 = vmatpush1.bf16.xpose.msra.mxu0 0
      %2475 = vmatprep.mubr.bf16.mxu0 0
      %2476 = vmatmul.mubr.bf16.gmra.mrb[0].mxu0 %v2438
      %v2477 = vpop.f32.mrb[0].mxu0
      %v2478 = vadd.f32 %v367, %v2477
      %v2479 = vpop.f32.mrb[0].mxu0
      %v2480 = vpop.f32.mrb[0].mxu0
      %v2481 = vpop.f32.mrb[0].mxu0
      %2482 = vdwg.mxu0
      %2483 = vrot.lane.b32.xlu0 %v1896, 112
      %v2484 = vpop.permute.xlu0 %2483
      %2485 = vrot.lane.b32.xlu0 %v1896, 80
      %v2486 = vpop.permute.xlu0 %2485
      %v2488 = vsel %vm484, %v2484, 0
      %v2491 = vsel %vm484, %v2486, 0
      %2493 = vmatprep.subr.bf16.mxu0 0
      %2494 = vmatpush1.bf16.xpose.msra.mxu0 %v2491
      %2495 = vmatprep.subr.bf16.mxu0 0
      %2496 = vmatpush1.bf16.xpose.msra.mxu0 0
      %2497 = vmatprep.subr.bf16.mxu0 0
      %2498 = vmatpush1.bf16.xpose.msra.mxu0 0
      %2499 = vmatprep.subr.bf16.mxu0 0
      %2500 = vmatpush1.bf16.xpose.msra.mxu0 0
      %2501 = vmatprep.subr.bf16.mxu0 0
      %2502 = vmatpush1.bf16.xpose.msra.mxu0 0
      %2503 = vmatprep.subr.bf16.mxu0 0
      %2504 = vmatpush1.bf16.xpose.msra.mxu0 0
      %2505 = vmatprep.subr.bf16.mxu0 0
      %2506 = vmatpush1.bf16.xpose.msra.mxu0 0
      %2507 = vmatprep.subr.bf16.mxu0 0
      %2508 = vmatpush1.bf16.xpose.msra.mxu0 0
      %2509 = vmatprep.subr.bf16.mxu0 0
      %2510 = vmatpush1.bf16.xpose.msra.mxu0 0
      %2511 = vmatprep.subr.bf16.mxu0 0
      %2512 = vmatpush1.bf16.xpose.msra.mxu0 0
      %2513 = vmatprep.subr.bf16.mxu0 0
      %2514 = vmatpush1.bf16.xpose.msra.mxu0 0
      %2515 = vmatprep.subr.bf16.mxu0 0
      %2516 = vmatpush1.bf16.xpose.msra.mxu0 0
      %2517 = vmatprep.subr.bf16.mxu0 0
      %2518 = vmatpush1.bf16.xpose.msra.mxu0 0
      %2519 = vmatprep.subr.bf16.mxu0 0
      %2520 = vmatpush1.bf16.xpose.msra.mxu0 0
      %2521 = vmatprep.subr.bf16.mxu0 0
      %2522 = vmatpush1.bf16.xpose.msra.mxu0 0
      %2523 = vmatprep.subr.bf16.mxu0 0
      %2524 = vmatpush1.bf16.xpose.msra.mxu0 0
      %2525 = vmatprep.mubr.bf16.mxu0 0
      %2526 = vmatmul.mubr.bf16.gmra.mrb[0].mxu0 %v2488
      %v2527 = vpop.f32.mrb[0].mxu0
      %v2528 = vadd.f32 %v371, %v2527
      %v2529 = vpop.f32.mrb[0].mxu0
      %v2530 = vpop.f32.mrb[0].mxu0
      %v2531 = vpop.f32.mrb[0].mxu0
      %2532 = vdwg.mxu0
      %v2533 = vsel %vm678, %v2378, -inf
      %2534 = vmax.xlane.f32.xlu0 %v2533
      %v2535 = vpop.xlane.xlu0 %2534
      %v2536 = vsel %vm678, %v2428, -inf
      %2537 = vmax.xlane.f32.xlu0 %v2536
      %v2538 = vpop.xlane.xlu0 %2537
      %v2539 = vsel %vm678, %v2478, -inf
      %2540 = vmax.xlane.f32.xlu0 %v2539
      %v2541 = vpop.xlane.xlu0 %2540
      %v2542 = vsel %vm678, %v2528, -inf
      %2543 = vmax.xlane.f32.xlu0 %v2542
      %v2544 = vpop.xlane.xlu0 %2543
      %v2545 = vsub.f32 %v2378, %v2535
      %v2546 = vsub.f32 %v2428, %v2538
      %v2547 = vsub.f32 %v2478, %v2541
      %v2548 = vsub.f32 %v2528, %v2544
      %v2549 = vmul.f32 %v2545, 1.442695
      %v2550 = vpow.pop %v2549
      %v2551 = vmul.f32 %v2546, 1.442695
      %v2552 = vpow.pop %v2551
      %v2553 = vmul.f32 %v2547, 1.442695
      %v2554 = vpow.pop %v2553
      %v2555 = vmul.f32 %v2548, 1.442695
      %v2556 = vpow.pop %v2555
      %v2557 = vsel %vm678, %v2550, 0.0
      %2558 = vadd.xlane.f32.xlu0 %v2557
      %v2559 = vpop.xlane.xlu0 %2558
      %v2560 = vsel %vm678, %v2552, 0.0
      %2561 = vadd.xlane.f32.xlu0 %v2560
      %v2562 = vpop.xlane.xlu0 %2561
      %v2563 = vsel %vm678, %v2554, 0.0
      %2564 = vadd.xlane.f32.xlu0 %v2563
      %v2565 = vpop.xlane.xlu0 %2564
      %v2566 = vsel %vm678, %v2556, 0.0
      %2567 = vadd.xlane.f32.xlu0 %v2566
      %v2568 = vpop.xlane.xlu0 %2567
      %v2569 = vrcp.pop %v2559
      %v2570 = vrcp.pop %v2562
      %v2571 = vrcp.pop %v2565
      %v2572 = vrcp.pop %v2568
      %v2573 = vmul.f32 %v2550, %v2569
      %v2574 = vmul.f32 %v2552, %v2570
      %v2575 = vmul.f32 %v2554, %v2571
      %v2576 = vmul.f32 %v2556, %v2572
      %v2577 = vpack.c.bf16 %v2573, %v2573
      %v2578 = vpack.c.bf16 %v2574, %v2574
      %v2579 = vpack.c.bf16 %v2575, %v2575
      %v2580 = vpack.c.bf16 %v2576, %v2576
      %2581 = vrot.lane.b32.xlu0 %v1893, 48
      %v2582 = vpop.permute.xlu0 %2581
      %v2584 = vsel %vm678, %v2577, 0
      %v2587 = vsel %vm732, %v2582, 0
      %2589 = vmatprep.subr.bf16.mxu0 0
      %2590 = vmatpush1.bf16.msra.mxu0 %v2587
      %2591 = vmatprep.subr.bf16.mxu0 0
      %2592 = vmatpush1.bf16.msra.mxu0 0
      %2593 = vmatprep.subr.bf16.mxu0 0
      %2594 = vmatpush1.bf16.msra.mxu0 0
      %2595 = vmatprep.subr.bf16.mxu0 0
      %2596 = vmatpush1.bf16.msra.mxu0 0
      %2597 = vmatprep.subr.bf16.mxu0 0
      %2598 = vmatpush1.bf16.msra.mxu0 0
      %2599 = vmatprep.subr.bf16.mxu0 0
      %2600 = vmatpush1.bf16.msra.mxu0 0
      %2601 = vmatprep.subr.bf16.mxu0 0
      %2602 = vmatpush1.bf16.msra.mxu0 0
      %2603 = vmatprep.subr.bf16.mxu0 0
      %2604 = vmatpush1.bf16.msra.mxu0 0
      %2605 = vmatprep.subr.bf16.mxu0 0
      %2606 = vmatpush1.bf16.msra.mxu0 0
      %2607 = vmatprep.subr.bf16.mxu0 0
      %2608 = vmatpush1.bf16.msra.mxu0 0
      %2609 = vmatprep.subr.bf16.mxu0 0
      %2610 = vmatpush1.bf16.msra.mxu0 0
      %2611 = vmatprep.subr.bf16.mxu0 0
      %2612 = vmatpush1.bf16.msra.mxu0 0
      %2613 = vmatprep.subr.bf16.mxu0 0
      %2614 = vmatpush1.bf16.msra.mxu0 0
      %2615 = vmatprep.subr.bf16.mxu0 0
      %2616 = vmatpush1.bf16.msra.mxu0 0
      %2617 = vmatprep.subr.bf16.mxu0 0
      %2618 = vmatpush1.bf16.msra.mxu0 0
      %2619 = vmatprep.subr.bf16.mxu0 0
      %2620 = vmatpush1.bf16.msra.mxu0 0
      %2621 = vmatprep.mubr.bf16.mxu0 0
      %2622 = vmatmul.mubr.bf16.gmra.mrb[0].mxu0 %v2584
      %v2623 = vpop.f32.mrb[0].mxu0
      %v2624 = vadd.f32 0.0, %v2623
      %v2625 = vpop.f32.mrb[0].mxu0
      %v2626 = vpop.f32.mrb[0].mxu0
      %v2627 = vpop.f32.mrb[0].mxu0
      %2628 = vdwg.mxu0
      %2629 = vrot.lane.b32.xlu0 %v1894, 48
      %v2630 = vpop.permute.xlu0 %2629
      %v2632 = vsel %vm678, %v2578, 0
      %v2635 = vsel %vm732, %v2630, 0
      %2637 = vmatprep.subr.bf16.mxu0 0
      %2638 = vmatpush1.bf16.msra.mxu0 %v2635
      %2639 = vmatprep.subr.bf16.mxu0 0
      %2640 = vmatpush1.bf16.msra.mxu0 0
      %2641 = vmatprep.subr.bf16.mxu0 0
      %2642 = vmatpush1.bf16.msra.mxu0 0
      %2643 = vmatprep.subr.bf16.mxu0 0
      %2644 = vmatpush1.bf16.msra.mxu0 0
      %2645 = vmatprep.subr.bf16.mxu0 0
      %2646 = vmatpush1.bf16.msra.mxu0 0
      %2647 = vmatprep.subr.bf16.mxu0 0
      %2648 = vmatpush1.bf16.msra.mxu0 0
      %2649 = vmatprep.subr.bf16.mxu0 0
      %2650 = vmatpush1.bf16.msra.mxu0 0
      %2651 = vmatprep.subr.bf16.mxu0 0
      %2652 = vmatpush1.bf16.msra.mxu0 0
      %2653 = vmatprep.subr.bf16.mxu0 0
      %2654 = vmatpush1.bf16.msra.mxu0 0
      %2655 = vmatprep.subr.bf16.mxu0 0
      %2656 = vmatpush1.bf16.msra.mxu0 0
      %2657 = vmatprep.subr.bf16.mxu0 0
      %2658 = vmatpush1.bf16.msra.mxu0 0
      %2659 = vmatprep.subr.bf16.mxu0 0
      %2660 = vmatpush1.bf16.msra.mxu0 0
      %2661 = vmatprep.subr.bf16.mxu0 0
      %2662 = vmatpush1.bf16.msra.mxu0 0
      %2663 = vmatprep.subr.bf16.mxu0 0
      %2664 = vmatpush1.bf16.msra.mxu0 0
      %2665 = vmatprep.subr.bf16.mxu0 0
      %2666 = vmatpush1.bf16.msra.mxu0 0
      %2667 = vmatprep.subr.bf16.mxu0 0
      %2668 = vmatpush1.bf16.msra.mxu0 0
      %2669 = vmatprep.mubr.bf16.mxu0 0
      %2670 = vmatmul.mubr.bf16.gmra.mrb[0].mxu0 %v2632
      %v2671 = vpop.f32.mrb[0].mxu0
      %v2672 = vadd.f32 0.0, %v2671
      %v2673 = vpop.f32.mrb[0].mxu0
      %v2674 = vpop.f32.mrb[0].mxu0
      %v2675 = vpop.f32.mrb[0].mxu0
      %2676 = vdwg.mxu0
      %2677 = vrot.lane.b32.xlu0 %v1895, 48
      %v2678 = vpop.permute.xlu0 %2677
      %v2680 = vsel %vm678, %v2579, 0
      %v2683 = vsel %vm732, %v2678, 0
      %2685 = vmatprep.subr.bf16.mxu0 0
      %2686 = vmatpush1.bf16.msra.mxu0 %v2683
      %2687 = vmatprep.subr.bf16.mxu0 0
      %2688 = vmatpush1.bf16.msra.mxu0 0
      %2689 = vmatprep.subr.bf16.mxu0 0
      %2690 = vmatpush1.bf16.msra.mxu0 0
      %2691 = vmatprep.subr.bf16.mxu0 0
      %2692 = vmatpush1.bf16.msra.mxu0 0
      %2693 = vmatprep.subr.bf16.mxu0 0
      %2694 = vmatpush1.bf16.msra.mxu0 0
      %2695 = vmatprep.subr.bf16.mxu0 0
      %2696 = vmatpush1.bf16.msra.mxu0 0
      %2697 = vmatprep.subr.bf16.mxu0 0
      %2698 = vmatpush1.bf16.msra.mxu0 0
      %2699 = vmatprep.subr.bf16.mxu0 0
      %2700 = vmatpush1.bf16.msra.mxu0 0
      %2701 = vmatprep.subr.bf16.mxu0 0
      %2702 = vmatpush1.bf16.msra.mxu0 0
      %2703 = vmatprep.subr.bf16.mxu0 0
      %2704 = vmatpush1.bf16.msra.mxu0 0
      %2705 = vmatprep.subr.bf16.mxu0 0
      %2706 = vmatpush1.bf16.msra.mxu0 0
      %2707 = vmatprep.subr.bf16.mxu0 0
      %2708 = vmatpush1.bf16.msra.mxu0 0
      %2709 = vmatprep.subr.bf16.mxu0 0
      %2710 = vmatpush1.bf16.msra.mxu0 0
      %2711 = vmatprep.subr.bf16.mxu0 0
      %2712 = vmatpush1.bf16.msra.mxu0 0
      %2713 = vmatprep.subr.bf16.mxu0 0
      %2714 = vmatpush1.bf16.msra.mxu0 0
      %2715 = vmatprep.subr.bf16.mxu0 0
      %2716 = vmatpush1.bf16.msra.mxu0 0
      %2717 = vmatprep.mubr.bf16.mxu0 0
      %2718 = vmatmul.mubr.bf16.gmra.mrb[0].mxu0 %v2680
      %v2719 = vpop.f32.mrb[0].mxu0
      %v2720 = vadd.f32 0.0, %v2719
      %v2721 = vpop.f32.mrb[0].mxu0
      %v2722 = vpop.f32.mrb[0].mxu0
      %v2723 = vpop.f32.mrb[0].mxu0
      %2724 = vdwg.mxu0
      %2725 = vrot.lane.b32.xlu0 %v1896, 48
      %v2726 = vpop.permute.xlu0 %2725
      %v2728 = vsel %vm678, %v2580, 0
      %v2731 = vsel %vm732, %v2726, 0
      %2733 = vmatprep.subr.bf16.mxu0 0
      %2734 = vmatpush1.bf16.msra.mxu0 %v2731
      %2735 = vmatprep.subr.bf16.mxu0 0
      %2736 = vmatpush1.bf16.msra.mxu0 0
      %2737 = vmatprep.subr.bf16.mxu0 0
      %2738 = vmatpush1.bf16.msra.mxu0 0
      %2739 = vmatprep.subr.bf16.mxu0 0
      %2740 = vmatpush1.bf16.msra.mxu0 0
      %2741 = vmatprep.subr.bf16.mxu0 0
      %2742 = vmatpush1.bf16.msra.mxu0 0
      %2743 = vmatprep.subr.bf16.mxu0 0
      %2744 = vmatpush1.bf16.msra.mxu0 0
      %2745 = vmatprep.subr.bf16.mxu0 0
      %2746 = vmatpush1.bf16.msra.mxu0 0
      %2747 = vmatprep.subr.bf16.mxu0 0
      %2748 = vmatpush1.bf16.msra.mxu0 0
      %2749 = vmatprep.subr.bf16.mxu0 0
      %2750 = vmatpush1.bf16.msra.mxu0 0
      %2751 = vmatprep.subr.bf16.mxu0 0
      %2752 = vmatpush1.bf16.msra.mxu0 0
      %2753 = vmatprep.subr.bf16.mxu0 0
      %2754 = vmatpush1.bf16.msra.mxu0 0
      %2755 = vmatprep.subr.bf16.mxu0 0
      %2756 = vmatpush1.bf16.msra.mxu0 0
      %2757 = vmatprep.subr.bf16.mxu0 0
      %2758 = vmatpush1.bf16.msra.mxu0 0
      %2759 = vmatprep.subr.bf16.mxu0 0
      %2760 = vmatpush1.bf16.msra.mxu0 0
      %2761 = vmatprep.subr.bf16.mxu0 0
      %2762 = vmatpush1.bf16.msra.mxu0 0
      %2763 = vmatprep.subr.bf16.mxu0 0
      %2764 = vmatpush1.bf16.msra.mxu0 0
      %2765 = vmatprep.mubr.bf16.mxu0 0
      %2766 = vmatmul.mubr.bf16.gmra.mrb[0].mxu0 %v2728
      %v2767 = vpop.f32.mrb[0].mxu0
      %v2768 = vadd.f32 0.0, %v2767
      %v2769 = vpop.f32.mrb[0].mxu0
      %v2770 = vpop.f32.mrb[0].mxu0
      %v2771 = vpop.f32.mrb[0].mxu0
      %2772 = vdwg.mxu0
      %2777 = vrot.lane.b32.xlu0 %v2624, 16
      %v2778 = vpop.permute.xlu0 %2777
      %2779 = vrot.lane.b32.xlu0 %v2672, 16
      %v2780 = vpop.permute.xlu0 %2779
      %2781 = vrot.lane.b32.xlu0 %v2720, 16
      %v2782 = vpop.permute.xlu0 %2781
      %2783 = vrot.lane.b32.xlu0 %v2768, 16
      %v2784 = vpop.permute.xlu0 %2783
      %v2789 = vsel %vm484, %v2184, %v2778
      %v2790 = vsel %vm484, %v2232, %v2780
      %v2791 = vsel %vm484, %v2280, %v2782
      %v2792 = vsel %vm484, %v2328, %v2784
      %v2793 = vpack.c.bf16 %v2790, %v2789
      %v2794 = vpack.c.bf16 %v2792, %v2791
      %v2795 = vlaneseq
      %v2796 = vshrl.u32 %v2795, 7
      %v2797 = vsub.s32 0, %v2796
      %v2798 = vrot.slane %v1813, %v2797
      %v2803 = vunpack.c.l.b16 %v1796
      %v2804 = vunpack.c.l.b16 %v1797
      %v2805 = vunpack.c.l.b16 %v1798
      %v2806 = vunpack.c.l.b16 %v1799
      %v2807 = vpack.c.b16 %v2804, %v2803
      %v2808 = vpack.c.b16 %v2806, %v2805
      %v2812 = vsel %vm258, %v2793, 0
      %v2815 = vsel %vm258, %v2794, 0
      %2817 = vmatprep.subr.bf16.mxu0 0
      %2818 = vmatpush1.bf16.msra.mxu0 %v2807
      %2819 = vmatprep.subr.bf16.mxu0 0
      %2820 = vmatpush1.bf16.msra.mxu0 %v2808
      %2821 = vmatprep.subr.bf16.mxu0 0
      %2822 = vmatpush1.bf16.msra.mxu0 0
      %2823 = vmatprep.subr.bf16.mxu0 0
      %2824 = vmatpush1.bf16.msra.mxu0 0
      %2825 = vmatprep.subr.bf16.mxu0 0
      %2826 = vmatpush1.bf16.msra.mxu0 0
      %2827 = vmatprep.subr.bf16.mxu0 0
      %2828 = vmatpush1.bf16.msra.mxu0 0
      %2829 = vmatprep.subr.bf16.mxu0 0
      %2830 = vmatpush1.bf16.msra.mxu0 0
      %2831 = vmatprep.subr.bf16.mxu0 0
      %2832 = vmatpush1.bf16.msra.mxu0 0
      %2833 = vmatprep.subr.bf16.mxu0 0
      %2834 = vmatpush1.bf16.msra.mxu0 0
      %2835 = vmatprep.subr.bf16.mxu0 0
      %2836 = vmatpush1.bf16.msra.mxu0 0
      %2837 = vmatprep.subr.bf16.mxu0 0
      %2838 = vmatpush1.bf16.msra.mxu0 0
      %2839 = vmatprep.subr.bf16.mxu0 0
      %2840 = vmatpush1.bf16.msra.mxu0 0
      %2841 = vmatprep.subr.bf16.mxu0 0
      %2842 = vmatpush1.bf16.msra.mxu0 0
      %2843 = vmatprep.subr.bf16.mxu0 0
      %2844 = vmatpush1.bf16.msra.mxu0 0
      %2845 = vmatprep.subr.bf16.mxu0 0
      %2846 = vmatpush1.bf16.msra.mxu0 0
      %2847 = vmatprep.subr.bf16.mxu0 0
      %2848 = vmatpush1.bf16.msra.mxu0 0
      %2849 = vmatprep.mubr.bf16.mxu0 0
      %2850 = vmatmul.mubr.bf16.gmra.mrb[0].mxu0 %v2812
      %v2851 = vpop.f32.mrb[0].mxu0
      %v2852 = vadd.f32 %v2798, %v2851
      %v2853 = vpop.f32.mrb[0].mxu0
      %v2854 = vpop.f32.mrb[0].mxu0
      %v2855 = vadd.f32 %v2798, %v2854
      %v2856 = vpop.f32.mrb[0].mxu0
      %2857 = vmatprep.mubr.bf16.mxu0 0
      %2858 = vmatmul.mubr.bf16.gmra.mrb[0].mxu0 %v2815
      %v2859 = vpop.f32.mrb[0].mxu0
      %v2860 = vadd.f32 %v2798, %v2859
      %v2861 = vpop.f32.mrb[0].mxu0
      %v2862 = vpop.f32.mrb[0].mxu0
      %v2863 = vadd.f32 %v2798, %v2862
      %v2864 = vpop.f32.mrb[0].mxu0
      %2865 = vdwg.mxu0
      %v2866 = vadd.f32 %v1788, %v2852
      %v2867 = vadd.f32 %v1789, %v2855
      %v2868 = vadd.f32 %v1790, %v2860
      %v2869 = vadd.f32 %v1791, %v2863
      %v2870 = vsel %vm258, %v2866, 0.0
      %2871 = vadd.xlane.f32.xlu0 %v2870
      %v2872 = vpop.xlane.xlu0 %2871
      %v2873 = vsel %vm258, %v2867, 0.0
      %2874 = vadd.xlane.f32.xlu0 %v2873
      %v2875 = vpop.xlane.xlu0 %2874
      %v2876 = vsel %vm258, %v2868, 0.0
      %2877 = vadd.xlane.f32.xlu0 %v2876
      %v2878 = vpop.xlane.xlu0 %2877
      %v2879 = vsel %vm258, %v2869, 0.0
      %2880 = vadd.xlane.f32.xlu0 %v2879
      %v2881 = vpop.xlane.xlu0 %2880
      %v2882 = vmul.f32 %v2872, %v271
      %v2883 = vmul.f32 %v2875, %v271
      %v2884 = vmul.f32 %v2878, %v271
      %v2885 = vmul.f32 %v2881, %v271
      %v2886 = vsub.f32 %v2866, %v2882
      %v2887 = vsub.f32 %v2867, %v2883
      %v2888 = vsub.f32 %v2868, %v2884
      %v2889 = vsub.f32 %v2869, %v2885
      %v2890 = vmul.f32 %v2886, %v2886
      %v2891 = vmul.f32 %v2887, %v2887
      %v2892 = vmul.f32 %v2888, %v2888
      %v2893 = vmul.f32 %v2889, %v2889
      %v2894 = vsel %vm258, %v2890, 0.0
      %2895 = vadd.xlane.f32.xlu0 %v2894
      %v2896 = vpop.xlane.xlu0 %2895
      %v2897 = vsel %vm258, %v2891, 0.0
      %2898 = vadd.xlane.f32.xlu0 %v2897
      %v2899 = vpop.xlane.xlu0 %2898
      %v2900 = vsel %vm258, %v2892, 0.0
      %2901 = vadd.xlane.f32.xlu0 %v2900
      %v2902 = vpop.xlane.xlu0 %2901
      %v2903 = vsel %vm258, %v2893, 0.0
      %2904 = vadd.xlane.f32.xlu0 %v2903
      %v2905 = vpop.xlane.xlu0 %2904
      %v2906 = vmul.f32 %v2896, %v271
      %v2907 = vmul.f32 %v2899, %v271
      %v2908 = vmul.f32 %v2902, %v271
      %v2909 = vmul.f32 %v2905, %v271
      %v2910 = vadd.f32 %v2906, 1e-12
      %v2911 = vadd.f32 %v2907, 1e-12
      %v2912 = vadd.f32 %v2908, 1e-12
      %v2913 = vadd.f32 %v2909, 1e-12
      %v2914 = vrsqrt.pop %v2910
      %v2915 = vrsqrt.pop %v2911
      %v2916 = vrsqrt.pop %v2912
      %v2917 = vrsqrt.pop %v2913
      %v2918 = vmul.f32 %v2886, %v2914
      %v2919 = vmul.f32 %v2887, %v2915
      %v2920 = vmul.f32 %v2888, %v2916
      %v2921 = vmul.f32 %v2889, %v2917
      %v2922 = vlaneseq
      %v2923 = vshrl.u32 %v2922, 7
      %v2924 = vsub.s32 0, %v2923
      %v2925 = vrot.slane %v1814, %v2924
      %v2926 = vmul.f32 %v2918, %v2925
      %v2927 = vmul.f32 %v2919, %v2925
      %v2928 = vmul.f32 %v2920, %v2925
      %v2929 = vmul.f32 %v2921, %v2925
      %v2930 = vlaneseq
      %v2931 = vshrl.u32 %v2930, 7
      %v2932 = vsub.s32 0, %v2931
      %v2933 = vrot.slane %v1815, %v2932
      %v2934 = vadd.f32 %v2926, %v2933
      %v2935 = vadd.f32 %v2927, %v2933
      %v2936 = vadd.f32 %v2928, %v2933
      %v2937 = vadd.f32 %v2929, %v2933
      %v2938 = vpack.c.bf16 %v2935, %v2934
      %v2939 = vpack.c.bf16 %v2937, %v2936
      %v2940 = vlaneseq
      %v2941 = vshrl.u32 %v2940, 7
      %v2942 = vsub.s32 0, %v2941
      %v2943 = vrot.slane %v1816, %v2942
      %v2948 = vunpack.c.l.b16 %v1800
      %v2949 = vunpack.c.l.b16 %v1801
      %v2950 = vunpack.c.l.b16 %v1802
      %v2951 = vunpack.c.l.b16 %v1803
      %v2952 = vpack.c.b16 %v2949, %v2948
      %v2953 = vpack.c.b16 %v2951, %v2950
      %v2957 = vsel %vm258, %v2938, 0
      %v2960 = vsel %vm258, %v2939, 0
      %2962 = vmatprep.subr.bf16.mxu0 0
      %2963 = vmatpush1.bf16.msra.mxu0 %v2952
      %2964 = vmatprep.subr.bf16.mxu0 0
      %2965 = vmatpush1.bf16.msra.mxu0 %v2953
      %2966 = vmatprep.subr.bf16.mxu0 0
      %2967 = vmatpush1.bf16.msra.mxu0 0
      %2968 = vmatprep.subr.bf16.mxu0 0
      %2969 = vmatpush1.bf16.msra.mxu0 0
      %2970 = vmatprep.subr.bf16.mxu0 0
      %2971 = vmatpush1.bf16.msra.mxu0 0
      %2972 = vmatprep.subr.bf16.mxu0 0
      %2973 = vmatpush1.bf16.msra.mxu0 0
      %2974 = vmatprep.subr.bf16.mxu0 0
      %2975 = vmatpush1.bf16.msra.mxu0 0
      %2976 = vmatprep.subr.bf16.mxu0 0
      %2977 = vmatpush1.bf16.msra.mxu0 0
      %2978 = vmatprep.subr.bf16.mxu0 0
      %2979 = vmatpush1.bf16.msra.mxu0 0
      %2980 = vmatprep.subr.bf16.mxu0 0
      %2981 = vmatpush1.bf16.msra.mxu0 0
      %2982 = vmatprep.subr.bf16.mxu0 0
      %2983 = vmatpush1.bf16.msra.mxu0 0
      %2984 = vmatprep.subr.bf16.mxu0 0
      %2985 = vmatpush1.bf16.msra.mxu0 0
      %2986 = vmatprep.subr.bf16.mxu0 0
      %2987 = vmatpush1.bf16.msra.mxu0 0
      %2988 = vmatprep.subr.bf16.mxu0 0
      %2989 = vmatpush1.bf16.msra.mxu0 0
      %2990 = vmatprep.subr.bf16.mxu0 0
      %2991 = vmatpush1.bf16.msra.mxu0 0
      %2992 = vmatprep.subr.bf16.mxu0 0
      %2993 = vmatpush1.bf16.msra.mxu0 0
      %2994 = vmatprep.mubr.bf16.mxu0 0
      %2995 = vmatmul.mubr.bf16.gmra.mrb[0].mxu0 %v2957
      %v2996 = vpop.f32.mrb[0].mxu0
      %v2997 = vadd.f32 %v2943, %v2996
      %v2998 = vpop.f32.mrb[0].mxu0
      %v2999 = vpop.f32.mrb[0].mxu0
      %v3000 = vadd.f32 %v2943, %v2999
      %v3001 = vpop.f32.mrb[0].mxu0
      %3002 = vmatprep.mubr.bf16.mxu0 0
      %3003 = vmatmul.mubr.bf16.gmra.mrb[0].mxu0 %v2960
      %v3004 = vpop.f32.mrb[0].mxu0
      %v3005 = vadd.f32 %v2943, %v3004
      %v3006 = vpop.f32.mrb[0].mxu0
      %v3007 = vpop.f32.mrb[0].mxu0
      %v3008 = vadd.f32 %v2943, %v3007
      %v3009 = vpop.f32.mrb[0].mxu0
      %3010 = vdwg.mxu0
      %v3011 = vmul.f32 %v2997, %v2997
      %v3012 = vmul.f32 %v3000, %v3000
      %v3013 = vmul.f32 %v3005, %v3005
      %v3014 = vmul.f32 %v3008, %v3008
      %v3015 = vmul.f32 %v2997, %v3011
      %v3016 = vmul.f32 %v3000, %v3012
      %v3017 = vmul.f32 %v3005, %v3013
      %v3018 = vmul.f32 %v3008, %v3014
      %v3019 = vmul.f32 %v3015, 0.044715
      %v3020 = vmul.f32 %v3016, 0.044715
      %v3021 = vmul.f32 %v3017, 0.044715
      %v3022 = vmul.f32 %v3018, 0.044715
      %v3023 = vadd.f32 %v2997, %v3019
      %v3024 = vadd.f32 %v3000, %v3020
      %v3025 = vadd.f32 %v3005, %v3021
      %v3026 = vadd.f32 %v3008, %v3022
      %v3027 = vmul.f32 %v3023, 0.7978846
      %v3028 = vmul.f32 %v3024, 0.7978846
      %v3029 = vmul.f32 %v3025, 0.7978846
      %v3030 = vmul.f32 %v3026, 0.7978846
      %v3031 = vtanh.pop %v3027
      %v3032 = vtanh.pop %v3028
      %v3033 = vtanh.pop %v3029
      %v3034 = vtanh.pop %v3030
      %v3035 = vadd.f32 %v3031, 1.0
      %v3036 = vadd.f32 %v3032, 1.0
      %v3037 = vadd.f32 %v3033, 1.0
      %v3038 = vadd.f32 %v3034, 1.0
      %v3039 = vmul.f32 %v3035, 0.5
      %v3040 = vmul.f32 %v3036, 0.5
      %v3041 = vmul.f32 %v3037, 0.5
      %v3042 = vmul.f32 %v3038, 0.5
      %v3043 = vmul.f32 %v2997, %v3039
      %v3044 = vmul.f32 %v3000, %v3040
      %v3045 = vmul.f32 %v3005, %v3041
      %v3046 = vmul.f32 %v3008, %v3042
      %v3047 = vpack.c.bf16 %v3044, %v3043
      %v3048 = vpack.c.bf16 %v3046, %v3045
      %v3049 = vlaneseq
      %v3050 = vshrl.u32 %v3049, 7
      %v3051 = vsub.s32 0, %v3050
      %v3052 = vrot.slane %v1817, %v3051
      %v3061 = vunpack.c.l.b16 %v1804
      %v3062 = vunpack.c.l.b16 %v1805
      %v3063 = vunpack.c.l.b16 %v1806
      %v3064 = vunpack.c.l.b16 %v1807
      %v3065 = vunpack.c.l.b16 %v1808
      %v3066 = vunpack.c.l.b16 %v1809
      %v3067 = vunpack.c.l.b16 %v1810
      %v3068 = vunpack.c.l.b16 %v1811
      %v3069 = vpack.c.b16 %v3062, %v3061
      %v3070 = vpack.c.b16 %v3064, %v3063
      %v3071 = vpack.c.b16 %v3066, %v3065
      %v3072 = vpack.c.b16 %v3068, %v3067
      %v3078 = vsel %vm1664, %v3047, 0
      %v3081 = vsel %vm1664, %v3048, 0
      %3083 = vmatprep.subr.bf16.mxu0 0
      %3084 = vmatpush1.bf16.msra.mxu0 %v3069
      %3085 = vmatprep.subr.bf16.mxu0 0
      %3086 = vmatpush1.bf16.msra.mxu0 %v3070
      %3087 = vmatprep.subr.bf16.mxu0 0
      %3088 = vmatpush1.bf16.msra.mxu0 %v3071
      %3089 = vmatprep.subr.bf16.mxu0 0
      %3090 = vmatpush1.bf16.msra.mxu0 %v3072
      %3091 = vmatprep.subr.bf16.mxu0 0
      %3092 = vmatpush1.bf16.msra.mxu0 0
      %3093 = vmatprep.subr.bf16.mxu0 0
      %3094 = vmatpush1.bf16.msra.mxu0 0
      %3095 = vmatprep.subr.bf16.mxu0 0
      %3096 = vmatpush1.bf16.msra.mxu0 0
      %3097 = vmatprep.subr.bf16.mxu0 0
      %3098 = vmatpush1.bf16.msra.mxu0 0
      %3099 = vmatprep.subr.bf16.mxu0 0
      %3100 = vmatpush1.bf16.msra.mxu0 0
      %3101 = vmatprep.subr.bf16.mxu0 0
      %3102 = vmatpush1.bf16.msra.mxu0 0
      %3103 = vmatprep.subr.bf16.mxu0 0
      %3104 = vmatpush1.bf16.msra.mxu0 0
      %3105 = vmatprep.subr.bf16.mxu0 0
      %3106 = vmatpush1.bf16.msra.mxu0 0
      %3107 = vmatprep.subr.bf16.mxu0 0
      %3108 = vmatpush1.bf16.msra.mxu0 0
      %3109 = vmatprep.subr.bf16.mxu0 0
      %3110 = vmatpush1.bf16.msra.mxu0 0
      %3111 = vmatprep.subr.bf16.mxu0 0
      %3112 = vmatpush1.bf16.msra.mxu0 0
      %3113 = vmatprep.subr.bf16.mxu0 0
      %3114 = vmatpush1.bf16.msra.mxu0 0
      %3115 = vmatprep.mubr.bf16.mxu0 0
      %3116 = vmatmul.mubr.bf16.gmra.mrb[0].mxu0 %v3078
      %v3117 = vpop.f32.mrb[0].mxu0
      %v3118 = vadd.f32 %v3052, %v3117
      %v3119 = vpop.f32.mrb[0].mxu0
      %v3120 = vpop.f32.mrb[0].mxu0
      %v3121 = vadd.f32 %v3052, %v3120
      %v3122 = vpop.f32.mrb[0].mxu0
      %3123 = vmatprep.mubr.bf16.mxu0 0
      %3124 = vmatmul.mubr.bf16.gmra.mrb[0].mxu0 %v3081
      %v3125 = vpop.f32.mrb[0].mxu0
      %v3126 = vadd.f32 %v3052, %v3125
      %v3127 = vpop.f32.mrb[0].mxu0
      %v3128 = vpop.f32.mrb[0].mxu0
      %v3129 = vadd.f32 %v3052, %v3128
      %v3130 = vpop.f32.mrb[0].mxu0
      %3131 = vdwg.mxu0
      %v3132 = vadd.f32 %v2934, %v3118
      %v3133 = vadd.f32 %v2935, %v3121
      %v3134 = vadd.f32 %v2936, %v3126
      %v3135 = vadd.f32 %v2937, %v3129
      %v3136 = vsel %vm258, %v3132, 0.0
      %3137 = vadd.xlane.f32.xlu0 %v3136
      %v3138 = vpop.xlane.xlu0 %3137
      %v3139 = vsel %vm258, %v3133, 0.0
      %3140 = vadd.xlane.f32.xlu0 %v3139
      %v3141 = vpop.xlane.xlu0 %3140
      %v3142 = vsel %vm258, %v3134, 0.0
      %3143 = vadd.xlane.f32.xlu0 %v3142
      %v3144 = vpop.xlane.xlu0 %3143
      %v3145 = vsel %vm258, %v3135, 0.0
      %3146 = vadd.xlane.f32.xlu0 %v3145
      %v3147 = vpop.xlane.xlu0 %3146
      %v3148 = vmul.f32 %v3138, %v271
      %v3149 = vmul.f32 %v3141, %v271
      %v3150 = vmul.f32 %v3144, %v271
      %v3151 = vmul.f32 %v3147, %v271
      %v3152 = vsub.f32 %v3132, %v3148
      %v3153 = vsub.f32 %v3133, %v3149
      %v3154 = vsub.f32 %v3134, %v3150
      %v3155 = vsub.f32 %v3135, %v3151
      %v3156 = vmul.f32 %v3152, %v3152
      %v3157 = vmul.f32 %v3153, %v3153
      %v3158 = vmul.f32 %v3154, %v3154
      %v3159 = vmul.f32 %v3155, %v3155
      %v3160 = vsel %vm258, %v3156, 0.0
      %3161 = vadd.xlane.f32.xlu0 %v3160
      %v3162 = vpop.xlane.xlu0 %3161
      %v3163 = vsel %vm258, %v3157, 0.0
      %3164 = vadd.xlane.f32.xlu0 %v3163
      %v3165 = vpop.xlane.xlu0 %3164
      %v3166 = vsel %vm258, %v3158, 0.0
      %3167 = vadd.xlane.f32.xlu0 %v3166
      %v3168 = vpop.xlane.xlu0 %3167
      %v3169 = vsel %vm258, %v3159, 0.0
      %3170 = vadd.xlane.f32.xlu0 %v3169
      %v3171 = vpop.xlane.xlu0 %3170
      %v3172 = vmul.f32 %v3162, %v271
      %v3173 = vmul.f32 %v3165, %v271
      %v3174 = vmul.f32 %v3168, %v271
      %v3175 = vmul.f32 %v3171, %v271
      %v3176 = vadd.f32 %v3172, 1e-12
      %v3177 = vadd.f32 %v3173, 1e-12
      %v3178 = vadd.f32 %v3174, 1e-12
      %v3179 = vadd.f32 %v3175, 1e-12
      %v3180 = vrsqrt.pop %v3176
      %v3181 = vrsqrt.pop %v3177
      %v3182 = vrsqrt.pop %v3178
      %v3183 = vrsqrt.pop %v3179
      %v3184 = vmul.f32 %v3152, %v3180
      %v3185 = vmul.f32 %v3153, %v3181
      %v3186 = vmul.f32 %v3154, %v3182
      %v3187 = vmul.f32 %v3155, %v3183
      %v3188 = vlaneseq
      %v3189 = vshrl.u32 %v3188, 7
      %v3190 = vsub.s32 0, %v3189
      %v3191 = vrot.slane %v1818, %v3190
      %v3192 = vmul.f32 %v3184, %v3191
      %v3193 = vmul.f32 %v3185, %v3191
      %v3194 = vmul.f32 %v3186, %v3191
      %v3195 = vmul.f32 %v3187, %v3191
      %v3196 = vlaneseq
      %v3197 = vshrl.u32 %v3196, 7
      %v3198 = vsub.s32 0, %v3197
      %v3199 = vrot.slane %v1819, %v3198
      %v3200 = vadd.f32 %v3192, %v3199
      %v3201 = vadd.f32 %v3193, %v3199
      %v3202 = vadd.f32 %v3194, %v3199
      %v3203 = vadd.f32 %v3195, %v3199
      %3205 = vrot.lane.b32.xlu0 %v3201, 32
      %v3206 = vpop.permute.xlu0 %3205
      %3209 = vrot.lane.b32.xlu0 %v3202, 64
      %v3210 = vpop.permute.xlu0 %3209
      %3213 = vrot.lane.b32.xlu0 %v3203, 96
      %v3214 = vpop.permute.xlu0 %3213
      %v3216 = vsel %vm258, %v3200, %v3206
      %v3217 = vsel %vm1664, %v3216, %v3210
      %vm3218 = vcmask 785408
      %v3219 = vsel %vm3218, %v3217, %v3214
      %3220 = vst [vmem:[%s250] sm:$0x1] %v3219
      %p3221 = scmp.lt.s32.totalorder %s15, 1
      %s3222 = scalar_select %p3221, %s15, 1
      %s3223 = scalar_lea.vmem %s4, %s3222
      // Predicated region
      $region37: #{biencoder_forward.1} parent=35 // pred_check
        %p3224 = pneg %p137
      $region38: #{biencoder_forward.1} parent=35 // pred_check_branch
        %3226 = sbr.rel (%p3224) target = $region40
      $region39: #{biencoder_forward.1} parent=35 // pred_region
        _
      $region40: #{biencoder_forward.1} parent=35 // pred_fallthru
        _
    $region36: #{biencoder_forward.1} parent=5 // pred_fallthru
      _
    %p3227 = scmp.le.s32.totalorder 2, %s10
    // Predicated region
    $region41: #{biencoder_forward.1} parent=5 // pred_check
      %p3228 = pneg %p3227
    $region42: #{biencoder_forward.1} parent=5 // pred_check_branch
      %3230 = sbr.rel (%p3228) target = $region44
    $region43: #{biencoder_forward.1} parent=5 // pred_region
      %s3231 = ssub.s32 %s10, 2
      // Predicated region
      $region45: #{biencoder_forward.1} parent=43 // pred_check
        %p3232 = pneg %p143
      $region46: #{biencoder_forward.1} parent=43 // pred_check_branch
        %3234 = sbr.rel (%p3232) target = $region48
      $region47: #{biencoder_forward.1} parent=43 // pred_region
        %p3235 = scmp.lt.s32.totalorder %s16, 1
        %s3236 = scalar_select %p3235, %s16, 1
        %s3237 = scalar_lea.vmem %s4, %s3236
      $region48: #{biencoder_forward.1} parent=43 // pred_fallthru
        _
    $region44: #{biencoder_forward.1} parent=5 // pred_fallthru
      _
  $region6: #{biencoder_forward.1} parent=0 // loop_footer
    %s14 = sadd.s32 1, %s10
  $region7: #{biencoder_forward.1} parent=0 // loop_footer_branch
    %9 = sbr.rel target = $region3
  $region8: #{biencoder_forward.1} parent=0 // loop_exit
    _

</llo_original>
